<compile_context>
chip_gen: v6e
topology: v6e:2x2x1
jax: 0.10.0
libtpu: 0.0.40
codegen_flags: <defaults>
</compile_context>

<pallas_src>
import functools
import math

import jax
import jax.numpy as jnp
from jax.experimental import pallas as pl
from jax.experimental.pallas import tpu as pltpu

# ----------------------- config (scaled-down synthetic BERT) -----------------------
VOCAB = 64
TYPE_VOCAB = 2
MAX_POS = 32
HIDDEN = 128
HEADS = 4
HEAD_DIM = HIDDEN // HEADS
INTERMEDIATE = 256
LAYERS = 2
NUM_CLASSES = 4
NUM_CLASSES_PAD = 128          # lane-dense classifier output; real logits = [:, :NUM_CLASSES]
LN_EPS = 1e-12

# ---- packed small-parameter table layout (one VMEM ref instead of 14 tiny inputs) ----
ROW_EMB_LN_G = 0
ROW_EMB_LN_B = 1
# per-layer block of 8 rows, base = 2 + 8*l
OFF_QKV_B, OFF_O_B, OFF_ATTN_LN_G, OFF_ATTN_LN_B = 0, 1, 2, 3
OFF_FF1_B, OFF_FF2_B, OFF_FF_LN_G, OFF_FF_LN_B = 4, 5, 6, 7
ROW_POOL_B = 2 + 8 * LAYERS
ROW_CLS_B = ROW_POOL_B + 1
SP_ROWS = ROW_CLS_B + 1        # 20 rows x 384 lanes, f32


# ----------------------------------- kernel ----------------------------------------
def _layer_norm(x, g, b):
    mu = jnp.mean(x, axis=-1, keepdims=True)
    var = jnp.mean(jnp.square(x - mu), axis=-1, keepdims=True)
    return (x - mu) * jax.lax.rsqrt(var + LN_EPS) * g + b


def _mm(x, w):
    # bf16 MXU operands, f32 accumulation; elementwise math elsewhere stays f32.
    return jnp.dot(x.astype(jnp.bfloat16), w, preferred_element_type=jnp.float32)


def _bert_fused_kernel(
    ids_ref, qbid_ref, kinfo_ref,
    word_emb_ref, pos_emb_ref, type_emb_ref,
    sp_ref,
    qkv_w_ref, o_w_ref, ff1_w_ref, ff2_w_ref, pool_w_ref, cls_w_ref,
    out_ref,
    *, batch, seq, out_rows,
):
    ntok = batch * seq
    scale = 1.0 / math.sqrt(HEAD_DIM)

    sp = sp_ref[...]                                   # (SP_ROWS, 384) packed biases/LN params

    def row(r, width=HIDDEN):                          # (1, width) static slice of the table
        return sp[r:r + 1, :width]

    # ---- embeddings fused in-kernel: one-hot gather on the MXU + sum + LayerNorm ----
    one_hot = jnp.where(
        ids_ref[...] == jax.lax.broadcasted_iota(jnp.int32, (ntok, VOCAB), 1),
        1.0, 0.0)                                      # (ntok, VOCAB) f32, exact select
    word = jnp.dot(one_hot, word_emb_ref[...], preferred_element_type=jnp.float32)
    pos = jnp.broadcast_to(pos_emb_ref[:seq, :][None], (batch, seq, HIDDEN)
                           ).reshape(ntok, HIDDEN)
    x = word + pos + type_emb_ref[0:1, :]              # token_type_ids == 0
    x = _layer_norm(x, row(ROW_EMB_LN_G), row(ROW_EMB_LN_B))

    # ---- additive attention bias, hoisted once: (ntok, ntok) ----
    # key m is visible to query n  <=>  same sequence AND not a padding position
    # (kinfo = seq id of the key, or -1 if padding; qbid = seq id of the query)
    valid = qbid_ref[...] == kinfo_ref[...]            # (ntok,1) == (1,ntok) -> (ntok,ntok)
    bias_nm = jnp.where(valid, 0.0, -1e9)

    def to_heads(feat_t):
        # (HIDDEN, ntok) -> (HEADS, ntok, HEAD_DIM): leading-dim split + minor-two swap.
        return jnp.swapaxes(feat_t.reshape(HEADS, HEAD_DIM, ntok), 1, 2
                            ).astype(jnp.bfloat16)

    for l in range(LAYERS):                            # LAYERS == 2 -> unrolled
        base = 2 + 8 * l

        # Fused Q|K|V projection: (ntok, 128) @ (128, 384), bf16 MXU / f32 acc.
        qkv = _mm(x, qkv_w_ref[l]) + row(base + OFF_QKV_B, 3 * HIDDEN)
        qkv_t = qkv.T                                  # one 2-D transpose -> (384, ntok)
        qh = to_heads(qkv_t[:HIDDEN])                  # (HEADS, ntok, HEAD_DIM)
        kh = to_heads(qkv_t[HIDDEN:2 * HIDDEN])
        vh = to_heads(qkv_t[2 * HIDDEN:])

        # Batched attention over all heads: two einsums, bf16 operands.
        s = jnp.einsum("hnd,hmd->hnm", qh, kh,
                       preferred_element_type=jnp.float32) * scale
        s = s + bias_nm                                # broadcast over heads (hoisted bias)
        s = s - jnp.max(s, axis=-1, keepdims=True)
        p = jnp.exp(s)
        p = p * pl.reciprocal(jnp.sum(p, axis=-1, keepdims=True), approx=True)
        ctx = jnp.einsum("hnm,hmd->hnd", p.astype(jnp.bfloat16), vh,
                         preferred_element_type=jnp.float32)   # (HEADS, ntok, HEAD_DIM)
        # back to (ntok, HIDDEN) with columns ordered [h0 d0..31 | h1 ... ] to match o_w
        ctx2d = jnp.swapaxes(ctx, 1, 2).reshape(HIDDEN, ntok).T

        # Output projection + residual + LayerNorm.
        attn_out = _mm(ctx2d, o_w_ref[l]) + row(base + OFF_O_B)
        x = _layer_norm(x + attn_out, row(base + OFF_ATTN_LN_G), row(base + OFF_ATTN_LN_B))

        # Feed-forward + residual + LayerNorm.
        # TODO(synk): HF BERT uses exact erf-GELU; tanh-approximate GELU used here.
        h1 = jax.nn.gelu(_mm(x, ff1_w_ref[l]) + row(base + OFF_FF1_B, INTERMEDIATE),
                         approximate=True)
        h2 = _mm(h1, ff2_w_ref[l]) + row(base + OFF_FF2_B)
        x = _layer_norm(x + h2, row(base + OFF_FF_LN_G), row(base + OFF_FF_LN_B))

    # ---- pooler on [CLS] rows + classifier ----
    cls_rows = x.reshape(batch, seq, HIDDEN)[:, 0, :]          # (batch, HIDDEN)
    if out_rows > batch:                                        # pad to a full 8-sublane tile
        cls_rows = jnp.concatenate(
            [cls_rows, jnp.zeros((out_rows - batch, HIDDEN), jnp.float32)], axis=0)
    pooled = jnp.tanh(_mm(cls_rows, pool_w_ref[...]) + row(ROW_POOL_B))
    # dropout(p=0.5) is identity in eval/inference mode.
    # Classifier (padded to 128 output lanes -> unmasked store) + ReLU.
    out_ref[...] = jnp.maximum(
        _mm(pooled, cls_w_ref[...]) + row(ROW_CLS_B, NUM_CLASSES_PAD), 0.0)


# ------------------------------- parameter init ------------------------------------
def init_params(key):
    keys = iter(jax.random.split(key, 32))

    def nrm(shape):
        return 0.02 * jax.random.normal(next(keys), shape, jnp.float32)

    def stack(shape):
        return jnp.stack([nrm(shape) for _ in range(LAYERS)], axis=0).astype(jnp.bfloat16)

    # Packed small-parameter table: LN gammas = 1, everything else (all biases, LN betas) = 0.
    small = jnp.zeros((SP_ROWS, 3 * HIDDEN), jnp.float32)
    small = small.at[ROW_EMB_LN_G, :HIDDEN].set(1.0)
    for l in range(LAYERS):
        base = 2 + 8 * l
        small = small.at[base + OFF_ATTN_LN_G, :HIDDEN].set(1.0)
        small = small.at[base + OFF_FF_LN_G, :HIDDEN].set(1.0)

    cls_w = jnp.zeros((HIDDEN, NUM_CLASSES_PAD), jnp.float32)
    cls_w = cls_w.at[:, :NUM_CLASSES].set(nrm((HIDDEN, NUM_CLASSES)))

    return {
        "word_emb": nrm((VOCAB, HIDDEN)),
        "pos_emb": nrm((MAX_POS, HIDDEN)),
        "type_emb": nrm((TYPE_VOCAB, HIDDEN)),
        "small": small,
        "qkv_w": stack((HIDDEN, 3 * HIDDEN)),
        "o_w": stack((HIDDEN, HIDDEN)),
        "ff1_w": stack((HIDDEN, INTERMEDIATE)),
        "ff2_w": stack((INTERMEDIATE, HIDDEN)),
        "pool_w": nrm((HIDDEN, HIDDEN)).astype(jnp.bfloat16),
        "cls_w": cls_w.astype(jnp.bfloat16),
    }


# --------------------------------- forward pass ------------------------------------
def bert_classifier_forward(params, input_id, mask):
    B, S = input_id.shape
    ntok = B * S
    out_rows = max(8, -(-B // 8) * 8)       # full sublane tile for an unmasked final store

    # Tiny integer/float glue only; the gather, embeddings, encoder, pooler and
    # classifier all run inside ONE pallas_call.
    ids = input_id.reshape(ntok, 1).astype(jnp.int32)
    bid = jnp.repeat(jnp.arange(B, dtype=jnp.float32), S)          # per-token sequence id
    query_bid = bid.reshape(ntok, 1)
    key_info = jnp.where(mask.reshape(ntok) > 0, bid, -1.0).reshape(1, ntok)

    vmem = pl.BlockSpec(memory_space=pltpu.MemorySpace.VMEM)
    kernel = functools.partial(_bert_fused_kernel, batch=B, seq=S, out_rows=out_rows)

    args = (
        ids, query_bid, key_info,
        params["word_emb"], params["pos_emb"], params["type_emb"],
        params["small"],
        params["qkv_w"], params["o_w"], params["ff1_w"], params["ff2_w"],
        params["pool_w"], params["cls_w"],
    )

    # Grid-less: all weights (~0.6 MB) + activations are VMEM-resident for the whole
    # forward.  See header notes for the v7x / large-batch scaling path (row-tile grid
    # with dimension_semantics=("parallel",), per-layer weight streaming).
    logits_pad = pl.pallas_call(
        kernel,
        out_shape=jax.ShapeDtypeStruct((out_rows, NUM_CLASSES_PAD), jnp.float32),
        in_specs=[vmem] * len(args),
        out_specs=vmem,
    )(*args)

    return logits_pad[:B, :NUM_CLASSES]


# ------------------------------------- main -----------------------------------------
if __name__ == "__main__":
    key = jax.random.PRNGKey(0)
    pkey, ikey = jax.random.split(key)

    params = init_params(pkey)

    B, S = 2, 16
    input_id = jax.random.randint(ikey, (B, S), 0, VOCAB, dtype=jnp.int32)
    # second sequence has 4 padding positions masked out
    mask = jnp.concatenate(
        [jnp.ones((1, S), jnp.int32),
         jnp.concatenate([jnp.ones((1, S - 4), jnp.int32),
                          jnp.zeros((1, 4), jnp.int32)], axis=1)],
        axis=0)

    fwd = jax.jit(bert_classifier_forward)
    out = jax.block_until_ready(fwd(params, input_id, mask))

    assert out.shape == (B, NUM_CLASSES)
    assert bool(jnp.all(jnp.isfinite(out)))
    assert bool(jnp.all(out >= 0.0))  # ReLU output
    print("KERNEL_OK")
</pallas_src>

<mosaic_0001>
module attributes {stable_mosaic.version = 11 : i64} {
  func.func @_bert_fused_kernel(%arg0: memref<32x1xi32, #tpu.memory_space<vmem>>, %arg1: memref<32x1xf32, #tpu.memory_space<vmem>>, %arg2: memref<1x32xf32, #tpu.memory_space<vmem>>, %arg3: memref<64x128xf32, #tpu.memory_space<vmem>>, %arg4: memref<32x128xf32, #tpu.memory_space<vmem>>, %arg5: memref<2x128xf32, #tpu.memory_space<vmem>>, %arg6: memref<20x384xf32, #tpu.memory_space<vmem>>, %arg7: memref<2x128x384xbf16, #tpu.memory_space<vmem>>, %arg8: memref<2x128x128xbf16, #tpu.memory_space<vmem>>, %arg9: memref<2x128x256xbf16, #tpu.memory_space<vmem>>, %arg10: memref<2x256x128xbf16, #tpu.memory_space<vmem>>, %arg11: memref<128x128xbf16, #tpu.memory_space<vmem>>, %arg12: memref<128x128xbf16, #tpu.memory_space<vmem>>, %arg13: memref<8x128xf32, #tpu.memory_space<vmem>>) attributes {dimension_semantics = [], scalar_prefetch = 0 : i64, scratch_operands = 0 : i64, tpu.core_type = #tpu.core_type<tc>} {
    %c0 = arith.constant 0 : index
    %c0_0 = arith.constant 0 : index
    %0 = vector.load %arg6[%c0, %c0_0] : memref<20x384xf32, #tpu.memory_space<vmem>>, vector<20x384xf32>
    %c0_1 = arith.constant 0 : index
    %c0_2 = arith.constant 0 : index
    %1 = vector.load %arg0[%c0_1, %c0_2] : memref<32x1xi32, #tpu.memory_space<vmem>>, vector<32x1xi32>
    %2 = tpu.iota {dimensions = array<i32: 1>} : vector<32x64xi32>
    %3 = vector.broadcast %1 : vector<32x1xi32> to vector<32x64xi32>
    %4 = arith.cmpi eq, %3, %2 : vector<32x64xi32>
    %cst = arith.constant 1.000000e+00 : f32
    %cst_3 = arith.constant 0.000000e+00 : f32
    %5 = vector.broadcast %cst : f32 to vector<32x64xf32>
    %6 = vector.broadcast %cst_3 : f32 to vector<32x64xf32>
    %7 = arith.select %4, %5, %6 : vector<32x64xi1>, vector<32x64xf32>
    %c0_4 = arith.constant 0 : index
    %c0_5 = arith.constant 0 : index
    %8 = vector.load %arg3[%c0_4, %c0_5] : memref<64x128xf32, #tpu.memory_space<vmem>>, vector<64x128xf32>
    %cst_6 = arith.constant dense<0.000000e+00> : vector<32x128xf32>
    %9 = tpu.matmul %7, %8, %cst_6 {dimension_numbers = #tpu.dot_dimension_numbers<[1], [0], [0], [1], [0, 0, 1, 1], [], []>} : vector<32x64xf32>, vector<64x128xf32>, vector<32x128xf32> -> vector<32x128xf32>
    %c0_7 = arith.constant 0 : index
    %c0_8 = arith.constant 0 : index
    %10 = vector.load %arg4[%c0_7, %c0_8] : memref<32x128xf32, #tpu.memory_space<vmem>>, vector<16x128xf32>
    %11 = vector.shape_cast %10 : vector<16x128xf32> to vector<1x16x128xf32>
    %12 = vector.shape_cast %11 : vector<1x16x128xf32> to vector<1x16x128xf32>
    %13 = vector.broadcast %12 : vector<1x16x128xf32> to vector<2x16x128xf32>
    %14 = vector.shape_cast %13 : vector<2x16x128xf32> to vector<32x128xf32>
    %15 = arith.addf %9, %14 : vector<32x128xf32>
    %c0_9 = arith.constant 0 : index
    %c0_10 = arith.constant 0 : index
    %16 = vector.load %arg5[%c0_9, %c0_10] : memref<2x128xf32, #tpu.memory_space<vmem>>, vector<1x128xf32>
    %17 = vector.broadcast %16 : vector<1x128xf32> to vector<32x128xf32>
    %18 = arith.addf %15, %17 : vector<32x128xf32>
    %19 = vector.extract_strided_slice %0 {offsets = [0, 0], sizes = [1, 128], strides = [1, 1]} : vector<20x384xf32> to vector<1x128xf32>
    %20 = vector.extract_strided_slice %0 {offsets = [1, 0], sizes = [1, 128], strides = [1, 1]} : vector<20x384xf32> to vector<1x128xf32>
    %cst_11 = arith.constant dense<0.000000e+00> : vector<32xf32>
    %21 = vector.multi_reduction <add>, %18, %cst_11 [1] : vector<32x128xf32> to vector<32xf32>
    %22 = vector.shape_cast %21 : vector<32xf32> to vector<32x1xf32>
    %cst_12 = arith.constant 1.280000e+02 : f32
    %23 = vector.broadcast %cst_12 : f32 to vector<32x1xf32>
    %24 = arith.divf %22, %23 : vector<32x1xf32>
    %25 = vector.broadcast %24 : vector<32x1xf32> to vector<32x128xf32>
    %26 = arith.subf %18, %25 : vector<32x128xf32>
    %27 = arith.mulf %26, %26 : vector<32x128xf32>
    %cst_13 = arith.constant dense<0.000000e+00> : vector<32xf32>
    %28 = vector.multi_reduction <add>, %27, %cst_13 [1] : vector<32x128xf32> to vector<32xf32>
    %29 = vector.shape_cast %28 : vector<32xf32> to vector<32x1xf32>
    %cst_14 = arith.constant 1.280000e+02 : f32
    %30 = vector.broadcast %cst_14 : f32 to vector<32x1xf32>
    %31 = arith.divf %29, %30 : vector<32x1xf32>
    %32 = vector.broadcast %24 : vector<32x1xf32> to vector<32x128xf32>
    %33 = arith.subf %18, %32 : vector<32x128xf32>
    %cst_15 = arith.constant 9.99999996E-13 : f32
    %34 = vector.broadcast %cst_15 : f32 to vector<32x1xf32>
    %35 = arith.addf %31, %34 : vector<32x1xf32>
    %36 = math.rsqrt %35 : vector<32x1xf32>
    %37 = vector.broadcast %36 : vector<32x1xf32> to vector<32x128xf32>
    %38 = arith.mulf %33, %37 : vector<32x128xf32>
    %39 = vector.broadcast %19 : vector<1x128xf32> to vector<32x128xf32>
    %40 = arith.mulf %38, %39 : vector<32x128xf32>
    %41 = vector.broadcast %20 : vector<1x128xf32> to vector<32x128xf32>
    %42 = arith.addf %40, %41 : vector<32x128xf32>
    %c0_16 = arith.constant 0 : index
    %c0_17 = arith.constant 0 : index
    %43 = vector.load %arg1[%c0_16, %c0_17] : memref<32x1xf32, #tpu.memory_space<vmem>>, vector<32x1xf32>
    %c0_18 = arith.constant 0 : index
    %c0_19 = arith.constant 0 : index
    %44 = vector.load %arg2[%c0_18, %c0_19] : memref<1x32xf32, #tpu.memory_space<vmem>>, vector<1x32xf32>
    %45 = vector.broadcast %43 : vector<32x1xf32> to vector<32x32xf32>
    %46 = vector.broadcast %44 : vector<1x32xf32> to vector<32x32xf32>
    %47 = arith.cmpf oeq, %45, %46 : vector<32x32xf32>
    %cst_20 = arith.constant 0.000000e+00 : f32
    %cst_21 = arith.constant -1.000000e+09 : f32
    %48 = vector.broadcast %cst_20 : f32 to vector<32x32xf32>
    %49 = vector.broadcast %cst_21 : f32 to vector<32x32xf32>
    %50 = arith.select %47, %48, %49 : vector<32x32xi1>, vector<32x32xf32>
    %c0_22 = arith.constant 0 : index
    %c0_23 = arith.constant 0 : index
    %c0_24 = arith.constant 0 : index
    %51 = vector.load %arg7[%c0_22, %c0_23, %c0_24] : memref<2x128x384xbf16, #tpu.memory_space<vmem>>, vector<1x128x384xbf16>
    %52 = vector.shape_cast %51 : vector<1x128x384xbf16> to vector<128x384xbf16>
    %53 = arith.truncf %42 : vector<32x128xf32> to vector<32x128xbf16>
    %cst_25 = arith.constant dense<0.000000e+00> : vector<32x384xf32>
    %54 = tpu.matmul %53, %52, %cst_25 {dimension_numbers = #tpu.dot_dimension_numbers<[1], [0], [0], [1], [0, 0, 1, 1], [], []>} : vector<32x128xbf16>, vector<128x384xbf16>, vector<32x384xf32> -> vector<32x384xf32>
    %55 = vector.extract_strided_slice %0 {offsets = [2, 0], sizes = [1, 384], strides = [1, 1]} : vector<20x384xf32> to vector<1x384xf32>
    %56 = vector.broadcast %55 : vector<1x384xf32> to vector<32x384xf32>
    %57 = arith.addf %54, %56 : vector<32x384xf32>
    %58 = tpu.transpose %57, [1, 0] : vector<32x384xf32> -> vector<384x32xf32>
    %59 = vector.extract_strided_slice %58 {offsets = [0, 0], sizes = [128, 32], strides = [1, 1]} : vector<384x32xf32> to vector<128x32xf32>
    %60 = vector.shape_cast %59 : vector<128x32xf32> to vector<4x32x32xf32>
    %61 = tpu.transpose %60, [0, 2, 1] : vector<4x32x32xf32> -> vector<4x32x32xf32>
    %62 = arith.truncf %61 : vector<4x32x32xf32> to vector<4x32x32xbf16>
    %63 = vector.extract_strided_slice %58 {offsets = [128, 0], sizes = [128, 32], strides = [1, 1]} : vector<384x32xf32> to vector<128x32xf32>
    %64 = vector.shape_cast %63 : vector<128x32xf32> to vector<4x32x32xf32>
    %65 = tpu.transpose %64, [0, 2, 1] : vector<4x32x32xf32> -> vector<4x32x32xf32>
    %66 = arith.truncf %65 : vector<4x32x32xf32> to vector<4x32x32xbf16>
    %67 = vector.extract_strided_slice %58 {offsets = [256, 0], sizes = [128, 32], strides = [1, 1]} : vector<384x32xf32> to vector<128x32xf32>
    %68 = vector.shape_cast %67 : vector<128x32xf32> to vector<4x32x32xf32>
    %69 = tpu.transpose %68, [0, 2, 1] : vector<4x32x32xf32> -> vector<4x32x32xf32>
    %70 = arith.truncf %69 : vector<4x32x32xf32> to vector<4x32x32xbf16>
    "tpu.trace_start"() <{level = 10 : i32, message = "hnd,hmd->hnm"}> : () -> ()
    %cst_26 = arith.constant dense<0.000000e+00> : vector<4x32x32xf32>
    %71 = tpu.matmul %62, %66, %cst_26 {dimension_numbers = #tpu.dot_dimension_numbers<[2], [2], [1], [1], [0, 0, 0, 1, 1, 1], [0], [0]>} : vector<4x32x32xbf16>, vector<4x32x32xbf16>, vector<4x32x32xf32> -> vector<4x32x32xf32>
    "tpu.trace_stop"() : () -> ()
    %cst_27 = arith.constant 0.176776692 : f32
    %72 = vector.broadcast %cst_27 : f32 to vector<4x32x32xf32>
    %73 = arith.mulf %71, %72 : vector<4x32x32xf32>
    %74 = vector.shape_cast %50 : vector<32x32xf32> to vector<1x32x32xf32>
    %75 = vector.broadcast %74 : vector<1x32x32xf32> to vector<4x32x32xf32>
    %76 = arith.addf %73, %75 : vector<4x32x32xf32>
    %cst_28 = arith.constant dense<0xFF800000> : vector<4x32xf32>
    %77 = vector.multi_reduction <maximumf>, %76, %cst_28 [2] : vector<4x32x32xf32> to vector<4x32xf32>
    %78 = vector.shape_cast %77 : vector<4x32xf32> to vector<4x32x1xf32>
    %79 = vector.broadcast %78 : vector<4x32x1xf32> to vector<4x32x32xf32>
    %80 = arith.subf %76, %79 : vector<4x32x32xf32>
    %81 = math.exp %80 : vector<4x32x32xf32>
    %cst_29 = arith.constant dense<0.000000e+00> : vector<4x32xf32>
    %82 = vector.multi_reduction <add>, %81, %cst_29 [2] : vector<4x32x32xf32> to vector<4x32xf32>
    %83 = vector.shape_cast %82 : vector<4x32xf32> to vector<4x32x1xf32>
    %84 = tpu.reciprocal %83 {approx = true} : vector<4x32x1xf32> -> vector<4x32x1xf32>
    %85 = vector.broadcast %84 : vector<4x32x1xf32> to vector<4x32x32xf32>
    %86 = arith.mulf %81, %85 : vector<4x32x32xf32>
    %87 = arith.truncf %86 : vector<4x32x32xf32> to vector<4x32x32xbf16>
    "tpu.trace_start"() <{level = 10 : i32, message = "hnm,hmd->hnd"}> : () -> ()
    %cst_30 = arith.constant dense<0.000000e+00> : vector<4x32x32xf32>
    %88 = tpu.matmul %87, %70, %cst_30 {dimension_numbers = #tpu.dot_dimension_numbers<[2], [1], [1], [2], [0, 0, 0, 1, 1, 2], [0], [0]>} : vector<4x32x32xbf16>, vector<4x32x32xbf16>, vector<4x32x32xf32> -> vector<4x32x32xf32>
    "tpu.trace_stop"() : () -> ()
    %89 = tpu.transpose %88, [0, 2, 1] : vector<4x32x32xf32> -> vector<4x32x32xf32>
    %90 = vector.shape_cast %89 : vector<4x32x32xf32> to vector<128x32xf32>
    %91 = tpu.transpose %90, [1, 0] : vector<128x32xf32> -> vector<32x128xf32>
    %c0_31 = arith.constant 0 : index
    %c0_32 = arith.constant 0 : index
    %c0_33 = arith.constant 0 : index
    %92 = vector.load %arg8[%c0_31, %c0_32, %c0_33] : memref<2x128x128xbf16, #tpu.memory_space<vmem>>, vector<1x128x128xbf16>
    %93 = vector.shape_cast %92 : vector<1x128x128xbf16> to vector<128x128xbf16>
    %94 = arith.truncf %91 : vector<32x128xf32> to vector<32x128xbf16>
    %cst_34 = arith.constant dense<0.000000e+00> : vector<32x128xf32>
    %95 = tpu.matmul %94, %93, %cst_34 {dimension_numbers = #tpu.dot_dimension_numbers<[1], [0], [0], [1], [0, 0, 1, 1], [], []>} : vector<32x128xbf16>, vector<128x128xbf16>, vector<32x128xf32> -> vector<32x128xf32>
    %96 = vector.extract_strided_slice %0 {offsets = [3, 0], sizes = [1, 128], strides = [1, 1]} : vector<20x384xf32> to vector<1x128xf32>
    %97 = vector.broadcast %96 : vector<1x128xf32> to vector<32x128xf32>
    %98 = arith.addf %95, %97 : vector<32x128xf32>
    %99 = arith.addf %42, %98 : vector<32x128xf32>
    %100 = vector.extract_strided_slice %0 {offsets = [4, 0], sizes = [1, 128], strides = [1, 1]} : vector<20x384xf32> to vector<1x128xf32>
    %101 = vector.extract_strided_slice %0 {offsets = [5, 0], sizes = [1, 128], strides = [1, 1]} : vector<20x384xf32> to vector<1x128xf32>
    %cst_35 = arith.constant dense<0.000000e+00> : vector<32xf32>
    %102 = vector.multi_reduction <add>, %99, %cst_35 [1] : vector<32x128xf32> to vector<32xf32>
    %103 = vector.shape_cast %102 : vector<32xf32> to vector<32x1xf32>
    %cst_36 = arith.constant 1.280000e+02 : f32
    %104 = vector.broadcast %cst_36 : f32 to vector<32x1xf32>
    %105 = arith.divf %103, %104 : vector<32x1xf32>
    %106 = vector.broadcast %105 : vector<32x1xf32> to vector<32x128xf32>
    %107 = arith.subf %99, %106 : vector<32x128xf32>
    %108 = arith.mulf %107, %107 : vector<32x128xf32>
    %cst_37 = arith.constant dense<0.000000e+00> : vector<32xf32>
    %109 = vector.multi_reduction <add>, %108, %cst_37 [1] : vector<32x128xf32> to vector<32xf32>
    %110 = vector.shape_cast %109 : vector<32xf32> to vector<32x1xf32>
    %cst_38 = arith.constant 1.280000e+02 : f32
    %111 = vector.broadcast %cst_38 : f32 to vector<32x1xf32>
    %112 = arith.divf %110, %111 : vector<32x1xf32>
    %113 = vector.broadcast %105 : vector<32x1xf32> to vector<32x128xf32>
    %114 = arith.subf %99, %113 : vector<32x128xf32>
    %cst_39 = arith.constant 9.99999996E-13 : f32
    %115 = vector.broadcast %cst_39 : f32 to vector<32x1xf32>
    %116 = arith.addf %112, %115 : vector<32x1xf32>
    %117 = math.rsqrt %116 : vector<32x1xf32>
    %118 = vector.broadcast %117 : vector<32x1xf32> to vector<32x128xf32>
    %119 = arith.mulf %114, %118 : vector<32x128xf32>
    %120 = vector.broadcast %100 : vector<1x128xf32> to vector<32x128xf32>
    %121 = arith.mulf %119, %120 : vector<32x128xf32>
    %122 = vector.broadcast %101 : vector<1x128xf32> to vector<32x128xf32>
    %123 = arith.addf %121, %122 : vector<32x128xf32>
    %c0_40 = arith.constant 0 : index
    %c0_41 = arith.constant 0 : index
    %c0_42 = arith.constant 0 : index
    %124 = vector.load %arg9[%c0_40, %c0_41, %c0_42] : memref<2x128x256xbf16, #tpu.memory_space<vmem>>, vector<1x128x256xbf16>
    %125 = vector.shape_cast %124 : vector<1x128x256xbf16> to vector<128x256xbf16>
    %126 = arith.truncf %123 : vector<32x128xf32> to vector<32x128xbf16>
    %cst_43 = arith.constant dense<0.000000e+00> : vector<32x256xf32>
    %127 = tpu.matmul %126, %125, %cst_43 {dimension_numbers = #tpu.dot_dimension_numbers<[1], [0], [0], [1], [0, 0, 1, 1], [], []>} : vector<32x128xbf16>, vector<128x256xbf16>, vector<32x256xf32> -> vector<32x256xf32>
    %128 = vector.extract_strided_slice %0 {offsets = [6, 0], sizes = [1, 256], strides = [1, 1]} : vector<20x384xf32> to vector<1x256xf32>
    %129 = vector.broadcast %128 : vector<1x256xf32> to vector<32x256xf32>
    %130 = arith.addf %127, %129 : vector<32x256xf32>
    %131 = arith.mulf %130, %130 : vector<32x256xf32>
    %132 = arith.mulf %130, %131 : vector<32x256xf32>
    %cst_44 = arith.constant 4.471500e-02 : f32
    %133 = vector.broadcast %cst_44 : f32 to vector<32x256xf32>
    %134 = arith.mulf %133, %132 : vector<32x256xf32>
    %135 = arith.addf %130, %134 : vector<32x256xf32>
    %cst_45 = arith.constant 0.797884583 : f32
    %136 = vector.broadcast %cst_45 : f32 to vector<32x256xf32>
    %137 = arith.mulf %136, %135 : vector<32x256xf32>
    %138 = math.tanh %137 : vector<32x256xf32>
    %cst_46 = arith.constant 1.000000e+00 : f32
    %139 = vector.broadcast %cst_46 : f32 to vector<32x256xf32>
    %140 = arith.addf %139, %138 : vector<32x256xf32>
    %cst_47 = arith.constant 5.000000e-01 : f32
    %141 = vector.broadcast %cst_47 : f32 to vector<32x256xf32>
    %142 = arith.mulf %141, %140 : vector<32x256xf32>
    %143 = arith.mulf %130, %142 : vector<32x256xf32>
    %c0_48 = arith.constant 0 : index
    %c0_49 = arith.constant 0 : index
    %c0_50 = arith.constant 0 : index
    %144 = vector.load %arg10[%c0_48, %c0_49, %c0_50] : memref<2x256x128xbf16, #tpu.memory_space<vmem>>, vector<1x256x128xbf16>
    %145 = vector.shape_cast %144 : vector<1x256x128xbf16> to vector<256x128xbf16>
    %146 = arith.truncf %143 : vector<32x256xf32> to vector<32x256xbf16>
    %cst_51 = arith.constant dense<0.000000e+00> : vector<32x128xf32>
    %147 = tpu.matmul %146, %145, %cst_51 {dimension_numbers = #tpu.dot_dimension_numbers<[1], [0], [0], [1], [0, 0, 1, 1], [], []>} : vector<32x256xbf16>, vector<256x128xbf16>, vector<32x128xf32> -> vector<32x128xf32>
    %148 = vector.extract_strided_slice %0 {offsets = [7, 0], sizes = [1, 128], strides = [1, 1]} : vector<20x384xf32> to vector<1x128xf32>
    %149 = vector.broadcast %148 : vector<1x128xf32> to vector<32x128xf32>
    %150 = arith.addf %147, %149 : vector<32x128xf32>
    %151 = arith.addf %123, %150 : vector<32x128xf32>
    %152 = vector.extract_strided_slice %0 {offsets = [8, 0], sizes = [1, 128], strides = [1, 1]} : vector<20x384xf32> to vector<1x128xf32>
    %153 = vector.extract_strided_slice %0 {offsets = [9, 0], sizes = [1, 128], strides = [1, 1]} : vector<20x384xf32> to vector<1x128xf32>
    %cst_52 = arith.constant dense<0.000000e+00> : vector<32xf32>
    %154 = vector.multi_reduction <add>, %151, %cst_52 [1] : vector<32x128xf32> to vector<32xf32>
    %155 = vector.shape_cast %154 : vector<32xf32> to vector<32x1xf32>
    %cst_53 = arith.constant 1.280000e+02 : f32
    %156 = vector.broadcast %cst_53 : f32 to vector<32x1xf32>
    %157 = arith.divf %155, %156 : vector<32x1xf32>
    %158 = vector.broadcast %157 : vector<32x1xf32> to vector<32x128xf32>
    %159 = arith.subf %151, %158 : vector<32x128xf32>
    %160 = arith.mulf %159, %159 : vector<32x128xf32>
    %cst_54 = arith.constant dense<0.000000e+00> : vector<32xf32>
    %161 = vector.multi_reduction <add>, %160, %cst_54 [1] : vector<32x128xf32> to vector<32xf32>
    %162 = vector.shape_cast %161 : vector<32xf32> to vector<32x1xf32>
    %cst_55 = arith.constant 1.280000e+02 : f32
    %163 = vector.broadcast %cst_55 : f32 to vector<32x1xf32>
    %164 = arith.divf %162, %163 : vector<32x1xf32>
    %165 = vector.broadcast %157 : vector<32x1xf32> to vector<32x128xf32>
    %166 = arith.subf %151, %165 : vector<32x128xf32>
    %cst_56 = arith.constant 9.99999996E-13 : f32
    %167 = vector.broadcast %cst_56 : f32 to vector<32x1xf32>
    %168 = arith.addf %164, %167 : vector<32x1xf32>
    %169 = math.rsqrt %168 : vector<32x1xf32>
    %170 = vector.broadcast %169 : vector<32x1xf32> to vector<32x128xf32>
    %171 = arith.mulf %166, %170 : vector<32x128xf32>
    %172 = vector.broadcast %152 : vector<1x128xf32> to vector<32x128xf32>
    %173 = arith.mulf %171, %172 : vector<32x128xf32>
    %174 = vector.broadcast %153 : vector<1x128xf32> to vector<32x128xf32>
    %175 = arith.addf %173, %174 : vector<32x128xf32>
    %c1 = arith.constant 1 : index
    %c0_57 = arith.constant 0 : index
    %c0_58 = arith.constant 0 : index
    %176 = vector.load %arg7[%c1, %c0_57, %c0_58] : memref<2x128x384xbf16, #tpu.memory_space<vmem>>, vector<1x128x384xbf16>
    %177 = vector.shape_cast %176 : vector<1x128x384xbf16> to vector<128x384xbf16>
    %178 = arith.truncf %175 : vector<32x128xf32> to vector<32x128xbf16>
    %cst_59 = arith.constant dense<0.000000e+00> : vector<32x384xf32>
    %179 = tpu.matmul %178, %177, %cst_59 {dimension_numbers = #tpu.dot_dimension_numbers<[1], [0], [0], [1], [0, 0, 1, 1], [], []>} : vector<32x128xbf16>, vector<128x384xbf16>, vector<32x384xf32> -> vector<32x384xf32>
    %180 = vector.extract_strided_slice %0 {offsets = [10, 0], sizes = [1, 384], strides = [1, 1]} : vector<20x384xf32> to vector<1x384xf32>
    %181 = vector.broadcast %180 : vector<1x384xf32> to vector<32x384xf32>
    %182 = arith.addf %179, %181 : vector<32x384xf32>
    %183 = tpu.transpose %182, [1, 0] : vector<32x384xf32> -> vector<384x32xf32>
    %184 = vector.extract_strided_slice %183 {offsets = [0, 0], sizes = [128, 32], strides = [1, 1]} : vector<384x32xf32> to vector<128x32xf32>
    %185 = vector.shape_cast %184 : vector<128x32xf32> to vector<4x32x32xf32>
    %186 = tpu.transpose %185, [0, 2, 1] : vector<4x32x32xf32> -> vector<4x32x32xf32>
    %187 = arith.truncf %186 : vector<4x32x32xf32> to vector<4x32x32xbf16>
    %188 = vector.extract_strided_slice %183 {offsets = [128, 0], sizes = [128, 32], strides = [1, 1]} : vector<384x32xf32> to vector<128x32xf32>
    %189 = vector.shape_cast %188 : vector<128x32xf32> to vector<4x32x32xf32>
    %190 = tpu.transpose %189, [0, 2, 1] : vector<4x32x32xf32> -> vector<4x32x32xf32>
    %191 = arith.truncf %190 : vector<4x32x32xf32> to vector<4x32x32xbf16>
    %192 = vector.extract_strided_slice %183 {offsets = [256, 0], sizes = [128, 32], strides = [1, 1]} : vector<384x32xf32> to vector<128x32xf32>
    %193 = vector.shape_cast %192 : vector<128x32xf32> to vector<4x32x32xf32>
    %194 = tpu.transpose %193, [0, 2, 1] : vector<4x32x32xf32> -> vector<4x32x32xf32>
    %195 = arith.truncf %194 : vector<4x32x32xf32> to vector<4x32x32xbf16>
    "tpu.trace_start"() <{level = 10 : i32, message = "hnd,hmd->hnm"}> : () -> ()
    %cst_60 = arith.constant dense<0.000000e+00> : vector<4x32x32xf32>
    %196 = tpu.matmul %187, %191, %cst_60 {dimension_numbers = #tpu.dot_dimension_numbers<[2], [2], [1], [1], [0, 0, 0, 1, 1, 1], [0], [0]>} : vector<4x32x32xbf16>, vector<4x32x32xbf16>, vector<4x32x32xf32> -> vector<4x32x32xf32>
    "tpu.trace_stop"() : () -> ()
    %cst_61 = arith.constant 0.176776692 : f32
    %197 = vector.broadcast %cst_61 : f32 to vector<4x32x32xf32>
    %198 = arith.mulf %196, %197 : vector<4x32x32xf32>
    %199 = vector.shape_cast %50 : vector<32x32xf32> to vector<1x32x32xf32>
    %200 = vector.broadcast %199 : vector<1x32x32xf32> to vector<4x32x32xf32>
    %201 = arith.addf %198, %200 : vector<4x32x32xf32>
    %cst_62 = arith.constant dense<0xFF800000> : vector<4x32xf32>
    %202 = vector.multi_reduction <maximumf>, %201, %cst_62 [2] : vector<4x32x32xf32> to vector<4x32xf32>
    %203 = vector.shape_cast %202 : vector<4x32xf32> to vector<4x32x1xf32>
    %204 = vector.broadcast %203 : vector<4x32x1xf32> to vector<4x32x32xf32>
    %205 = arith.subf %201, %204 : vector<4x32x32xf32>
    %206 = math.exp %205 : vector<4x32x32xf32>
    %cst_63 = arith.constant dense<0.000000e+00> : vector<4x32xf32>
    %207 = vector.multi_reduction <add>, %206, %cst_63 [2] : vector<4x32x32xf32> to vector<4x32xf32>
    %208 = vector.shape_cast %207 : vector<4x32xf32> to vector<4x32x1xf32>
    %209 = tpu.reciprocal %208 {approx = true} : vector<4x32x1xf32> -> vector<4x32x1xf32>
    %210 = vector.broadcast %209 : vector<4x32x1xf32> to vector<4x32x32xf32>
    %211 = arith.mulf %206, %210 : vector<4x32x32xf32>
    %212 = arith.truncf %211 : vector<4x32x32xf32> to vector<4x32x32xbf16>
    "tpu.trace_start"() <{level = 10 : i32, message = "hnm,hmd->hnd"}> : () -> ()
    %cst_64 = arith.constant dense<0.000000e+00> : vector<4x32x32xf32>
    %213 = tpu.matmul %212, %195, %cst_64 {dimension_numbers = #tpu.dot_dimension_numbers<[2], [1], [1], [2], [0, 0, 0, 1, 1, 2], [0], [0]>} : vector<4x32x32xbf16>, vector<4x32x32xbf16>, vector<4x32x32xf32> -> vector<4x32x32xf32>
    "tpu.trace_stop"() : () -> ()
    %214 = tpu.transpose %213, [0, 2, 1] : vector<4x32x32xf32> -> vector<4x32x32xf32>
    %215 = vector.shape_cast %214 : vector<4x32x32xf32> to vector<128x32xf32>
    %216 = tpu.transpose %215, [1, 0] : vector<128x32xf32> -> vector<32x128xf32>
    %c1_65 = arith.constant 1 : index
    %c0_66 = arith.constant 0 : index
    %c0_67 = arith.constant 0 : index
    %217 = vector.load %arg8[%c1_65, %c0_66, %c0_67] : memref<2x128x128xbf16, #tpu.memory_space<vmem>>, vector<1x128x128xbf16>
    %218 = vector.shape_cast %217 : vector<1x128x128xbf16> to vector<128x128xbf16>
    %219 = arith.truncf %216 : vector<32x128xf32> to vector<32x128xbf16>
    %cst_68 = arith.constant dense<0.000000e+00> : vector<32x128xf32>
    %220 = tpu.matmul %219, %218, %cst_68 {dimension_numbers = #tpu.dot_dimension_numbers<[1], [0], [0], [1], [0, 0, 1, 1], [], []>} : vector<32x128xbf16>, vector<128x128xbf16>, vector<32x128xf32> -> vector<32x128xf32>
    %221 = vector.extract_strided_slice %0 {offsets = [11, 0], sizes = [1, 128], strides = [1, 1]} : vector<20x384xf32> to vector<1x128xf32>
    %222 = vector.broadcast %221 : vector<1x128xf32> to vector<32x128xf32>
    %223 = arith.addf %220, %222 : vector<32x128xf32>
    %224 = arith.addf %175, %223 : vector<32x128xf32>
    %225 = vector.extract_strided_slice %0 {offsets = [12, 0], sizes = [1, 128], strides = [1, 1]} : vector<20x384xf32> to vector<1x128xf32>
    %226 = vector.extract_strided_slice %0 {offsets = [13, 0], sizes = [1, 128], strides = [1, 1]} : vector<20x384xf32> to vector<1x128xf32>
    %cst_69 = arith.constant dense<0.000000e+00> : vector<32xf32>
    %227 = vector.multi_reduction <add>, %224, %cst_69 [1] : vector<32x128xf32> to vector<32xf32>
    %228 = vector.shape_cast %227 : vector<32xf32> to vector<32x1xf32>
    %cst_70 = arith.constant 1.280000e+02 : f32
    %229 = vector.broadcast %cst_70 : f32 to vector<32x1xf32>
    %230 = arith.divf %228, %229 : vector<32x1xf32>
    %231 = vector.broadcast %230 : vector<32x1xf32> to vector<32x128xf32>
    %232 = arith.subf %224, %231 : vector<32x128xf32>
    %233 = arith.mulf %232, %232 : vector<32x128xf32>
    %cst_71 = arith.constant dense<0.000000e+00> : vector<32xf32>
    %234 = vector.multi_reduction <add>, %233, %cst_71 [1] : vector<32x128xf32> to vector<32xf32>
    %235 = vector.shape_cast %234 : vector<32xf32> to vector<32x1xf32>
    %cst_72 = arith.constant 1.280000e+02 : f32
    %236 = vector.broadcast %cst_72 : f32 to vector<32x1xf32>
    %237 = arith.divf %235, %236 : vector<32x1xf32>
    %238 = vector.broadcast %230 : vector<32x1xf32> to vector<32x128xf32>
    %239 = arith.subf %224, %238 : vector<32x128xf32>
    %cst_73 = arith.constant 9.99999996E-13 : f32
    %240 = vector.broadcast %cst_73 : f32 to vector<32x1xf32>
    %241 = arith.addf %237, %240 : vector<32x1xf32>
    %242 = math.rsqrt %241 : vector<32x1xf32>
    %243 = vector.broadcast %242 : vector<32x1xf32> to vector<32x128xf32>
    %244 = arith.mulf %239, %243 : vector<32x128xf32>
    %245 = vector.broadcast %225 : vector<1x128xf32> to vector<32x128xf32>
    %246 = arith.mulf %244, %245 : vector<32x128xf32>
    %247 = vector.broadcast %226 : vector<1x128xf32> to vector<32x128xf32>
    %248 = arith.addf %246, %247 : vector<32x128xf32>
    %c1_74 = arith.constant 1 : index
    %c0_75 = arith.constant 0 : index
    %c0_76 = arith.constant 0 : index
    %249 = vector.load %arg9[%c1_74, %c0_75, %c0_76] : memref<2x128x256xbf16, #tpu.memory_space<vmem>>, vector<1x128x256xbf16>
    %250 = vector.shape_cast %249 : vector<1x128x256xbf16> to vector<128x256xbf16>
    %251 = arith.truncf %248 : vector<32x128xf32> to vector<32x128xbf16>
    %cst_77 = arith.constant dense<0.000000e+00> : vector<32x256xf32>
    %252 = tpu.matmul %251, %250, %cst_77 {dimension_numbers = #tpu.dot_dimension_numbers<[1], [0], [0], [1], [0, 0, 1, 1], [], []>} : vector<32x128xbf16>, vector<128x256xbf16>, vector<32x256xf32> -> vector<32x256xf32>
    %253 = vector.extract_strided_slice %0 {offsets = [14, 0], sizes = [1, 256], strides = [1, 1]} : vector<20x384xf32> to vector<1x256xf32>
    %254 = vector.broadcast %253 : vector<1x256xf32> to vector<32x256xf32>
    %255 = arith.addf %252, %254 : vector<32x256xf32>
    %256 = arith.mulf %255, %255 : vector<32x256xf32>
    %257 = arith.mulf %255, %256 : vector<32x256xf32>
    %cst_78 = arith.constant 4.471500e-02 : f32
    %258 = vector.broadcast %cst_78 : f32 to vector<32x256xf32>
    %259 = arith.mulf %258, %257 : vector<32x256xf32>
    %260 = arith.addf %255, %259 : vector<32x256xf32>
    %cst_79 = arith.constant 0.797884583 : f32
    %261 = vector.broadcast %cst_79 : f32 to vector<32x256xf32>
    %262 = arith.mulf %261, %260 : vector<32x256xf32>
    %263 = math.tanh %262 : vector<32x256xf32>
    %cst_80 = arith.constant 1.000000e+00 : f32
    %264 = vector.broadcast %cst_80 : f32 to vector<32x256xf32>
    %265 = arith.addf %264, %263 : vector<32x256xf32>
    %cst_81 = arith.constant 5.000000e-01 : f32
    %266 = vector.broadcast %cst_81 : f32 to vector<32x256xf32>
    %267 = arith.mulf %266, %265 : vector<32x256xf32>
    %268 = arith.mulf %255, %267 : vector<32x256xf32>
    %c1_82 = arith.constant 1 : index
    %c0_83 = arith.constant 0 : index
    %c0_84 = arith.constant 0 : index
    %269 = vector.load %arg10[%c1_82, %c0_83, %c0_84] : memref<2x256x128xbf16, #tpu.memory_space<vmem>>, vector<1x256x128xbf16>
    %270 = vector.shape_cast %269 : vector<1x256x128xbf16> to vector<256x128xbf16>
    %271 = arith.truncf %268 : vector<32x256xf32> to vector<32x256xbf16>
    %cst_85 = arith.constant dense<0.000000e+00> : vector<32x128xf32>
    %272 = tpu.matmul %271, %270, %cst_85 {dimension_numbers = #tpu.dot_dimension_numbers<[1], [0], [0], [1], [0, 0, 1, 1], [], []>} : vector<32x256xbf16>, vector<256x128xbf16>, vector<32x128xf32> -> vector<32x128xf32>
    %273 = vector.extract_strided_slice %0 {offsets = [15, 0], sizes = [1, 128], strides = [1, 1]} : vector<20x384xf32> to vector<1x128xf32>
    %274 = vector.broadcast %273 : vector<1x128xf32> to vector<32x128xf32>
    %275 = arith.addf %272, %274 : vector<32x128xf32>
    %276 = arith.addf %248, %275 : vector<32x128xf32>
    %277 = vector.extract_strided_slice %0 {offsets = [16, 0], sizes = [1, 128], strides = [1, 1]} : vector<20x384xf32> to vector<1x128xf32>
    %278 = vector.extract_strided_slice %0 {offsets = [17, 0], sizes = [1, 128], strides = [1, 1]} : vector<20x384xf32> to vector<1x128xf32>
    %cst_86 = arith.constant dense<0.000000e+00> : vector<32xf32>
    %279 = vector.multi_reduction <add>, %276, %cst_86 [1] : vector<32x128xf32> to vector<32xf32>
    %280 = vector.shape_cast %279 : vector<32xf32> to vector<32x1xf32>
    %cst_87 = arith.constant 1.280000e+02 : f32
    %281 = vector.broadcast %cst_87 : f32 to vector<32x1xf32>
    %282 = arith.divf %280, %281 : vector<32x1xf32>
    %283 = vector.broadcast %282 : vector<32x1xf32> to vector<32x128xf32>
    %284 = arith.subf %276, %283 : vector<32x128xf32>
    %285 = arith.mulf %284, %284 : vector<32x128xf32>
    %cst_88 = arith.constant dense<0.000000e+00> : vector<32xf32>
    %286 = vector.multi_reduction <add>, %285, %cst_88 [1] : vector<32x128xf32> to vector<32xf32>
    %287 = vector.shape_cast %286 : vector<32xf32> to vector<32x1xf32>
    %cst_89 = arith.constant 1.280000e+02 : f32
    %288 = vector.broadcast %cst_89 : f32 to vector<32x1xf32>
    %289 = arith.divf %287, %288 : vector<32x1xf32>
    %290 = vector.broadcast %282 : vector<32x1xf32> to vector<32x128xf32>
    %291 = arith.subf %276, %290 : vector<32x128xf32>
    %cst_90 = arith.constant 9.99999996E-13 : f32
    %292 = vector.broadcast %cst_90 : f32 to vector<32x1xf32>
    %293 = arith.addf %289, %292 : vector<32x1xf32>
    %294 = math.rsqrt %293 : vector<32x1xf32>
    %295 = vector.broadcast %294 : vector<32x1xf32> to vector<32x128xf32>
    %296 = arith.mulf %291, %295 : vector<32x128xf32>
    %297 = vector.broadcast %277 : vector<1x128xf32> to vector<32x128xf32>
    %298 = arith.mulf %296, %297 : vector<32x128xf32>
    %299 = vector.broadcast %278 : vector<1x128xf32> to vector<32x128xf32>
    %300 = arith.addf %298, %299 : vector<32x128xf32>
    %301 = vector.shape_cast %300 : vector<32x128xf32> to vector<2x16x128xf32>
    %302 = vector.extract_strided_slice %301 {offsets = [0, 0, 0], sizes = [2, 1, 128], strides = [1, 1, 1]} : vector<2x16x128xf32> to vector<2x1x128xf32>
    %303 = vector.shape_cast %302 : vector<2x1x128xf32> to vector<2x128xf32>
    %cst_91 = arith.constant 0.000000e+00 : f32
    %304 = vector.broadcast %cst_91 : f32 to vector<6x128xf32>
    %305 = tpu.concatenate %303, %304 in 0 : vector<2x128xf32>, vector<6x128xf32> -> vector<8x128xf32>
    %c0_92 = arith.constant 0 : index
    %c0_93 = arith.constant 0 : index
    %306 = vector.load %arg11[%c0_92, %c0_93] : memref<128x128xbf16, #tpu.memory_space<vmem>>, vector<128x128xbf16>
    %307 = arith.truncf %305 : vector<8x128xf32> to vector<8x128xbf16>
    %cst_94 = arith.constant dense<0.000000e+00> : vector<8x128xf32>
    %308 = tpu.matmul %307, %306, %cst_94 {dimension_numbers = #tpu.dot_dimension_numbers<[1], [0], [0], [1], [0, 0, 1, 1], [], []>} : vector<8x128xbf16>, vector<128x128xbf16>, vector<8x128xf32> -> vector<8x128xf32>
    %309 = vector.extract_strided_slice %0 {offsets = [18, 0], sizes = [1, 128], strides = [1, 1]} : vector<20x384xf32> to vector<1x128xf32>
    %310 = vector.broadcast %309 : vector<1x128xf32> to vector<8x128xf32>
    %311 = arith.addf %308, %310 : vector<8x128xf32>
    %312 = math.tanh %311 : vector<8x128xf32>
    %c0_95 = arith.constant 0 : index
    %c0_96 = arith.constant 0 : index
    %313 = vector.load %arg12[%c0_95, %c0_96] : memref<128x128xbf16, #tpu.memory_space<vmem>>, vector<128x128xbf16>
    %314 = arith.truncf %312 : vector<8x128xf32> to vector<8x128xbf16>
    %cst_97 = arith.constant dense<0.000000e+00> : vector<8x128xf32>
    %315 = tpu.matmul %314, %313, %cst_97 {dimension_numbers = #tpu.dot_dimension_numbers<[1], [0], [0], [1], [0, 0, 1, 1], [], []>} : vector<8x128xbf16>, vector<128x128xbf16>, vector<8x128xf32> -> vector<8x128xf32>
    %316 = vector.extract_strided_slice %0 {offsets = [19, 0], sizes = [1, 128], strides = [1, 1]} : vector<20x384xf32> to vector<1x128xf32>
    %317 = vector.broadcast %316 : vector<1x128xf32> to vector<8x128xf32>
    %318 = arith.addf %315, %317 : vector<8x128xf32>
    %cst_98 = arith.constant 0.000000e+00 : f32
    %319 = vector.broadcast %cst_98 : f32 to vector<8x128xf32>
    %320 = arith.maximumf %318, %319 : vector<8x128xf32>
    %c0_99 = arith.constant 0 : index
    %c0_100 = arith.constant 0 : index
    %321 = vector.load %arg13[%c0_99, %c0_100] : memref<8x128xf32, #tpu.memory_space<vmem>>, vector<8x128xf32>
    tpu.vector_store %arg13[%c0_99, %c0_100], %320 {strides = array<i32>} : memref<8x128xf32, #tpu.memory_space<vmem>>, vector<8x128xf32>,
    return
  }
}

</mosaic_0001>

<llo_original>
// kernel: bert_classifier_forward.1
$region0: #{bert_classifier_forward.1}
  #allocation0 [shape = 'u32[]', space=smem, size = 0x4, offset = 0x4, fixed_abs, tag = 'smem constant byte address 0x4 - core index']
  #allocation1 [shape = 'u32[144,128]{1,0:T(1,128)}', space=vmem, size = 0x12000, scoped, tag = 'internal scratch']
  %s0 = inlined_call_operand.vmem [shape: s32[32,1], index: 0, kind: input, shape index: {}]
  %s1 = inlined_call_operand.vmem [shape: f32[32,1], index: 1, kind: input, shape index: {}]
  %s2 = inlined_call_operand.vmem [shape: f32[1,32], index: 2, kind: input, shape index: {}]
  %s3 = inlined_call_operand.hbm [shape: f32[64,128], index: 3, kind: input, shape index: {}]
  %s4 = inlined_call_operand.hbm [shape: f32[32,128], index: 4, kind: input, shape index: {}]
  %s5 = inlined_call_operand.vmem [shape: f32[2,128], index: 5, kind: input, shape index: {}]
  %s6 = inlined_call_operand.vmem [shape: f32[20,384], index: 6, kind: input, shape index: {}]
  %s7 = inlined_call_operand.hbm [shape: bf16[2,128,384], index: 7, kind: input, shape index: {}]
  %s8 = inlined_call_operand.hbm [shape: bf16[2,128,128], index: 8, kind: input, shape index: {}]
  %s9 = inlined_call_operand.hbm [shape: bf16[2,128,256], index: 9, kind: input, shape index: {}]
  %s10 = inlined_call_operand.hbm [shape: bf16[2,256,128], index: 10, kind: input, shape index: {}]
  %s11 = inlined_call_operand.hbm [shape: bf16[128,128], index: 11, kind: input, shape index: {}]
  %s12 = inlined_call_operand.hbm [shape: bf16[128,128], index: 12, kind: input, shape index: {}]
  %s13 = inlined_call_operand.vmem [shape: f32[8,128], index: 13, kind: output, shape index: {}]
  %s14 = sld [smem:[#allocation0]]
  $region94: #{bert_classifier_forward.1} parent=0
    _
  %s16 = ssub.s32 1, %s14
  %s17 = scalar_select 0, %s16, %s14
  $region1: #{bert_classifier_forward.1} parent=0
    #allocation2 [shape = 'u8[32768]{0}', space=vmem, size = 0x8000, scoped, tag = 'input window, operand 3, single buffered']
    #allocation3 [shape = 's32[1]{0}', space=sflag, size = 0x4, scoped, tag = 'scoped memory for bert_classifier_forward.1']
    #allocation4 [shape = 'u8[16384]{0}', space=vmem, size = 0x4000, scoped, tag = 'input window, operand 4, single buffered']
    #allocation5 [shape = 's32[1]{0}', space=sflag, size = 0x4, scoped, tag = 'scoped memory for bert_classifier_forward.1']
    #allocation6 [shape = 'u8[196608]{0}', space=vmem, size = 0x30000, scoped, tag = 'input window, operand 7, single buffered']
    #allocation7 [shape = 'u8[65536]{0}', space=vmem, size = 0x10000, scoped, tag = 'input window, operand 8, single buffered']
    #allocation8 [shape = 's32[1]{0}', space=sflag, size = 0x4, scoped, tag = 'scoped memory for bert_classifier_forward.1']
    #allocation9 [shape = 'u8[131072]{0}', space=vmem, size = 0x20000, scoped, tag = 'input window, operand 9, single buffered']
    #allocation10 [shape = 'u8[131072]{0}', space=vmem, size = 0x20000, scoped, tag = 'input window, operand 10, single buffered']
    #allocation11 [shape = 's32[1]{0}', space=sflag, size = 0x4, scoped, tag = 'scoped memory for bert_classifier_forward.1']
    #allocation12 [shape = 'u8[32768]{0}', space=vmem, size = 0x8000, scoped, tag = 'input window, operand 11, single buffered']
    #allocation13 [shape = 'u8[32768]{0}', space=vmem, size = 0x8000, scoped, tag = 'input window, operand 12, single buffered']
    #allocation14 [shape = 's32[1]{0}', space=sflag, size = 0x4, scoped, tag = 'scoped memory for bert_classifier_forward.1']
    %18 = vsyncpa [#allocation3], 0
    %19 = vsyncpa [#allocation5], 0
    %20 = vsyncpa [#allocation8], 0
    %21 = vsyncpa [#allocation11], 0
    %22 = vsyncpa [#allocation14], 0
    // Predicated region
    $region2: #{bert_classifier_forward.1} parent=1 // pred_check
      _
    $region3: #{bert_classifier_forward.1} parent=1 // pred_check_branch
      %24 = sbr.rel (0) target = $region5
    $region4: #{bert_classifier_forward.1} parent=1 // pred_region
      _
    $region5: #{bert_classifier_forward.1} parent=1 // pred_fallthru
      _
    // Predicated region
    $region6: #{bert_classifier_forward.1} parent=1 // pred_check
      _
    $region7: #{bert_classifier_forward.1} parent=1 // pred_check_branch
      %26 = sbr.rel (0) target = $region9
    $region8: #{bert_classifier_forward.1} parent=1 // pred_region
      _
    $region9: #{bert_classifier_forward.1} parent=1 // pred_fallthru
      _
    // Predicated region
    $region10: #{bert_classifier_forward.1} parent=1 // pred_check
      _
    $region11: #{bert_classifier_forward.1} parent=1 // pred_check_branch
      %28 = sbr.rel (0) target = $region13
    $region12: #{bert_classifier_forward.1} parent=1 // pred_region
      _
    $region13: #{bert_classifier_forward.1} parent=1 // pred_fallthru
      _
    // Predicated region
    $region14: #{bert_classifier_forward.1} parent=1 // pred_check
      _
    $region15: #{bert_classifier_forward.1} parent=1 // pred_check_branch
      %30 = sbr.rel (0) target = $region17
    $region16: #{bert_classifier_forward.1} parent=1 // pred_region
      %s32 = ssub.s32 1024, 1024
      %33 = vsyncadd [#allocation3], %s32
      %s34 = sshll.u32 [#allocation2], 4
      %s35 = int_to_ptr.vmem [resolvable:$true] %s34
      %40 = dma.hbm_to_vmem [thread:$0]  %s3, 1024, %s35, [#allocation3], 128, 128, 8
    $region17: #{bert_classifier_forward.1} parent=1 // pred_fallthru
      _
    // Predicated region
    $region18: #{bert_classifier_forward.1} parent=1 // pred_check
      _
    $region19: #{bert_classifier_forward.1} parent=1 // pred_check_branch
      %42 = sbr.rel (0) target = $region21
    $region20: #{bert_classifier_forward.1} parent=1 // pred_region
      %s44 = ssub.s32 512, 512
      %45 = vsyncadd [#allocation5], %s44
      %s46 = sshll.u32 [#allocation4], 4
      %s47 = int_to_ptr.vmem [resolvable:$true] %s46
      %52 = dma.hbm_to_vmem [thread:$0]  %s4, 512, %s47, [#allocation5], 128, 128, 8
    $region21: #{bert_classifier_forward.1} parent=1 // pred_fallthru
      _
    // Predicated region
    $region22: #{bert_classifier_forward.1} parent=1 // pred_check
      _
    $region23: #{bert_classifier_forward.1} parent=1 // pred_check_branch
      %54 = sbr.rel (0) target = $region25
    $region24: #{bert_classifier_forward.1} parent=1 // pred_region
      _
    $region25: #{bert_classifier_forward.1} parent=1 // pred_fallthru
      _
    // Predicated region
    $region26: #{bert_classifier_forward.1} parent=1 // pred_check
      _
    $region27: #{bert_classifier_forward.1} parent=1 // pred_check_branch
      %56 = sbr.rel (0) target = $region29
    $region28: #{bert_classifier_forward.1} parent=1 // pred_region
      _
    $region29: #{bert_classifier_forward.1} parent=1 // pred_fallthru
      _
    // Predicated region
    $region30: #{bert_classifier_forward.1} parent=1 // pred_check
      _
    $region31: #{bert_classifier_forward.1} parent=1 // pred_check_branch
      %58 = sbr.rel (0) target = $region33
    $region32: #{bert_classifier_forward.1} parent=1 // pred_region
      %s60 = ssub.s32 6144, 6144
      %61 = vsyncadd [#allocation5], %s60
      %s62 = sshll.u32 [#allocation6], 4
      %s63 = int_to_ptr.vmem [resolvable:$true] %s62
      %68 = dma.hbm_to_vmem [thread:$0]  %s7, 6144, %s63, [#allocation5], 192, 192, 12
    $region33: #{bert_classifier_forward.1} parent=1 // pred_fallthru
      _
    // Predicated region
    $region34: #{bert_classifier_forward.1} parent=1 // pred_check
      _
    $region35: #{bert_classifier_forward.1} parent=1 // pred_check_branch
      %70 = sbr.rel (0) target = $region37
    $region36: #{bert_classifier_forward.1} parent=1 // pred_region
      %s72 = ssub.s32 2048, 2048
      %73 = vsyncadd [#allocation8], %s72
      %s74 = sshll.u32 [#allocation7], 4
      %s75 = int_to_ptr.vmem [resolvable:$true] %s74
      %80 = dma.hbm_to_vmem [thread:$0]  %s8, 2048, %s75, [#allocation8], 64, 64, 4
    $region37: #{bert_classifier_forward.1} parent=1 // pred_fallthru
      _
    // Predicated region
    $region38: #{bert_classifier_forward.1} parent=1 // pred_check
      _
    $region39: #{bert_classifier_forward.1} parent=1 // pred_check_branch
      %82 = sbr.rel (0) target = $region41
    $region40: #{bert_classifier_forward.1} parent=1 // pred_region
      %s84 = ssub.s32 4096, 4096
      %85 = vsyncadd [#allocation8], %s84
      %s86 = sshll.u32 [#allocation9], 4
      %s87 = int_to_ptr.vmem [resolvable:$true] %s86
      %92 = dma.hbm_to_vmem [thread:$0]  %s9, 4096, %s87, [#allocation8], 128, 128, 8
    $region41: #{bert_classifier_forward.1} parent=1 // pred_fallthru
      _
    // Predicated region
    $region42: #{bert_classifier_forward.1} parent=1 // pred_check
      _
    $region43: #{bert_classifier_forward.1} parent=1 // pred_check_branch
      %94 = sbr.rel (0) target = $region45
    $region44: #{bert_classifier_forward.1} parent=1 // pred_region
      %s96 = ssub.s32 4096, 4096
      %97 = vsyncadd [#allocation11], %s96
      %s98 = sshll.u32 [#allocation10], 4
      %s99 = int_to_ptr.vmem [resolvable:$true] %s98
      %104 = dma.hbm_to_vmem [thread:$0]  %s10, 4096, %s99, [#allocation11], 64, 64, 4
    $region45: #{bert_classifier_forward.1} parent=1 // pred_fallthru
      _
    // Predicated region
    $region46: #{bert_classifier_forward.1} parent=1 // pred_check
      _
    $region47: #{bert_classifier_forward.1} parent=1 // pred_check_branch
      %106 = sbr.rel (0) target = $region49
    $region48: #{bert_classifier_forward.1} parent=1 // pred_region
      %s108 = ssub.s32 1024, 1024
      %109 = vsyncadd [#allocation11], %s108
      %s110 = sshll.u32 [#allocation12], 4
      %s111 = int_to_ptr.vmem [resolvable:$true] %s110
      %116 = dma.hbm_to_vmem [thread:$0]  %s11, 1024, %s111, [#allocation11], 64, 64, 4
    $region49: #{bert_classifier_forward.1} parent=1 // pred_fallthru
      _
    // Predicated region
    $region50: #{bert_classifier_forward.1} parent=1 // pred_check
      _
    $region51: #{bert_classifier_forward.1} parent=1 // pred_check_branch
      %118 = sbr.rel (0) target = $region53
    $region52: #{bert_classifier_forward.1} parent=1 // pred_region
      %s120 = ssub.s32 1024, 1024
      %121 = vsyncadd [#allocation14], %s120
      %s122 = sshll.u32 [#allocation13], 4
      %s123 = int_to_ptr.vmem [resolvable:$true] %s122
      %128 = dma.hbm_to_vmem [thread:$0]  %s12, 1024, %s123, [#allocation14], 64, 64, 4
    $region53: #{bert_classifier_forward.1} parent=1 // pred_fallthru
      _
    // Predicated region
    $region54: #{bert_classifier_forward.1} parent=1 // pred_check
      _
    $region55: #{bert_classifier_forward.1} parent=1 // pred_check_branch
      %130 = sbr.rel (0) target = $region57
    $region56: #{bert_classifier_forward.1} parent=1 // pred_region
      %131 = dma.done [#allocation3], 1024
    $region57: #{bert_classifier_forward.1} parent=1 // pred_fallthru
      _
    // Predicated region
    $region58: #{bert_classifier_forward.1} parent=1 // pred_check
      _
    $region59: #{bert_classifier_forward.1} parent=1 // pred_check_branch
      %133 = sbr.rel (0) target = $region61
    $region60: #{bert_classifier_forward.1} parent=1 // pred_region
      %134 = dma.done [#allocation5], 512
    $region61: #{bert_classifier_forward.1} parent=1 // pred_fallthru
      _
    // Predicated region
    $region62: #{bert_classifier_forward.1} parent=1 // pred_check
      _
    $region63: #{bert_classifier_forward.1} parent=1 // pred_check_branch
      %136 = sbr.rel (0) target = $region65
    $region64: #{bert_classifier_forward.1} parent=1 // pred_region
      %137 = dma.done [#allocation5], 6144
    $region65: #{bert_classifier_forward.1} parent=1 // pred_fallthru
      _
    // Predicated region
    $region66: #{bert_classifier_forward.1} parent=1 // pred_check
      _
    $region67: #{bert_classifier_forward.1} parent=1 // pred_check_branch
      %139 = sbr.rel (0) target = $region69
    $region68: #{bert_classifier_forward.1} parent=1 // pred_region
      %140 = dma.done [#allocation8], 2048
    $region69: #{bert_classifier_forward.1} parent=1 // pred_fallthru
      _
    // Predicated region
    $region70: #{bert_classifier_forward.1} parent=1 // pred_check
      _
    $region71: #{bert_classifier_forward.1} parent=1 // pred_check_branch
      %142 = sbr.rel (0) target = $region73
    $region72: #{bert_classifier_forward.1} parent=1 // pred_region
      %143 = dma.done [#allocation8], 4096
    $region73: #{bert_classifier_forward.1} parent=1 // pred_fallthru
      _
    // Predicated region
    $region74: #{bert_classifier_forward.1} parent=1 // pred_check
      _
    $region75: #{bert_classifier_forward.1} parent=1 // pred_check_branch
      %145 = sbr.rel (0) target = $region77
    $region76: #{bert_classifier_forward.1} parent=1 // pred_region
      %146 = dma.done [#allocation11], 4096
    $region77: #{bert_classifier_forward.1} parent=1 // pred_fallthru
      _
    // Predicated region
    $region78: #{bert_classifier_forward.1} parent=1 // pred_check
      _
    $region79: #{bert_classifier_forward.1} parent=1 // pred_check_branch
      %148 = sbr.rel (0) target = $region81
    $region80: #{bert_classifier_forward.1} parent=1 // pred_region
      %149 = dma.done [#allocation11], 1024
    $region81: #{bert_classifier_forward.1} parent=1 // pred_fallthru
      _
    // Predicated region
    $region82: #{bert_classifier_forward.1} parent=1 // pred_check
      _
    $region83: #{bert_classifier_forward.1} parent=1 // pred_check_branch
      %151 = sbr.rel (0) target = $region85
    $region84: #{bert_classifier_forward.1} parent=1 // pred_region
      %152 = dma.done [#allocation14], 1024
    $region85: #{bert_classifier_forward.1} parent=1 // pred_fallthru
      _
    %v154 = vld [vmem:[%s6] sm:$0xff]
    %v155 = vld [vmem:[%s6 + $0x8] sm:$0xff]
    %v156 = vld [vmem:[%s6 + $0x10] sm:$0xff]
    %v157 = vld [vmem:[%s6 + $0x18] sm:$0xff]
    %v158 = vld [vmem:[%s6 + $0x20] sm:$0xff]
    %v159 = vld [vmem:[%s6 + $0x28] sm:$0xff]
    %v160 = vld [vmem:[%s6 + $0x30] sm:$0xf]
    %v161 = vld [vmem:[%s0] sm:$0xff]
    %v162 = vld [vmem:[%s0 + $0x8] sm:$0xff]
    %v163 = vld [vmem:[%s0 + $0x10] sm:$0xff]
    %v164 = vld [vmem:[%s0 + $0x18] sm:$0xff]
    %v165 = vlaneseq
    %v166 = vand.u32 %v165, 127
    %167 = vset.pattern.permute.xlu0 0
    %168 = vperm.xlu0 %167, %v161
    %v169 = vpop.permute.xlu0 %168
    %170 = vset.pattern.permute.xlu0 0
    %171 = vperm.xlu0 %170, %v162
    %v172 = vpop.permute.xlu0 %171
    %173 = vset.pattern.permute.xlu0 0
    %174 = vperm.xlu0 %173, %v163
    %v175 = vpop.permute.xlu0 %174
    %176 = vset.pattern.permute.xlu0 0
    %177 = vperm.xlu0 %176, %v164
    %v178 = vpop.permute.xlu0 %177
    %vm179 = vcmp.eq.s32.totalorder %v169, %v166
    %vm180 = vcmp.eq.s32.totalorder %v172, %v166
    %vm181 = vcmp.eq.s32.totalorder %v175, %v166
    %vm182 = vcmp.eq.s32.totalorder %v178, %v166
    %v183 = vsel %vm179, 1.0, 0.0
    %v184 = vsel %vm180, 1.0, 0.0
    %v185 = vsel %vm181, 1.0, 0.0
    %v186 = vsel %vm182, 1.0, 0.0
    %v187 = vld [vmem:[#allocation2] sm:$0xff]
    %v188 = vld [vmem:[#allocation2 + $0x8] sm:$0xff]
    %v189 = vld [vmem:[#allocation2 + $0x10] sm:$0xff]
    %v190 = vld [vmem:[#allocation2 + $0x18] sm:$0xff]
    %v191 = vld [vmem:[#allocation2 + $0x20] sm:$0xff]
    %v192 = vld [vmem:[#allocation2 + $0x28] sm:$0xff]
    %v193 = vld [vmem:[#allocation2 + $0x30] sm:$0xff]
    %v194 = vld [vmem:[#allocation2 + $0x38] sm:$0xff]
    %v195 = vld [vmem:[#allocation4] sm:$0xff]
    %v196 = vld [vmem:[#allocation4 + $0x8] sm:$0xff]
    %vm197 = vcmask 523264
    %v199 = vsel %vm197, %v183, 0
    %v202 = vsel %vm197, %v184, 0
    %v205 = vsel %vm197, %v185, 0
    %v208 = vsel %vm197, %v186, 0
    %210 = vmatprep.subr.mxu0 0.0
    %211 = vmatpush1.msra.mxu0 0.0
    %212 = vmatprep.subr.mxu0 0.0
    %213 = vmatpush1.msra.mxu0 0.0
    %214 = vmatprep.subr.mxu0 0.0
    %215 = vmatpush1.msra.mxu0 0.0
    %216 = vmatprep.subr.mxu0 0.0
    %217 = vmatpush1.msra.mxu0 0.0
    %218 = vmatprep.subr.mxu0 0.0
    %219 = vmatpush1.msra.mxu0 0.0
    %220 = vmatprep.subr.mxu0 0.0
    %221 = vmatpush1.msra.mxu0 0.0
    %222 = vmatprep.subr.mxu0 0.0
    %223 = vmatpush1.msra.mxu0 0.0
    %224 = vmatprep.subr.mxu0 0.0
    %225 = vmatpush1.msra.mxu0 0.0
    %226 = vmatprep.subr.mxu0 0.0
    %227 = vmatpush1.msra.mxu0 %v194
    %228 = vmatprep.subr.mxu0 0.0
    %229 = vmatpush1.msra.mxu0 %v193
    %230 = vmatprep.subr.mxu0 0.0
    %231 = vmatpush1.msra.mxu0 %v192
    %232 = vmatprep.subr.mxu0 0.0
    %233 = vmatpush1.msra.mxu0 %v191
    %234 = vmatprep.subr.mxu0 0.0
    %235 = vmatpush1.msra.mxu0 %v190
    %236 = vmatprep.subr.mxu0 0.0
    %237 = vmatpush1.msra.mxu0 %v189
    %238 = vmatprep.subr.mxu0 0.0
    %239 = vmatpush1.msra.mxu0 %v188
    %240 = vmatprep.subr.mxu0 0.0
    %241 = vmatpush1.msra.mxu0 %v187
    %242 = vmatprep.subr.mxu0 0.0
    %243 = vmatpush2.msra.mxu0 0.0
    %244 = vmatprep.subr.mxu0 0.0
    %245 = vmatpush2.msra.mxu0 0.0
    %246 = vmatprep.subr.mxu0 0.0
    %247 = vmatpush2.msra.mxu0 0.0
    %248 = vmatprep.subr.mxu0 0.0
    %249 = vmatpush2.msra.mxu0 0.0
    %250 = vmatprep.subr.mxu0 0.0
    %251 = vmatpush2.msra.mxu0 0.0
    %252 = vmatprep.subr.mxu0 0.0
    %253 = vmatpush2.msra.mxu0 0.0
    %254 = vmatprep.subr.mxu0 0.0
    %255 = vmatpush2.msra.mxu0 0.0
    %256 = vmatprep.subr.mxu0 0.0
    %257 = vmatpush2.msra.mxu0 0.0
    %258 = vmatprep.subr.mxu0 0.0
    %259 = vmatpush2.msra.mxu0 0.0
    %260 = vmatprep.subr.mxu0 0.0
    %261 = vmatpush2.msra.mxu0 0.0
    %262 = vmatprep.subr.mxu0 0.0
    %263 = vmatpush2.msra.mxu0 0.0
    %264 = vmatprep.subr.mxu0 0.0
    %265 = vmatpush2.msra.mxu0 0.0
    %266 = vmatprep.subr.mxu0 0.0
    %267 = vmatpush2.msra.mxu0 0.0
    %268 = vmatprep.subr.mxu0 0.0
    %269 = vmatpush2.msra.mxu0 0.0
    %270 = vmatprep.subr.mxu0 0.0
    %271 = vmatpush2.msra.mxu0 0.0
    %272 = vmatprep.subr.mxu0 0.0
    %273 = vmatpush2.msra.mxu0 0.0
    %274 = vmatprep.mubr.f32.mxu0 0.0
    %275 = vmatmul.mubr.f32.gmra.mxu0 %v199
    %v276 = vpop.f32.mrf.mxu0
    %v277 = vadd.f32 %v195, %v276
    %v278 = vpop.f32.mrf.mxu0
    %279 = vmatprep.mubr.f32.mxu0 0.0
    %280 = vmatmul.mubr.f32.gmra.mxu0 %v202
    %v281 = vpop.f32.mrf.mxu0
    %v282 = vadd.f32 %v196, %v281
    %v283 = vpop.f32.mrf.mxu0
    %284 = vmatprep.mubr.f32.mxu0 0.0
    %285 = vmatmul.mubr.f32.gmra.mxu0 %v205
    %v286 = vpop.f32.mrf.mxu0
    %v287 = vadd.f32 %v195, %v286
    %v288 = vpop.f32.mrf.mxu0
    %289 = vmatprep.mubr.f32.mxu0 0.0
    %290 = vmatmul.mubr.f32.gmra.mxu0 %v208
    %v291 = vpop.f32.mrf.mxu0
    %v292 = vadd.f32 %v196, %v291
    %v293 = vpop.f32.mrf.mxu0
    %294 = vdwg.mxu0
    %v295 = vld [vmem:[%s5] sm:$0x1]
    %v296 = vlaneseq
    %v297 = vshrl.u32 %v296, 7
    %v298 = vsub.s32 0, %v297
    %v299 = vrot.slane %v295, %v298
    %v300 = vadd.f32 %v277, %v299
    %v301 = vadd.f32 %v282, %v299
    %v302 = vadd.f32 %v287, %v299
    %v303 = vadd.f32 %v292, %v299
    %304 = vadd.xlane.f32.xlu0 %v300
    %v305 = vpop.xlane.xlu0 %304
    %306 = vadd.xlane.f32.xlu0 %v301
    %v307 = vpop.xlane.xlu0 %306
    %308 = vadd.xlane.f32.xlu0 %v302
    %v309 = vpop.xlane.xlu0 %308
    %310 = vadd.xlane.f32.xlu0 %v303
    %v311 = vpop.xlane.xlu0 %310
    %v312 = vrcp.pop 128.0
    %v313 = vmul.f32 %v305, %v312
    %v314 = vmul.f32 %v307, %v312
    %v315 = vmul.f32 %v309, %v312
    %v316 = vmul.f32 %v311, %v312
    %v317 = vsub.f32 %v300, %v313
    %v318 = vsub.f32 %v301, %v314
    %v319 = vsub.f32 %v302, %v315
    %v320 = vsub.f32 %v303, %v316
    %v321 = vmul.f32 %v317, %v317
    %v322 = vmul.f32 %v318, %v318
    %v323 = vmul.f32 %v319, %v319
    %v324 = vmul.f32 %v320, %v320
    %325 = vadd.xlane.f32.xlu0 %v321
    %v326 = vpop.xlane.xlu0 %325
    %327 = vadd.xlane.f32.xlu0 %v322
    %v328 = vpop.xlane.xlu0 %327
    %329 = vadd.xlane.f32.xlu0 %v323
    %v330 = vpop.xlane.xlu0 %329
    %331 = vadd.xlane.f32.xlu0 %v324
    %v332 = vpop.xlane.xlu0 %331
    %v333 = vmul.f32 %v326, %v312
    %v334 = vmul.f32 %v328, %v312
    %v335 = vmul.f32 %v330, %v312
    %v336 = vmul.f32 %v332, %v312
    %v337 = vadd.f32 %v333, 1e-12
    %v338 = vadd.f32 %v334, 1e-12
    %v339 = vadd.f32 %v335, 1e-12
    %v340 = vadd.f32 %v336, 1e-12
    %v341 = vrsqrt.pop %v337
    %v342 = vrsqrt.pop %v338
    %v343 = vrsqrt.pop %v339
    %v344 = vrsqrt.pop %v340
    %v345 = vmul.f32 %v317, %v341
    %v346 = vmul.f32 %v318, %v342
    %v347 = vmul.f32 %v319, %v343
    %v348 = vmul.f32 %v320, %v344
    %v349 = vlaneseq
    %v350 = vshrl.u32 %v349, 7
    %v351 = vsub.s32 0, %v350
    %v352 = vrot.slane %v154, %v351
    %v353 = vmul.f32 %v345, %v352
    %v354 = vmul.f32 %v346, %v352
    %v355 = vmul.f32 %v347, %v352
    %v356 = vmul.f32 %v348, %v352
    %v357 = vlaneseq
    %v358 = vshrl.u32 %v357, 7
    %v359 = vsub.s32 1, %v358
    %v360 = vrot.slane %v154, %v359
    %v361 = vadd.f32 %v353, %v360
    %v362 = vadd.f32 %v354, %v360
    %v363 = vadd.f32 %v355, %v360
    %v364 = vadd.f32 %v356, %v360
    %v365 = vld [vmem:[%s1] sm:$0xff]
    %v366 = vld [vmem:[%s1 + $0x8] sm:$0xff]
    %v367 = vld [vmem:[%s1 + $0x10] sm:$0xff]
    %v368 = vld [vmem:[%s1 + $0x18] sm:$0xff]
    %v369 = vld [vmem:[%s2] sm:$0x1]
    %371 = vset.pattern.permute.xlu0 0
    %372 = vperm.xlu0 %371, %v365
    %v373 = vpop.permute.xlu0 %372
    %376 = vset.pattern.permute.xlu0 0
    %377 = vperm.xlu0 %376, %v366
    %v378 = vpop.permute.xlu0 %377
    %381 = vset.pattern.permute.xlu0 0
    %382 = vperm.xlu0 %381, %v367
    %v383 = vpop.permute.xlu0 %382
    %386 = vset.pattern.permute.xlu0 0
    %387 = vperm.xlu0 %386, %v368
    %v388 = vpop.permute.xlu0 %387
    %v391 = vlaneseq
    %v392 = vshrl.u32 %v391, 7
    %v393 = vsub.s32 0, %v392
    %v394 = vrot.slane %v369, %v393
    %vm396 = vcmp.eq.f32.partialorder %v373, %v394
    %vm397 = vcmp.eq.f32.partialorder %v378, %v394
    %vm398 = vcmp.eq.f32.partialorder %v383, %v394
    %vm399 = vcmp.eq.f32.partialorder %v388, %v394
    %v400 = vsel %vm396, 0.0, -1e+09
    %v401 = vsel %vm397, 0.0, -1e+09
    %v402 = vsel %vm398, 0.0, -1e+09
    %v403 = vsel %vm399, 0.0, -1e+09
    %v404 = vld [vmem:[#allocation6] sm:$0xff]
    %v405 = vld [vmem:[#allocation6 + $0x8] sm:$0xf]
    %v406 = vld [vmem:[#allocation6 + $0xc] sm:$0xff]
    %v407 = vld [vmem:[#allocation6 + $0x14] sm:$0xf]
    %v408 = vld [vmem:[#allocation6 + $0x18] sm:$0xff]
    %v409 = vld [vmem:[#allocation6 + $0x20] sm:$0xf]
    %v410 = vld [vmem:[#allocation6 + $0x24] sm:$0xff]
    %v411 = vld [vmem:[#allocation6 + $0x2c] sm:$0xf]
    %v412 = vld [vmem:[#allocation6 + $0x30] sm:$0xff]
    %v413 = vld [vmem:[#allocation6 + $0x38] sm:$0xf]
    %v414 = vld [vmem:[#allocation6 + $0x3c] sm:$0xff]
    %v415 = vld [vmem:[#allocation6 + $0x44] sm:$0xf]
    %v416 = vld [vmem:[#allocation6 + $0x48] sm:$0xff]
    %v417 = vld [vmem:[#allocation6 + $0x50] sm:$0xf]
    %v418 = vld [vmem:[#allocation6 + $0x54] sm:$0xff]
    %v419 = vld [vmem:[#allocation6 + $0x5c] sm:$0xf]
    %v420 = vld [vmem:[#allocation6 + $0x60] sm:$0xff]
    %v421 = vld [vmem:[#allocation6 + $0x68] sm:$0xf]
    %v422 = vld [vmem:[#allocation6 + $0x6c] sm:$0xff]
    %v423 = vld [vmem:[#allocation6 + $0x74] sm:$0xf]
    %v424 = vld [vmem:[#allocation6 + $0x78] sm:$0xff]
    %v425 = vld [vmem:[#allocation6 + $0x80] sm:$0xf]
    %v426 = vld [vmem:[#allocation6 + $0x84] sm:$0xff]
    %v427 = vld [vmem:[#allocation6 + $0x8c] sm:$0xf]
    %v428 = vld [vmem:[#allocation6 + $0x90] sm:$0xff]
    %v429 = vld [vmem:[#allocation6 + $0x98] sm:$0xf]
    %v430 = vld [vmem:[#allocation6 + $0x9c] sm:$0xff]
    %v431 = vld [vmem:[#allocation6 + $0xa4] sm:$0xf]
    %v432 = vld [vmem:[#allocation6 + $0xa8] sm:$0xff]
    %v433 = vld [vmem:[#allocation6 + $0xb0] sm:$0xf]
    %v434 = vld [vmem:[#allocation6 + $0xb4] sm:$0xff]
    %v435 = vld [vmem:[#allocation6 + $0xbc] sm:$0xf]
    %v436 = vpack.c.bf16 %v362, %v361
    %v437 = vpack.c.bf16 %v364, %v363
    %v438 = vlaneseq
    %v439 = vshrl.u32 %v438, 7
    %v440 = vsub.s32 2, %v439
    %v441 = vrot.slane %v154, %v440
    %v442 = vlaneseq
    %v443 = vshrl.u32 %v442, 7
    %v444 = vsub.s32 2, %v443
    %v445 = vrot.slane %v155, %v444
    %v446 = vlaneseq
    %v447 = vshrl.u32 %v446, 7
    %v448 = vsub.s32 2, %v447
    %v449 = vrot.slane %v156, %v448
    %v482 = vunpack.c.l.b16 %v404
    %v483 = vunpack.c.h.b16 %v404
    %v484 = vunpack.c.l.b16 %v405
    %v485 = vunpack.c.l.b16 %v406
    %v486 = vunpack.c.h.b16 %v406
    %v487 = vunpack.c.l.b16 %v407
    %v488 = vunpack.c.l.b16 %v408
    %v489 = vunpack.c.h.b16 %v408
    %v490 = vunpack.c.l.b16 %v409
    %v491 = vunpack.c.l.b16 %v410
    %v492 = vunpack.c.h.b16 %v410
    %v493 = vunpack.c.l.b16 %v411
    %v494 = vunpack.c.l.b16 %v412
    %v495 = vunpack.c.h.b16 %v412
    %v496 = vunpack.c.l.b16 %v413
    %v497 = vunpack.c.l.b16 %v414
    %v498 = vunpack.c.h.b16 %v414
    %v499 = vunpack.c.l.b16 %v415
    %v500 = vunpack.c.l.b16 %v416
    %v501 = vunpack.c.h.b16 %v416
    %v502 = vunpack.c.l.b16 %v417
    %v503 = vunpack.c.l.b16 %v418
    %v504 = vunpack.c.h.b16 %v418
    %v505 = vunpack.c.l.b16 %v419
    %v506 = vunpack.c.l.b16 %v420
    %v507 = vunpack.c.h.b16 %v420
    %v508 = vunpack.c.l.b16 %v421
    %v509 = vunpack.c.l.b16 %v422
    %v510 = vunpack.c.h.b16 %v422
    %v511 = vunpack.c.l.b16 %v423
    %v512 = vunpack.c.l.b16 %v424
    %v513 = vunpack.c.h.b16 %v424
    %v514 = vunpack.c.l.b16 %v425
    %v515 = vunpack.c.l.b16 %v426
    %v516 = vunpack.c.h.b16 %v426
    %v517 = vunpack.c.l.b16 %v427
    %v518 = vunpack.c.l.b16 %v428
    %v519 = vunpack.c.h.b16 %v428
    %v520 = vunpack.c.l.b16 %v429
    %v521 = vunpack.c.l.b16 %v430
    %v522 = vunpack.c.h.b16 %v430
    %v523 = vunpack.c.l.b16 %v431
    %v524 = vunpack.c.l.b16 %v432
    %v525 = vunpack.c.h.b16 %v432
    %v526 = vunpack.c.l.b16 %v433
    %v527 = vunpack.c.l.b16 %v434
    %v528 = vunpack.c.h.b16 %v434
    %v529 = vunpack.c.l.b16 %v435
    %v530 = vpack.c.b16 %v485, %v482
    %v531 = vpack.c.b16 %v486, %v483
    %v532 = vpack.c.b16 %v487, %v484
    %v533 = vpack.c.b16 %v491, %v488
    %v534 = vpack.c.b16 %v492, %v489
    %v535 = vpack.c.b16 %v493, %v490
    %v536 = vpack.c.b16 %v497, %v494
    %v537 = vpack.c.b16 %v498, %v495
    %v538 = vpack.c.b16 %v499, %v496
    %v539 = vpack.c.b16 %v503, %v500
    %v540 = vpack.c.b16 %v504, %v501
    %v541 = vpack.c.b16 %v505, %v502
    %v542 = vpack.c.b16 %v509, %v506
    %v543 = vpack.c.b16 %v510, %v507
    %v544 = vpack.c.b16 %v511, %v508
    %v545 = vpack.c.b16 %v515, %v512
    %v546 = vpack.c.b16 %v516, %v513
    %v547 = vpack.c.b16 %v517, %v514
    %v548 = vpack.c.b16 %v521, %v518
    %v549 = vpack.c.b16 %v522, %v519
    %v550 = vpack.c.b16 %v523, %v520
    %v551 = vpack.c.b16 %v527, %v524
    %v552 = vpack.c.b16 %v528, %v525
    %v553 = vpack.c.b16 %v529, %v526
    %578 = vmatprep.subr.bf16.mxu0 %v552
    %579 = vmatpush1.bf16.msra.mxu0 %v551
    %580 = vmatprep.subr.bf16.mxu0 %v549
    %581 = vmatpush1.bf16.msra.mxu0 %v548
    %582 = vmatprep.subr.bf16.mxu0 %v546
    %583 = vmatpush1.bf16.msra.mxu0 %v545
    %584 = vmatprep.subr.bf16.mxu0 %v543
    %585 = vmatpush1.bf16.msra.mxu0 %v542
    %586 = vmatprep.subr.bf16.mxu0 %v540
    %587 = vmatpush1.bf16.msra.mxu0 %v539
    %588 = vmatprep.subr.bf16.mxu0 %v537
    %589 = vmatpush1.bf16.msra.mxu0 %v536
    %590 = vmatprep.subr.bf16.mxu0 %v534
    %591 = vmatpush1.bf16.msra.mxu0 %v533
    %592 = vmatprep.subr.bf16.mxu0 %v531
    %593 = vmatpush1.bf16.msra.mxu0 %v530
    %594 = vmatprep.subr.bf16.mxu0 0
    %595 = vmatpush2.bf16.msra.mxu0 0
    %596 = vmatprep.subr.bf16.mxu0 0
    %597 = vmatpush2.bf16.msra.mxu0 0
    %598 = vmatprep.subr.bf16.mxu0 0
    %599 = vmatpush2.bf16.msra.mxu0 0
    %600 = vmatprep.subr.bf16.mxu0 0
    %601 = vmatpush2.bf16.msra.mxu0 0
    %602 = vmatprep.subr.bf16.mxu0 0
    %603 = vmatpush2.bf16.msra.mxu0 0
    %604 = vmatprep.subr.bf16.mxu0 0
    %605 = vmatpush2.bf16.msra.mxu0 0
    %606 = vmatprep.subr.bf16.mxu0 0
    %607 = vmatpush2.bf16.msra.mxu0 0
    %608 = vmatprep.subr.bf16.mxu0 0
    %609 = vmatpush2.bf16.msra.mxu0 0
    %610 = vmatprep.mubr.bf16.mxu0 0
    %611 = vmatmul.mubr.bf16.gmra.mxu0 %v436
    %v612 = vpop.f32.mrf.mxu0
    %v613 = vadd.f32 %v441, %v612
    %v614 = vpop.f32.mrf.mxu0
    %v615 = vadd.f32 %v445, %v614
    %v616 = vpop.f32.mrf.mxu0
    %v617 = vadd.f32 %v441, %v616
    %v618 = vpop.f32.mrf.mxu0
    %v619 = vadd.f32 %v445, %v618
    %620 = vmatprep.mubr.bf16.mxu0 0
    %621 = vmatmul.mubr.bf16.gmra.mxu0 %v437
    %v622 = vpop.f32.mrf.mxu0
    %v623 = vadd.f32 %v441, %v622
    %v624 = vpop.f32.mrf.mxu0
    %v625 = vadd.f32 %v445, %v624
    %v626 = vpop.f32.mrf.mxu0
    %v627 = vadd.f32 %v441, %v626
    %v628 = vpop.f32.mrf.mxu0
    %v629 = vadd.f32 %v445, %v628
    %630 = vdwg.mxu0
    %631 = vmatprep.subr.bf16.mxu0 0
    %632 = vmatpush1.bf16.msra.mxu0 %v553
    %633 = vmatprep.subr.bf16.mxu0 0
    %634 = vmatpush1.bf16.msra.mxu0 %v550
    %635 = vmatprep.subr.bf16.mxu0 0
    %636 = vmatpush1.bf16.msra.mxu0 %v547
    %637 = vmatprep.subr.bf16.mxu0 0
    %638 = vmatpush1.bf16.msra.mxu0 %v544
    %639 = vmatprep.subr.bf16.mxu0 0
    %640 = vmatpush1.bf16.msra.mxu0 %v541
    %641 = vmatprep.subr.bf16.mxu0 0
    %642 = vmatpush1.bf16.msra.mxu0 %v538
    %643 = vmatprep.subr.bf16.mxu0 0
    %644 = vmatpush1.bf16.msra.mxu0 %v535
    %645 = vmatprep.subr.bf16.mxu0 0
    %646 = vmatpush1.bf16.msra.mxu0 %v532
    %647 = vmatprep.subr.bf16.mxu0 0
    %648 = vmatpush2.bf16.msra.mxu0 0
    %649 = vmatprep.subr.bf16.mxu0 0
    %650 = vmatpush2.bf16.msra.mxu0 0
    %651 = vmatprep.subr.bf16.mxu0 0
    %652 = vmatpush2.bf16.msra.mxu0 0
    %653 = vmatprep.subr.bf16.mxu0 0
    %654 = vmatpush2.bf16.msra.mxu0 0
    %655 = vmatprep.subr.bf16.mxu0 0
    %656 = vmatpush2.bf16.msra.mxu0 0
    %657 = vmatprep.subr.bf16.mxu0 0
    %658 = vmatpush2.bf16.msra.mxu0 0
    %659 = vmatprep.subr.bf16.mxu0 0
    %660 = vmatpush2.bf16.msra.mxu0 0
    %661 = vmatprep.subr.bf16.mxu0 0
    %662 = vmatpush2.bf16.msra.mxu0 0
    %663 = vmatprep.mubr.bf16.mxu0 0
    %664 = vmatmul.mubr.bf16.gmra.mxu0 %v436
    %v665 = vpop.f32.mrf.mxu0
    %v666 = vadd.f32 %v449, %v665
    %v667 = vpop.f32.mrf.mxu0
    %v668 = vpop.f32.mrf.mxu0
    %v669 = vadd.f32 %v449, %v668
    %v670 = vpop.f32.mrf.mxu0
    %671 = vmatprep.mubr.bf16.mxu0 0
    %672 = vmatmul.mubr.bf16.gmra.mxu0 %v437
    %v673 = vpop.f32.mrf.mxu0
    %v674 = vadd.f32 %v449, %v673
    %v675 = vpop.f32.mrf.mxu0
    %v676 = vpop.f32.mrf.mxu0
    %v677 = vadd.f32 %v449, %v676
    %v678 = vpop.f32.mrf.mxu0
    %679 = vdwg.mxu0
    %680 = vxpose.xlu0.b32.start [1/16] %v613, 128
    %681 = vxpose.xlu0.b32.cont [2/16] %v617, 128
    %682 = vxpose.xlu0.b32.cont [3/16] %v623, 128
    %683 = vxpose.xlu0.b32.cont [4/16] %v627, 128
    %684 = vxpose.xlu0.b32.cont [5/16] 0.0, 128
    %685 = vxpose.xlu0.b32.cont [6/16] 0.0, 128
    %686 = vxpose.xlu0.b32.cont [7/16] 0.0, 128
    %687 = vxpose.xlu0.b32.cont [8/16] 0.0, 128
    %688 = vxpose.xlu0.b32.cont [9/16] 0.0, 128
    %689 = vxpose.xlu0.b32.cont [10/16] 0.0, 128
    %690 = vxpose.xlu0.b32.cont [11/16] 0.0, 128
    %691 = vxpose.xlu0.b32.cont [12/16] 0.0, 128
    %692 = vxpose.xlu0.b32.cont [13/16] 0.0, 128
    %693 = vxpose.xlu0.b32.cont [14/16] 0.0, 128
    %694 = vxpose.xlu0.b32.cont [15/16] 0.0, 128
    %695 = vxpose.xlu0.b32.end [16/16] 0.0, 128
    %v696 = vpop.trf.xlu0
    %v697 = vpop.trf.xlu0
    %v698 = vpop.trf.xlu0
    %v699 = vpop.trf.xlu0
    %v700 = vpop.trf.xlu0
    %v701 = vpop.trf.xlu0
    %v702 = vpop.trf.xlu0
    %v703 = vpop.trf.xlu0
    %v704 = vpop.trf.xlu0
    %v705 = vpop.trf.xlu0
    %v706 = vpop.trf.xlu0
    %v707 = vpop.trf.xlu0
    %v708 = vpop.trf.xlu0
    %v709 = vpop.trf.xlu0
    %v710 = vpop.trf.xlu0
    %v711 = vpop.trf.xlu0
    %712 = vxpose.xlu0.b32.start [1/16] %v615, 128
    %713 = vxpose.xlu0.b32.cont [2/16] %v619, 128
    %714 = vxpose.xlu0.b32.cont [3/16] %v625, 128
    %715 = vxpose.xlu0.b32.cont [4/16] %v629, 128
    %716 = vxpose.xlu0.b32.cont [5/16] 0.0, 128
    %717 = vxpose.xlu0.b32.cont [6/16] 0.0, 128
    %718 = vxpose.xlu0.b32.cont [7/16] 0.0, 128
    %719 = vxpose.xlu0.b32.cont [8/16] 0.0, 128
    %720 = vxpose.xlu0.b32.cont [9/16] 0.0, 128
    %721 = vxpose.xlu0.b32.cont [10/16] 0.0, 128
    %722 = vxpose.xlu0.b32.cont [11/16] 0.0, 128
    %723 = vxpose.xlu0.b32.cont [12/16] 0.0, 128
    %724 = vxpose.xlu0.b32.cont [13/16] 0.0, 128
    %725 = vxpose.xlu0.b32.cont [14/16] 0.0, 128
    %726 = vxpose.xlu0.b32.cont [15/16] 0.0, 128
    %727 = vxpose.xlu0.b32.end [16/16] 0.0, 128
    %v728 = vpop.trf.xlu0
    %v729 = vpop.trf.xlu0
    %v730 = vpop.trf.xlu0
    %v731 = vpop.trf.xlu0
    %v732 = vpop.trf.xlu0
    %v733 = vpop.trf.xlu0
    %v734 = vpop.trf.xlu0
    %v735 = vpop.trf.xlu0
    %v736 = vpop.trf.xlu0
    %v737 = vpop.trf.xlu0
    %v738 = vpop.trf.xlu0
    %v739 = vpop.trf.xlu0
    %v740 = vpop.trf.xlu0
    %v741 = vpop.trf.xlu0
    %v742 = vpop.trf.xlu0
    %v743 = vpop.trf.xlu0
    %744 = vxpose.xlu0.b32.start [1/16] %v666, 128
    %745 = vxpose.xlu0.b32.cont [2/16] %v669, 128
    %746 = vxpose.xlu0.b32.cont [3/16] %v674, 128
    %747 = vxpose.xlu0.b32.cont [4/16] %v677, 128
    %748 = vxpose.xlu0.b32.cont [5/16] 0.0, 128
    %749 = vxpose.xlu0.b32.cont [6/16] 0.0, 128
    %750 = vxpose.xlu0.b32.cont [7/16] 0.0, 128
    %751 = vxpose.xlu0.b32.cont [8/16] 0.0, 128
    %752 = vxpose.xlu0.b32.cont [9/16] 0.0, 128
    %753 = vxpose.xlu0.b32.cont [10/16] 0.0, 128
    %754 = vxpose.xlu0.b32.cont [11/16] 0.0, 128
    %755 = vxpose.xlu0.b32.cont [12/16] 0.0, 128
    %756 = vxpose.xlu0.b32.cont [13/16] 0.0, 128
    %757 = vxpose.xlu0.b32.cont [14/16] 0.0, 128
    %758 = vxpose.xlu0.b32.cont [15/16] 0.0, 128
    %759 = vxpose.xlu0.b32.end [16/16] 0.0, 128
    %v760 = vpop.trf.xlu0
    %v761 = vpop.trf.xlu0
    %v762 = vpop.trf.xlu0
    %v763 = vpop.trf.xlu0
    %v764 = vpop.trf.xlu0
    %v765 = vpop.trf.xlu0
    %v766 = vpop.trf.xlu0
    %v767 = vpop.trf.xlu0
    %v768 = vpop.trf.xlu0
    %v769 = vpop.trf.xlu0
    %v770 = vpop.trf.xlu0
    %v771 = vpop.trf.xlu0
    %v772 = vpop.trf.xlu0
    %v773 = vpop.trf.xlu0
    %v774 = vpop.trf.xlu0
    %v775 = vpop.trf.xlu0
    %776 = vxpose.xlu0.b32.start [1/16] %v696, 128
    %777 = vxpose.xlu0.b32.cont [2/16] %v697, 128
    %778 = vxpose.xlu0.b32.cont [3/16] %v698, 128
    %779 = vxpose.xlu0.b32.cont [4/16] %v699, 128
    %780 = vxpose.xlu0.b32.cont [5/16] 0.0, 128
    %781 = vxpose.xlu0.b32.cont [6/16] 0.0, 128
    %782 = vxpose.xlu0.b32.cont [7/16] 0.0, 128
    %783 = vxpose.xlu0.b32.cont [8/16] 0.0, 128
    %784 = vxpose.xlu0.b32.cont [9/16] 0.0, 128
    %785 = vxpose.xlu0.b32.cont [10/16] 0.0, 128
    %786 = vxpose.xlu0.b32.cont [11/16] 0.0, 128
    %787 = vxpose.xlu0.b32.cont [12/16] 0.0, 128
    %788 = vxpose.xlu0.b32.cont [13/16] 0.0, 128
    %789 = vxpose.xlu0.b32.cont [14/16] 0.0, 128
    %790 = vxpose.xlu0.b32.cont [15/16] 0.0, 128
    %791 = vxpose.xlu0.b32.end [16/16] 0.0, 128
    %v792 = vpop.trf.xlu0
    %v793 = vpop.trf.xlu0
    %v794 = vpop.trf.xlu0
    %v795 = vpop.trf.xlu0
    %v796 = vpop.trf.xlu0
    %v797 = vpop.trf.xlu0
    %v798 = vpop.trf.xlu0
    %v799 = vpop.trf.xlu0
    %v800 = vpop.trf.xlu0
    %v801 = vpop.trf.xlu0
    %v802 = vpop.trf.xlu0
    %v803 = vpop.trf.xlu0
    %v804 = vpop.trf.xlu0
    %v805 = vpop.trf.xlu0
    %v806 = vpop.trf.xlu0
    %v807 = vpop.trf.xlu0
    %808 = vxpose.xlu0.b32.start [1/16] %v700, 128
    %809 = vxpose.xlu0.b32.cont [2/16] %v701, 128
    %810 = vxpose.xlu0.b32.cont [3/16] %v702, 128
    %811 = vxpose.xlu0.b32.cont [4/16] %v703, 128
    %812 = vxpose.xlu0.b32.cont [5/16] 0.0, 128
    %813 = vxpose.xlu0.b32.cont [6/16] 0.0, 128
    %814 = vxpose.xlu0.b32.cont [7/16] 0.0, 128
    %815 = vxpose.xlu0.b32.cont [8/16] 0.0, 128
    %816 = vxpose.xlu0.b32.cont [9/16] 0.0, 128
    %817 = vxpose.xlu0.b32.cont [10/16] 0.0, 128
    %818 = vxpose.xlu0.b32.cont [11/16] 0.0, 128
    %819 = vxpose.xlu0.b32.cont [12/16] 0.0, 128
    %820 = vxpose.xlu0.b32.cont [13/16] 0.0, 128
    %821 = vxpose.xlu0.b32.cont [14/16] 0.0, 128
    %822 = vxpose.xlu0.b32.cont [15/16] 0.0, 128
    %823 = vxpose.xlu0.b32.end [16/16] 0.0, 128
    %v824 = vpop.trf.xlu0
    %v825 = vpop.trf.xlu0
    %v826 = vpop.trf.xlu0
    %v827 = vpop.trf.xlu0
    %v828 = vpop.trf.xlu0
    %v829 = vpop.trf.xlu0
    %v830 = vpop.trf.xlu0
    %v831 = vpop.trf.xlu0
    %v832 = vpop.trf.xlu0
    %v833 = vpop.trf.xlu0
    %v834 = vpop.trf.xlu0
    %v835 = vpop.trf.xlu0
    %v836 = vpop.trf.xlu0
    %v837 = vpop.trf.xlu0
    %v838 = vpop.trf.xlu0
    %v839 = vpop.trf.xlu0
    %840 = vxpose.xlu0.b32.start [1/16] %v704, 128
    %841 = vxpose.xlu0.b32.cont [2/16] %v705, 128
    %842 = vxpose.xlu0.b32.cont [3/16] %v706, 128
    %843 = vxpose.xlu0.b32.cont [4/16] %v707, 128
    %844 = vxpose.xlu0.b32.cont [5/16] 0.0, 128
    %845 = vxpose.xlu0.b32.cont [6/16] 0.0, 128
    %846 = vxpose.xlu0.b32.cont [7/16] 0.0, 128
    %847 = vxpose.xlu0.b32.cont [8/16] 0.0, 128
    %848 = vxpose.xlu0.b32.cont [9/16] 0.0, 128
    %849 = vxpose.xlu0.b32.cont [10/16] 0.0, 128
    %850 = vxpose.xlu0.b32.cont [11/16] 0.0, 128
    %851 = vxpose.xlu0.b32.cont [12/16] 0.0, 128
    %852 = vxpose.xlu0.b32.cont [13/16] 0.0, 128
    %853 = vxpose.xlu0.b32.cont [14/16] 0.0, 128
    %854 = vxpose.xlu0.b32.cont [15/16] 0.0, 128
    %855 = vxpose.xlu0.b32.end [16/16] 0.0, 128
    %v856 = vpop.trf.xlu0
    %v857 = vpop.trf.xlu0
    %v858 = vpop.trf.xlu0
    %v859 = vpop.trf.xlu0
    %v860 = vpop.trf.xlu0
    %v861 = vpop.trf.xlu0
    %v862 = vpop.trf.xlu0
    %v863 = vpop.trf.xlu0
    %v864 = vpop.trf.xlu0
    %v865 = vpop.trf.xlu0
    %v866 = vpop.trf.xlu0
    %v867 = vpop.trf.xlu0
    %v868 = vpop.trf.xlu0
    %v869 = vpop.trf.xlu0
    %v870 = vpop.trf.xlu0
    %v871 = vpop.trf.xlu0
    %872 = vxpose.xlu0.b32.start [1/16] %v708, 128
    %873 = vxpose.xlu0.b32.cont [2/16] %v709, 128
    %874 = vxpose.xlu0.b32.cont [3/16] %v710, 128
    %875 = vxpose.xlu0.b32.cont [4/16] %v711, 128
    %876 = vxpose.xlu0.b32.cont [5/16] 0.0, 128
    %877 = vxpose.xlu0.b32.cont [6/16] 0.0, 128
    %878 = vxpose.xlu0.b32.cont [7/16] 0.0, 128
    %879 = vxpose.xlu0.b32.cont [8/16] 0.0, 128
    %880 = vxpose.xlu0.b32.cont [9/16] 0.0, 128
    %881 = vxpose.xlu0.b32.cont [10/16] 0.0, 128
    %882 = vxpose.xlu0.b32.cont [11/16] 0.0, 128
    %883 = vxpose.xlu0.b32.cont [12/16] 0.0, 128
    %884 = vxpose.xlu0.b32.cont [13/16] 0.0, 128
    %885 = vxpose.xlu0.b32.cont [14/16] 0.0, 128
    %886 = vxpose.xlu0.b32.cont [15/16] 0.0, 128
    %887 = vxpose.xlu0.b32.end [16/16] 0.0, 128
    %v888 = vpop.trf.xlu0
    %v889 = vpop.trf.xlu0
    %v890 = vpop.trf.xlu0
    %v891 = vpop.trf.xlu0
    %v892 = vpop.trf.xlu0
    %v893 = vpop.trf.xlu0
    %v894 = vpop.trf.xlu0
    %v895 = vpop.trf.xlu0
    %v896 = vpop.trf.xlu0
    %v897 = vpop.trf.xlu0
    %v898 = vpop.trf.xlu0
    %v899 = vpop.trf.xlu0
    %v900 = vpop.trf.xlu0
    %v901 = vpop.trf.xlu0
    %v902 = vpop.trf.xlu0
    %v903 = vpop.trf.xlu0
    %v904 = vpack.c.bf16 %v793, %v792
    %v905 = vpack.c.bf16 %v795, %v794
    %v906 = vpack.c.bf16 %v825, %v824
    %v907 = vpack.c.bf16 %v827, %v826
    %v908 = vpack.c.bf16 %v857, %v856
    %v909 = vpack.c.bf16 %v859, %v858
    %v910 = vpack.c.bf16 %v889, %v888
    %v911 = vpack.c.bf16 %v891, %v890
    %912 = vxpose.xlu0.b32.start [1/16] %v728, 128
    %913 = vxpose.xlu0.b32.cont [2/16] %v729, 128
    %914 = vxpose.xlu0.b32.cont [3/16] %v730, 128
    %915 = vxpose.xlu0.b32.cont [4/16] %v731, 128
    %916 = vxpose.xlu0.b32.cont [5/16] 0.0, 128
    %917 = vxpose.xlu0.b32.cont [6/16] 0.0, 128
    %918 = vxpose.xlu0.b32.cont [7/16] 0.0, 128
    %919 = vxpose.xlu0.b32.cont [8/16] 0.0, 128
    %920 = vxpose.xlu0.b32.cont [9/16] 0.0, 128
    %921 = vxpose.xlu0.b32.cont [10/16] 0.0, 128
    %922 = vxpose.xlu0.b32.cont [11/16] 0.0, 128
    %923 = vxpose.xlu0.b32.cont [12/16] 0.0, 128
    %924 = vxpose.xlu0.b32.cont [13/16] 0.0, 128
    %925 = vxpose.xlu0.b32.cont [14/16] 0.0, 128
    %926 = vxpose.xlu0.b32.cont [15/16] 0.0, 128
    %927 = vxpose.xlu0.b32.end [16/16] 0.0, 128
    %v928 = vpop.trf.xlu0
    %v929 = vpop.trf.xlu0
    %v930 = vpop.trf.xlu0
    %v931 = vpop.trf.xlu0
    %v932 = vpop.trf.xlu0
    %v933 = vpop.trf.xlu0
    %v934 = vpop.trf.xlu0
    %v935 = vpop.trf.xlu0
    %v936 = vpop.trf.xlu0
    %v937 = vpop.trf.xlu0
    %v938 = vpop.trf.xlu0
    %v939 = vpop.trf.xlu0
    %v940 = vpop.trf.xlu0
    %v941 = vpop.trf.xlu0
    %v942 = vpop.trf.xlu0
    %v943 = vpop.trf.xlu0
    %944 = vxpose.xlu0.b32.start [1/16] %v732, 128
    %945 = vxpose.xlu0.b32.cont [2/16] %v733, 128
    %946 = vxpose.xlu0.b32.cont [3/16] %v734, 128
    %947 = vxpose.xlu0.b32.cont [4/16] %v735, 128
    %948 = vxpose.xlu0.b32.cont [5/16] 0.0, 128
    %949 = vxpose.xlu0.b32.cont [6/16] 0.0, 128
    %950 = vxpose.xlu0.b32.cont [7/16] 0.0, 128
    %951 = vxpose.xlu0.b32.cont [8/16] 0.0, 128
    %952 = vxpose.xlu0.b32.cont [9/16] 0.0, 128
    %953 = vxpose.xlu0.b32.cont [10/16] 0.0, 128
    %954 = vxpose.xlu0.b32.cont [11/16] 0.0, 128
    %955 = vxpose.xlu0.b32.cont [12/16] 0.0, 128
    %956 = vxpose.xlu0.b32.cont [13/16] 0.0, 128
    %957 = vxpose.xlu0.b32.cont [14/16] 0.0, 128
    %958 = vxpose.xlu0.b32.cont [15/16] 0.0, 128
    %959 = vxpose.xlu0.b32.end [16/16] 0.0, 128
    %v960 = vpop.trf.xlu0
    %v961 = vpop.trf.xlu0
    %v962 = vpop.trf.xlu0
    %v963 = vpop.trf.xlu0
    %v964 = vpop.trf.xlu0
    %v965 = vpop.trf.xlu0
    %v966 = vpop.trf.xlu0
    %v967 = vpop.trf.xlu0
    %v968 = vpop.trf.xlu0
    %v969 = vpop.trf.xlu0
    %v970 = vpop.trf.xlu0
    %v971 = vpop.trf.xlu0
    %v972 = vpop.trf.xlu0
    %v973 = vpop.trf.xlu0
    %v974 = vpop.trf.xlu0
    %v975 = vpop.trf.xlu0
    %976 = vxpose.xlu0.b32.start [1/16] %v736, 128
    %977 = vxpose.xlu0.b32.cont [2/16] %v737, 128
    %978 = vxpose.xlu0.b32.cont [3/16] %v738, 128
    %979 = vxpose.xlu0.b32.cont [4/16] %v739, 128
    %980 = vxpose.xlu0.b32.cont [5/16] 0.0, 128
    %981 = vxpose.xlu0.b32.cont [6/16] 0.0, 128
    %982 = vxpose.xlu0.b32.cont [7/16] 0.0, 128
    %983 = vxpose.xlu0.b32.cont [8/16] 0.0, 128
    %984 = vxpose.xlu0.b32.cont [9/16] 0.0, 128
    %985 = vxpose.xlu0.b32.cont [10/16] 0.0, 128
    %986 = vxpose.xlu0.b32.cont [11/16] 0.0, 128
    %987 = vxpose.xlu0.b32.cont [12/16] 0.0, 128
    %988 = vxpose.xlu0.b32.cont [13/16] 0.0, 128
    %989 = vxpose.xlu0.b32.cont [14/16] 0.0, 128
    %990 = vxpose.xlu0.b32.cont [15/16] 0.0, 128
    %991 = vxpose.xlu0.b32.end [16/16] 0.0, 128
    %v992 = vpop.trf.xlu0
    %v993 = vpop.trf.xlu0
    %v994 = vpop.trf.xlu0
    %v995 = vpop.trf.xlu0
    %v996 = vpop.trf.xlu0
    %v997 = vpop.trf.xlu0
    %v998 = vpop.trf.xlu0
    %v999 = vpop.trf.xlu0
    %v1000 = vpop.trf.xlu0
    %v1001 = vpop.trf.xlu0
    %v1002 = vpop.trf.xlu0
    %v1003 = vpop.trf.xlu0
    %v1004 = vpop.trf.xlu0
    %v1005 = vpop.trf.xlu0
    %v1006 = vpop.trf.xlu0
    %v1007 = vpop.trf.xlu0
    %1008 = vxpose.xlu0.b32.start [1/16] %v740, 128
    %1009 = vxpose.xlu0.b32.cont [2/16] %v741, 128
    %1010 = vxpose.xlu0.b32.cont [3/16] %v742, 128
    %1011 = vxpose.xlu0.b32.cont [4/16] %v743, 128
    %1012 = vxpose.xlu0.b32.cont [5/16] 0.0, 128
    %1013 = vxpose.xlu0.b32.cont [6/16] 0.0, 128
    %1014 = vxpose.xlu0.b32.cont [7/16] 0.0, 128
    %1015 = vxpose.xlu0.b32.cont [8/16] 0.0, 128
    %1016 = vxpose.xlu0.b32.cont [9/16] 0.0, 128
    %1017 = vxpose.xlu0.b32.cont [10/16] 0.0, 128
    %1018 = vxpose.xlu0.b32.cont [11/16] 0.0, 128
    %1019 = vxpose.xlu0.b32.cont [12/16] 0.0, 128
    %1020 = vxpose.xlu0.b32.cont [13/16] 0.0, 128
    %1021 = vxpose.xlu0.b32.cont [14/16] 0.0, 128
    %1022 = vxpose.xlu0.b32.cont [15/16] 0.0, 128
    %1023 = vxpose.xlu0.b32.end [16/16] 0.0, 128
    %v1024 = vpop.trf.xlu0
    %v1025 = vpop.trf.xlu0
    %v1026 = vpop.trf.xlu0
    %v1027 = vpop.trf.xlu0
    %v1028 = vpop.trf.xlu0
    %v1029 = vpop.trf.xlu0
    %v1030 = vpop.trf.xlu0
    %v1031 = vpop.trf.xlu0
    %v1032 = vpop.trf.xlu0
    %v1033 = vpop.trf.xlu0
    %v1034 = vpop.trf.xlu0
    %v1035 = vpop.trf.xlu0
    %v1036 = vpop.trf.xlu0
    %v1037 = vpop.trf.xlu0
    %v1038 = vpop.trf.xlu0
    %v1039 = vpop.trf.xlu0
    %v1040 = vpack.c.bf16 %v929, %v928
    %v1041 = vpack.c.bf16 %v931, %v930
    %v1042 = vpack.c.bf16 %v961, %v960
    %v1043 = vpack.c.bf16 %v963, %v962
    %v1044 = vpack.c.bf16 %v993, %v992
    %v1045 = vpack.c.bf16 %v995, %v994
    %v1046 = vpack.c.bf16 %v1025, %v1024
    %v1047 = vpack.c.bf16 %v1027, %v1026
    %1048 = vxpose.xlu0.b32.start [1/16] %v760, 128
    %1049 = vxpose.xlu0.b32.cont [2/16] %v761, 128
    %1050 = vxpose.xlu0.b32.cont [3/16] %v762, 128
    %1051 = vxpose.xlu0.b32.cont [4/16] %v763, 128
    %1052 = vxpose.xlu0.b32.cont [5/16] 0.0, 128
    %1053 = vxpose.xlu0.b32.cont [6/16] 0.0, 128
    %1054 = vxpose.xlu0.b32.cont [7/16] 0.0, 128
    %1055 = vxpose.xlu0.b32.cont [8/16] 0.0, 128
    %1056 = vxpose.xlu0.b32.cont [9/16] 0.0, 128
    %1057 = vxpose.xlu0.b32.cont [10/16] 0.0, 128
    %1058 = vxpose.xlu0.b32.cont [11/16] 0.0, 128
    %1059 = vxpose.xlu0.b32.cont [12/16] 0.0, 128
    %1060 = vxpose.xlu0.b32.cont [13/16] 0.0, 128
    %1061 = vxpose.xlu0.b32.cont [14/16] 0.0, 128
    %1062 = vxpose.xlu0.b32.cont [15/16] 0.0, 128
    %1063 = vxpose.xlu0.b32.end [16/16] 0.0, 128
    %v1064 = vpop.trf.xlu0
    %v1065 = vpop.trf.xlu0
    %v1066 = vpop.trf.xlu0
    %v1067 = vpop.trf.xlu0
    %v1068 = vpop.trf.xlu0
    %v1069 = vpop.trf.xlu0
    %v1070 = vpop.trf.xlu0
    %v1071 = vpop.trf.xlu0
    %v1072 = vpop.trf.xlu0
    %v1073 = vpop.trf.xlu0
    %v1074 = vpop.trf.xlu0
    %v1075 = vpop.trf.xlu0
    %v1076 = vpop.trf.xlu0
    %v1077 = vpop.trf.xlu0
    %v1078 = vpop.trf.xlu0
    %v1079 = vpop.trf.xlu0
    %1080 = vxpose.xlu0.b32.start [1/16] %v764, 128
    %1081 = vxpose.xlu0.b32.cont [2/16] %v765, 128
    %1082 = vxpose.xlu0.b32.cont [3/16] %v766, 128
    %1083 = vxpose.xlu0.b32.cont [4/16] %v767, 128
    %1084 = vxpose.xlu0.b32.cont [5/16] 0.0, 128
    %1085 = vxpose.xlu0.b32.cont [6/16] 0.0, 128
    %1086 = vxpose.xlu0.b32.cont [7/16] 0.0, 128
    %1087 = vxpose.xlu0.b32.cont [8/16] 0.0, 128
    %1088 = vxpose.xlu0.b32.cont [9/16] 0.0, 128
    %1089 = vxpose.xlu0.b32.cont [10/16] 0.0, 128
    %1090 = vxpose.xlu0.b32.cont [11/16] 0.0, 128
    %1091 = vxpose.xlu0.b32.cont [12/16] 0.0, 128
    %1092 = vxpose.xlu0.b32.cont [13/16] 0.0, 128
    %1093 = vxpose.xlu0.b32.cont [14/16] 0.0, 128
    %1094 = vxpose.xlu0.b32.cont [15/16] 0.0, 128
    %1095 = vxpose.xlu0.b32.end [16/16] 0.0, 128
    %v1096 = vpop.trf.xlu0
    %v1097 = vpop.trf.xlu0
    %v1098 = vpop.trf.xlu0
    %v1099 = vpop.trf.xlu0
    %v1100 = vpop.trf.xlu0
    %v1101 = vpop.trf.xlu0
    %v1102 = vpop.trf.xlu0
    %v1103 = vpop.trf.xlu0
    %v1104 = vpop.trf.xlu0
    %v1105 = vpop.trf.xlu0
    %v1106 = vpop.trf.xlu0
    %v1107 = vpop.trf.xlu0
    %v1108 = vpop.trf.xlu0
    %v1109 = vpop.trf.xlu0
    %v1110 = vpop.trf.xlu0
    %v1111 = vpop.trf.xlu0
    %1112 = vxpose.xlu0.b32.start [1/16] %v768, 128
    %1113 = vxpose.xlu0.b32.cont [2/16] %v769, 128
    %1114 = vxpose.xlu0.b32.cont [3/16] %v770, 128
    %1115 = vxpose.xlu0.b32.cont [4/16] %v771, 128
    %1116 = vxpose.xlu0.b32.cont [5/16] 0.0, 128
    %1117 = vxpose.xlu0.b32.cont [6/16] 0.0, 128
    %1118 = vxpose.xlu0.b32.cont [7/16] 0.0, 128
    %1119 = vxpose.xlu0.b32.cont [8/16] 0.0, 128
    %1120 = vxpose.xlu0.b32.cont [9/16] 0.0, 128
    %1121 = vxpose.xlu0.b32.cont [10/16] 0.0, 128
    %1122 = vxpose.xlu0.b32.cont [11/16] 0.0, 128
    %1123 = vxpose.xlu0.b32.cont [12/16] 0.0, 128
    %1124 = vxpose.xlu0.b32.cont [13/16] 0.0, 128
    %1125 = vxpose.xlu0.b32.cont [14/16] 0.0, 128
    %1126 = vxpose.xlu0.b32.cont [15/16] 0.0, 128
    %1127 = vxpose.xlu0.b32.end [16/16] 0.0, 128
    %v1128 = vpop.trf.xlu0
    %v1129 = vpop.trf.xlu0
    %v1130 = vpop.trf.xlu0
    %v1131 = vpop.trf.xlu0
    %v1132 = vpop.trf.xlu0
    %v1133 = vpop.trf.xlu0
    %v1134 = vpop.trf.xlu0
    %v1135 = vpop.trf.xlu0
    %v1136 = vpop.trf.xlu0
    %v1137 = vpop.trf.xlu0
    %v1138 = vpop.trf.xlu0
    %v1139 = vpop.trf.xlu0
    %v1140 = vpop.trf.xlu0
    %v1141 = vpop.trf.xlu0
    %v1142 = vpop.trf.xlu0
    %v1143 = vpop.trf.xlu0
    %1144 = vxpose.xlu0.b32.start [1/16] %v772, 128
    %1145 = vxpose.xlu0.b32.cont [2/16] %v773, 128
    %1146 = vxpose.xlu0.b32.cont [3/16] %v774, 128
    %1147 = vxpose.xlu0.b32.cont [4/16] %v775, 128
    %1148 = vxpose.xlu0.b32.cont [5/16] 0.0, 128
    %1149 = vxpose.xlu0.b32.cont [6/16] 0.0, 128
    %1150 = vxpose.xlu0.b32.cont [7/16] 0.0, 128
    %1151 = vxpose.xlu0.b32.cont [8/16] 0.0, 128
    %1152 = vxpose.xlu0.b32.cont [9/16] 0.0, 128
    %1153 = vxpose.xlu0.b32.cont [10/16] 0.0, 128
    %1154 = vxpose.xlu0.b32.cont [11/16] 0.0, 128
    %1155 = vxpose.xlu0.b32.cont [12/16] 0.0, 128
    %1156 = vxpose.xlu0.b32.cont [13/16] 0.0, 128
    %1157 = vxpose.xlu0.b32.cont [14/16] 0.0, 128
    %1158 = vxpose.xlu0.b32.cont [15/16] 0.0, 128
    %1159 = vxpose.xlu0.b32.end [16/16] 0.0, 128
    %v1160 = vpop.trf.xlu0
    %v1161 = vpop.trf.xlu0
    %v1162 = vpop.trf.xlu0
    %v1163 = vpop.trf.xlu0
    %v1164 = vpop.trf.xlu0
    %v1165 = vpop.trf.xlu0
    %v1166 = vpop.trf.xlu0
    %v1167 = vpop.trf.xlu0
    %v1168 = vpop.trf.xlu0
    %v1169 = vpop.trf.xlu0
    %v1170 = vpop.trf.xlu0
    %v1171 = vpop.trf.xlu0
    %v1172 = vpop.trf.xlu0
    %v1173 = vpop.trf.xlu0
    %v1174 = vpop.trf.xlu0
    %v1175 = vpop.trf.xlu0
    %v1176 = vpack.c.bf16 %v1065, %v1064
    %v1177 = vpack.c.bf16 %v1067, %v1066
    %v1178 = vpack.c.bf16 %v1097, %v1096
    %v1179 = vpack.c.bf16 %v1099, %v1098
    %v1180 = vpack.c.bf16 %v1129, %v1128
    %v1181 = vpack.c.bf16 %v1131, %v1130
    %v1182 = vpack.c.bf16 %v1161, %v1160
    %v1183 = vpack.c.bf16 %v1163, %v1162
    %vm1184 = vcmask 261120
    %v1186 = vsel %vm1184, %v904, 0
    %v1189 = vsel %vm1184, %v905, 0
    %v1192 = vsel %vm1184, %v1040, 0
    %v1195 = vsel %vm1184, %v1041, 0
    %1197 = vmatprep.subr.bf16.mxu0 0
    %1198 = vmatpush1.bf16.xpose.msra.mxu0 0
    %1199 = vmatprep.subr.bf16.mxu0 0
    %1200 = vmatpush1.bf16.xpose.msra.mxu0 0
    %1201 = vmatprep.subr.bf16.mxu0 0
    %1202 = vmatpush1.bf16.xpose.msra.mxu0 0
    %1203 = vmatprep.subr.bf16.mxu0 0
    %1204 = vmatpush1.bf16.xpose.msra.mxu0 0
    %1205 = vmatprep.subr.bf16.mxu0 0
    %1206 = vmatpush1.bf16.xpose.msra.mxu0 0
    %1207 = vmatprep.subr.bf16.mxu0 0
    %1208 = vmatpush1.bf16.xpose.msra.mxu0 0
    %1209 = vmatprep.subr.bf16.mxu0 0
    %1210 = vmatpush1.bf16.xpose.msra.mxu0 %v1195
    %1211 = vmatprep.subr.bf16.mxu0 0
    %1212 = vmatpush1.bf16.xpose.msra.mxu0 %v1192
    %1213 = vmatprep.subr.bf16.mxu0 0
    %1214 = vmatpush2.bf16.xpose.msra.mxu0 0
    %1215 = vmatprep.subr.bf16.mxu0 0
    %1216 = vmatpush2.bf16.xpose.msra.mxu0 0
    %1217 = vmatprep.subr.bf16.mxu0 0
    %1218 = vmatpush2.bf16.xpose.msra.mxu0 0
    %1219 = vmatprep.subr.bf16.mxu0 0
    %1220 = vmatpush2.bf16.xpose.msra.mxu0 0
    %1221 = vmatprep.subr.bf16.mxu0 0
    %1222 = vmatpush2.bf16.xpose.msra.mxu0 0
    %1223 = vmatprep.subr.bf16.mxu0 0
    %1224 = vmatpush2.bf16.xpose.msra.mxu0 0
    %1225 = vmatprep.subr.bf16.mxu0 0
    %1226 = vmatpush2.bf16.xpose.msra.mxu0 0
    %1227 = vmatprep.subr.bf16.mxu0 0
    %1228 = vmatpush2.bf16.xpose.msra.mxu0 0
    %1229 = vmatprep.mubr.bf16.mxu0 0
    %1230 = vmatmul.mubr.bf16.gmra.mxu0 %v1186
    %v1231 = vpop.f32.mrf.mxu0
    %v1232 = vadd.f32 0.0, %v1231
    %v1233 = vpop.f32.mrf.mxu0
    %v1234 = vpop.f32.mrf.mxu0
    %v1235 = vadd.f32 0.0, %v1234
    %v1236 = vpop.f32.mrf.mxu0
    %1237 = vmatprep.mubr.bf16.mxu0 0
    %1238 = vmatmul.mubr.bf16.gmra.mxu0 %v1189
    %v1239 = vpop.f32.mrf.mxu0
    %v1240 = vadd.f32 0.0, %v1239
    %v1241 = vpop.f32.mrf.mxu0
    %v1242 = vpop.f32.mrf.mxu0
    %v1243 = vadd.f32 0.0, %v1242
    %v1244 = vpop.f32.mrf.mxu0
    %1245 = vdwg.mxu0
    %v1247 = vsel %vm1184, %v906, 0
    %v1250 = vsel %vm1184, %v907, 0
    %v1253 = vsel %vm1184, %v1042, 0
    %v1256 = vsel %vm1184, %v1043, 0
    %1258 = vmatprep.subr.bf16.mxu0 0
    %1259 = vmatpush1.bf16.xpose.msra.mxu0 0
    %1260 = vmatprep.subr.bf16.mxu0 0
    %1261 = vmatpush1.bf16.xpose.msra.mxu0 0
    %1262 = vmatprep.subr.bf16.mxu0 0
    %1263 = vmatpush1.bf16.xpose.msra.mxu0 0
    %1264 = vmatprep.subr.bf16.mxu0 0
    %1265 = vmatpush1.bf16.xpose.msra.mxu0 0
    %1266 = vmatprep.subr.bf16.mxu0 0
    %1267 = vmatpush1.bf16.xpose.msra.mxu0 0
    %1268 = vmatprep.subr.bf16.mxu0 0
    %1269 = vmatpush1.bf16.xpose.msra.mxu0 0
    %1270 = vmatprep.subr.bf16.mxu0 0
    %1271 = vmatpush1.bf16.xpose.msra.mxu0 %v1256
    %1272 = vmatprep.subr.bf16.mxu0 0
    %1273 = vmatpush1.bf16.xpose.msra.mxu0 %v1253
    %1274 = vmatprep.subr.bf16.mxu0 0
    %1275 = vmatpush2.bf16.xpose.msra.mxu0 0
    %1276 = vmatprep.subr.bf16.mxu0 0
    %1277 = vmatpush2.bf16.xpose.msra.mxu0 0
    %1278 = vmatprep.subr.bf16.mxu0 0
    %1279 = vmatpush2.bf16.xpose.msra.mxu0 0
    %1280 = vmatprep.subr.bf16.mxu0 0
    %1281 = vmatpush2.bf16.xpose.msra.mxu0 0
    %1282 = vmatprep.subr.bf16.mxu0 0
    %1283 = vmatpush2.bf16.xpose.msra.mxu0 0
    %1284 = vmatprep.subr.bf16.mxu0 0
    %1285 = vmatpush2.bf16.xpose.msra.mxu0 0
    %1286 = vmatprep.subr.bf16.mxu0 0
    %1287 = vmatpush2.bf16.xpose.msra.mxu0 0
    %1288 = vmatprep.subr.bf16.mxu0 0
    %1289 = vmatpush2.bf16.xpose.msra.mxu0 0
    %1290 = vmatprep.mubr.bf16.mxu0 0
    %1291 = vmatmul.mubr.bf16.gmra.mxu0 %v1247
    %v1292 = vpop.f32.mrf.mxu0
    %v1293 = vadd.f32 0.0, %v1292
    %v1294 = vpop.f32.mrf.mxu0
    %v1295 = vpop.f32.mrf.mxu0
    %v1296 = vadd.f32 0.0, %v1295
    %v1297 = vpop.f32.mrf.mxu0
    %1298 = vmatprep.mubr.bf16.mxu0 0
    %1299 = vmatmul.mubr.bf16.gmra.mxu0 %v1250
    %v1300 = vpop.f32.mrf.mxu0
    %v1301 = vadd.f32 0.0, %v1300
    %v1302 = vpop.f32.mrf.mxu0
    %v1303 = vpop.f32.mrf.mxu0
    %v1304 = vadd.f32 0.0, %v1303
    %v1305 = vpop.f32.mrf.mxu0
    %1306 = vdwg.mxu0
    %v1308 = vsel %vm1184, %v908, 0
    %v1311 = vsel %vm1184, %v909, 0
    %v1314 = vsel %vm1184, %v1044, 0
    %v1317 = vsel %vm1184, %v1045, 0
    %1319 = vmatprep.subr.bf16.mxu0 0
    %1320 = vmatpush1.bf16.xpose.msra.mxu0 0
    %1321 = vmatprep.subr.bf16.mxu0 0
    %1322 = vmatpush1.bf16.xpose.msra.mxu0 0
    %1323 = vmatprep.subr.bf16.mxu0 0
    %1324 = vmatpush1.bf16.xpose.msra.mxu0 0
    %1325 = vmatprep.subr.bf16.mxu0 0
    %1326 = vmatpush1.bf16.xpose.msra.mxu0 0
    %1327 = vmatprep.subr.bf16.mxu0 0
    %1328 = vmatpush1.bf16.xpose.msra.mxu0 0
    %1329 = vmatprep.subr.bf16.mxu0 0
    %1330 = vmatpush1.bf16.xpose.msra.mxu0 0
    %1331 = vmatprep.subr.bf16.mxu0 0
    %1332 = vmatpush1.bf16.xpose.msra.mxu0 %v1317
    %1333 = vmatprep.subr.bf16.mxu0 0
    %1334 = vmatpush1.bf16.xpose.msra.mxu0 %v1314
    %1335 = vmatprep.subr.bf16.mxu0 0
    %1336 = vmatpush2.bf16.xpose.msra.mxu0 0
    %1337 = vmatprep.subr.bf16.mxu0 0
    %1338 = vmatpush2.bf16.xpose.msra.mxu0 0
    %1339 = vmatprep.subr.bf16.mxu0 0
    %1340 = vmatpush2.bf16.xpose.msra.mxu0 0
    %1341 = vmatprep.subr.bf16.mxu0 0
    %1342 = vmatpush2.bf16.xpose.msra.mxu0 0
    %1343 = vmatprep.subr.bf16.mxu0 0
    %1344 = vmatpush2.bf16.xpose.msra.mxu0 0
    %1345 = vmatprep.subr.bf16.mxu0 0
    %1346 = vmatpush2.bf16.xpose.msra.mxu0 0
    %1347 = vmatprep.subr.bf16.mxu0 0
    %1348 = vmatpush2.bf16.xpose.msra.mxu0 0
    %1349 = vmatprep.subr.bf16.mxu0 0
    %1350 = vmatpush2.bf16.xpose.msra.mxu0 0
    %1351 = vmatprep.mubr.bf16.mxu0 0
    %1352 = vmatmul.mubr.bf16.gmra.mxu0 %v1308
    %v1353 = vpop.f32.mrf.mxu0
    %v1354 = vadd.f32 0.0, %v1353
    %v1355 = vpop.f32.mrf.mxu0
    %v1356 = vpop.f32.mrf.mxu0
    %v1357 = vadd.f32 0.0, %v1356
    %v1358 = vpop.f32.mrf.mxu0
    %1359 = vmatprep.mubr.bf16.mxu0 0
    %1360 = vmatmul.mubr.bf16.gmra.mxu0 %v1311
    %v1361 = vpop.f32.mrf.mxu0
    %v1362 = vadd.f32 0.0, %v1361
    %v1363 = vpop.f32.mrf.mxu0
    %v1364 = vpop.f32.mrf.mxu0
    %v1365 = vadd.f32 0.0, %v1364
    %v1366 = vpop.f32.mrf.mxu0
    %1367 = vdwg.mxu0
    %v1369 = vsel %vm1184, %v910, 0
    %v1372 = vsel %vm1184, %v911, 0
    %v1375 = vsel %vm1184, %v1046, 0
    %v1378 = vsel %vm1184, %v1047, 0
    %1380 = vmatprep.subr.bf16.mxu0 0
    %1381 = vmatpush1.bf16.xpose.msra.mxu0 0
    %1382 = vmatprep.subr.bf16.mxu0 0
    %1383 = vmatpush1.bf16.xpose.msra.mxu0 0
    %1384 = vmatprep.subr.bf16.mxu0 0
    %1385 = vmatpush1.bf16.xpose.msra.mxu0 0
    %1386 = vmatprep.subr.bf16.mxu0 0
    %1387 = vmatpush1.bf16.xpose.msra.mxu0 0
    %1388 = vmatprep.subr.bf16.mxu0 0
    %1389 = vmatpush1.bf16.xpose.msra.mxu0 0
    %1390 = vmatprep.subr.bf16.mxu0 0
    %1391 = vmatpush1.bf16.xpose.msra.mxu0 0
    %1392 = vmatprep.subr.bf16.mxu0 0
    %1393 = vmatpush1.bf16.xpose.msra.mxu0 %v1378
    %1394 = vmatprep.subr.bf16.mxu0 0
    %1395 = vmatpush1.bf16.xpose.msra.mxu0 %v1375
    %1396 = vmatprep.subr.bf16.mxu0 0
    %1397 = vmatpush2.bf16.xpose.msra.mxu0 0
    %1398 = vmatprep.subr.bf16.mxu0 0
    %1399 = vmatpush2.bf16.xpose.msra.mxu0 0
    %1400 = vmatprep.subr.bf16.mxu0 0
    %1401 = vmatpush2.bf16.xpose.msra.mxu0 0
    %1402 = vmatprep.subr.bf16.mxu0 0
    %1403 = vmatpush2.bf16.xpose.msra.mxu0 0
    %1404 = vmatprep.subr.bf16.mxu0 0
    %1405 = vmatpush2.bf16.xpose.msra.mxu0 0
    %1406 = vmatprep.subr.bf16.mxu0 0
    %1407 = vmatpush2.bf16.xpose.msra.mxu0 0
    %1408 = vmatprep.subr.bf16.mxu0 0
    %1409 = vmatpush2.bf16.xpose.msra.mxu0 0
    %1410 = vmatprep.subr.bf16.mxu0 0
    %1411 = vmatpush2.bf16.xpose.msra.mxu0 0
    %1412 = vmatprep.mubr.bf16.mxu0 0
    %1413 = vmatmul.mubr.bf16.gmra.mxu0 %v1369
    %v1414 = vpop.f32.mrf.mxu0
    %v1415 = vadd.f32 0.0, %v1414
    %v1416 = vpop.f32.mrf.mxu0
    %v1417 = vpop.f32.mrf.mxu0
    %v1418 = vadd.f32 0.0, %v1417
    %v1419 = vpop.f32.mrf.mxu0
    %1420 = vmatprep.mubr.bf16.mxu0 0
    %1421 = vmatmul.mubr.bf16.gmra.mxu0 %v1372
    %v1422 = vpop.f32.mrf.mxu0
    %v1423 = vadd.f32 0.0, %v1422
    %v1424 = vpop.f32.mrf.mxu0
    %v1425 = vpop.f32.mrf.mxu0
    %v1426 = vadd.f32 0.0, %v1425
    %v1427 = vpop.f32.mrf.mxu0
    %1428 = vdwg.mxu0
    %v1429 = vmul.f32 %v1232, 0.17677669
    %v1430 = vmul.f32 %v1235, 0.17677669
    %v1431 = vmul.f32 %v1240, 0.17677669
    %v1432 = vmul.f32 %v1243, 0.17677669
    %v1433 = vmul.f32 %v1293, 0.17677669
    %v1434 = vmul.f32 %v1296, 0.17677669
    %v1435 = vmul.f32 %v1301, 0.17677669
    %v1436 = vmul.f32 %v1304, 0.17677669
    %v1437 = vmul.f32 %v1354, 0.17677669
    %v1438 = vmul.f32 %v1357, 0.17677669
    %v1439 = vmul.f32 %v1362, 0.17677669
    %v1440 = vmul.f32 %v1365, 0.17677669
    %v1441 = vmul.f32 %v1415, 0.17677669
    %v1442 = vmul.f32 %v1418, 0.17677669
    %v1443 = vmul.f32 %v1423, 0.17677669
    %v1444 = vmul.f32 %v1426, 0.17677669
    %v1445 = vadd.f32 %v1429, %v400
    %v1446 = vadd.f32 %v1430, %v401
    %v1447 = vadd.f32 %v1431, %v402
    %v1448 = vadd.f32 %v1432, %v403
    %v1449 = vadd.f32 %v1433, %v400
    %v1450 = vadd.f32 %v1434, %v401
    %v1451 = vadd.f32 %v1435, %v402
    %v1452 = vadd.f32 %v1436, %v403
    %v1453 = vadd.f32 %v1437, %v400
    %v1454 = vadd.f32 %v1438, %v401
    %v1455 = vadd.f32 %v1439, %v402
    %v1456 = vadd.f32 %v1440, %v403
    %v1457 = vadd.f32 %v1441, %v400
    %v1458 = vadd.f32 %v1442, %v401
    %v1459 = vadd.f32 %v1443, %v402
    %v1460 = vadd.f32 %v1444, %v403
    %v1461 = vsel %vm1184, %v1445, -inf
    %1462 = vmax.xlane.f32.xlu0 %v1461
    %v1463 = vpop.xlane.xlu0 %1462
    %v1464 = vsel %vm1184, %v1446, -inf
    %1465 = vmax.xlane.f32.xlu0 %v1464
    %v1466 = vpop.xlane.xlu0 %1465
    %v1467 = vsel %vm1184, %v1447, -inf
    %1468 = vmax.xlane.f32.xlu0 %v1467
    %v1469 = vpop.xlane.xlu0 %1468
    %v1470 = vsel %vm1184, %v1448, -inf
    %1471 = vmax.xlane.f32.xlu0 %v1470
    %v1472 = vpop.xlane.xlu0 %1471
    %v1473 = vsel %vm1184, %v1449, -inf
    %1474 = vmax.xlane.f32.xlu0 %v1473
    %v1475 = vpop.xlane.xlu0 %1474
    %v1476 = vsel %vm1184, %v1450, -inf
    %1477 = vmax.xlane.f32.xlu0 %v1476
    %v1478 = vpop.xlane.xlu0 %1477
    %v1479 = vsel %vm1184, %v1451, -inf
    %1480 = vmax.xlane.f32.xlu0 %v1479
    %v1481 = vpop.xlane.xlu0 %1480
    %v1482 = vsel %vm1184, %v1452, -inf
    %1483 = vmax.xlane.f32.xlu0 %v1482
    %v1484 = vpop.xlane.xlu0 %1483
    %v1485 = vsel %vm1184, %v1453, -inf
    %1486 = vmax.xlane.f32.xlu0 %v1485
    %v1487 = vpop.xlane.xlu0 %1486
    %v1488 = vsel %vm1184, %v1454, -inf
    %1489 = vmax.xlane.f32.xlu0 %v1488
    %v1490 = vpop.xlane.xlu0 %1489
    %v1491 = vsel %vm1184, %v1455, -inf
    %1492 = vmax.xlane.f32.xlu0 %v1491
    %v1493 = vpop.xlane.xlu0 %1492
    %v1494 = vsel %vm1184, %v1456, -inf
    %1495 = vmax.xlane.f32.xlu0 %v1494
    %v1496 = vpop.xlane.xlu0 %1495
    %v1497 = vsel %vm1184, %v1457, -inf
    %1498 = vmax.xlane.f32.xlu0 %v1497
    %v1499 = vpop.xlane.xlu0 %1498
    %v1500 = vsel %vm1184, %v1458, -inf
    %1501 = vmax.xlane.f32.xlu0 %v1500
    %v1502 = vpop.xlane.xlu0 %1501
    %v1503 = vsel %vm1184, %v1459, -inf
    %1504 = vmax.xlane.f32.xlu0 %v1503
    %v1505 = vpop.xlane.xlu0 %1504
    %v1506 = vsel %vm1184, %v1460, -inf
    %1507 = vmax.xlane.f32.xlu0 %v1506
    %v1508 = vpop.xlane.xlu0 %1507
    %v1509 = vsub.f32 %v1445, %v1463
    %v1510 = vsub.f32 %v1446, %v1466
    %v1511 = vsub.f32 %v1447, %v1469
    %v1512 = vsub.f32 %v1448, %v1472
    %v1513 = vsub.f32 %v1449, %v1475
    %v1514 = vsub.f32 %v1450, %v1478
    %v1515 = vsub.f32 %v1451, %v1481
    %v1516 = vsub.f32 %v1452, %v1484
    %v1517 = vsub.f32 %v1453, %v1487
    %v1518 = vsub.f32 %v1454, %v1490
    %v1519 = vsub.f32 %v1455, %v1493
    %v1520 = vsub.f32 %v1456, %v1496
    %v1521 = vsub.f32 %v1457, %v1499
    %v1522 = vsub.f32 %v1458, %v1502
    %v1523 = vsub.f32 %v1459, %v1505
    %v1524 = vsub.f32 %v1460, %v1508
    %v1525 = vmul.f32 %v1509, 1.442695
    %v1526 = vpow.pop %v1525
    %v1527 = vmul.f32 %v1510, 1.442695
    %v1528 = vpow.pop %v1527
    %v1529 = vmul.f32 %v1511, 1.442695
    %v1530 = vpow.pop %v1529
    %v1531 = vmul.f32 %v1512, 1.442695
    %v1532 = vpow.pop %v1531
    %v1533 = vmul.f32 %v1513, 1.442695
    %v1534 = vpow.pop %v1533
    %v1535 = vmul.f32 %v1514, 1.442695
    %v1536 = vpow.pop %v1535
    %v1537 = vmul.f32 %v1515, 1.442695
    %v1538 = vpow.pop %v1537
    %v1539 = vmul.f32 %v1516, 1.442695
    %v1540 = vpow.pop %v1539
    %v1541 = vmul.f32 %v1517, 1.442695
    %v1542 = vpow.pop %v1541
    %v1543 = vmul.f32 %v1518, 1.442695
    %v1544 = vpow.pop %v1543
    %v1545 = vmul.f32 %v1519, 1.442695
    %v1546 = vpow.pop %v1545
    %v1547 = vmul.f32 %v1520, 1.442695
    %v1548 = vpow.pop %v1547
    %v1549 = vmul.f32 %v1521, 1.442695
    %v1550 = vpow.pop %v1549
    %v1551 = vmul.f32 %v1522, 1.442695
    %v1552 = vpow.pop %v1551
    %v1553 = vmul.f32 %v1523, 1.442695
    %v1554 = vpow.pop %v1553
    %v1555 = vmul.f32 %v1524, 1.442695
    %v1556 = vpow.pop %v1555
    %v1557 = vsel %vm1184, %v1526, 0.0
    %1558 = vadd.xlane.f32.xlu0 %v1557
    %v1559 = vpop.xlane.xlu0 %1558
    %v1560 = vsel %vm1184, %v1528, 0.0
    %1561 = vadd.xlane.f32.xlu0 %v1560
    %v1562 = vpop.xlane.xlu0 %1561
    %v1563 = vsel %vm1184, %v1530, 0.0
    %1564 = vadd.xlane.f32.xlu0 %v1563
    %v1565 = vpop.xlane.xlu0 %1564
    %v1566 = vsel %vm1184, %v1532, 0.0
    %1567 = vadd.xlane.f32.xlu0 %v1566
    %v1568 = vpop.xlane.xlu0 %1567
    %v1569 = vsel %vm1184, %v1534, 0.0
    %1570 = vadd.xlane.f32.xlu0 %v1569
    %v1571 = vpop.xlane.xlu0 %1570
    %v1572 = vsel %vm1184, %v1536, 0.0
    %1573 = vadd.xlane.f32.xlu0 %v1572
    %v1574 = vpop.xlane.xlu0 %1573
    %v1575 = vsel %vm1184, %v1538, 0.0
    %1576 = vadd.xlane.f32.xlu0 %v1575
    %v1577 = vpop.xlane.xlu0 %1576
    %v1578 = vsel %vm1184, %v1540, 0.0
    %1579 = vadd.xlane.f32.xlu0 %v1578
    %v1580 = vpop.xlane.xlu0 %1579
    %v1581 = vsel %vm1184, %v1542, 0.0
    %1582 = vadd.xlane.f32.xlu0 %v1581
    %v1583 = vpop.xlane.xlu0 %1582
    %v1584 = vsel %vm1184, %v1544, 0.0
    %1585 = vadd.xlane.f32.xlu0 %v1584
    %v1586 = vpop.xlane.xlu0 %1585
    %v1587 = vsel %vm1184, %v1546, 0.0
    %1588 = vadd.xlane.f32.xlu0 %v1587
    %v1589 = vpop.xlane.xlu0 %1588
    %v1590 = vsel %vm1184, %v1548, 0.0
    %1591 = vadd.xlane.f32.xlu0 %v1590
    %v1592 = vpop.xlane.xlu0 %1591
    %v1593 = vsel %vm1184, %v1550, 0.0
    %1594 = vadd.xlane.f32.xlu0 %v1593
    %v1595 = vpop.xlane.xlu0 %1594
    %v1596 = vsel %vm1184, %v1552, 0.0
    %1597 = vadd.xlane.f32.xlu0 %v1596
    %v1598 = vpop.xlane.xlu0 %1597
    %v1599 = vsel %vm1184, %v1554, 0.0
    %1600 = vadd.xlane.f32.xlu0 %v1599
    %v1601 = vpop.xlane.xlu0 %1600
    %v1602 = vsel %vm1184, %v1556, 0.0
    %1603 = vadd.xlane.f32.xlu0 %v1602
    %v1604 = vpop.xlane.xlu0 %1603
    %v1605 = vrcp.pop %v1559
    %v1606 = vrcp.pop %v1562
    %v1607 = vrcp.pop %v1565
    %v1608 = vrcp.pop %v1568
    %v1609 = vrcp.pop %v1571
    %v1610 = vrcp.pop %v1574
    %v1611 = vrcp.pop %v1577
    %v1612 = vrcp.pop %v1580
    %v1613 = vrcp.pop %v1583
    %v1614 = vrcp.pop %v1586
    %v1615 = vrcp.pop %v1589
    %v1616 = vrcp.pop %v1592
    %v1617 = vrcp.pop %v1595
    %v1618 = vrcp.pop %v1598
    %v1619 = vrcp.pop %v1601
    %v1620 = vrcp.pop %v1604
    %v1621 = vmul.f32 %v1526, %v1605
    %v1622 = vmul.f32 %v1528, %v1606
    %v1623 = vmul.f32 %v1530, %v1607
    %v1624 = vmul.f32 %v1532, %v1608
    %v1625 = vmul.f32 %v1534, %v1609
    %v1626 = vmul.f32 %v1536, %v1610
    %v1627 = vmul.f32 %v1538, %v1611
    %v1628 = vmul.f32 %v1540, %v1612
    %v1629 = vmul.f32 %v1542, %v1613
    %v1630 = vmul.f32 %v1544, %v1614
    %v1631 = vmul.f32 %v1546, %v1615
    %v1632 = vmul.f32 %v1548, %v1616
    %v1633 = vmul.f32 %v1550, %v1617
    %v1634 = vmul.f32 %v1552, %v1618
    %v1635 = vmul.f32 %v1554, %v1619
    %v1636 = vmul.f32 %v1556, %v1620
    %v1637 = vpack.c.bf16 %v1622, %v1621
    %v1638 = vpack.c.bf16 %v1624, %v1623
    %v1639 = vpack.c.bf16 %v1626, %v1625
    %v1640 = vpack.c.bf16 %v1628, %v1627
    %v1641 = vpack.c.bf16 %v1630, %v1629
    %v1642 = vpack.c.bf16 %v1632, %v1631
    %v1643 = vpack.c.bf16 %v1634, %v1633
    %v1644 = vpack.c.bf16 %v1636, %v1635
    %v1646 = vsel %vm1184, %v1637, 0
    %v1649 = vsel %vm1184, %v1638, 0
    %1651 = vmatprep.subr.bf16.mxu0 0
    %1652 = vmatpush1.bf16.msra.mxu0 0
    %1653 = vmatprep.subr.bf16.mxu0 0
    %1654 = vmatpush1.bf16.msra.mxu0 0
    %1655 = vmatprep.subr.bf16.mxu0 0
    %1656 = vmatpush1.bf16.msra.mxu0 0
    %1657 = vmatprep.subr.bf16.mxu0 0
    %1658 = vmatpush1.bf16.msra.mxu0 0
    %1659 = vmatprep.subr.bf16.mxu0 0
    %1660 = vmatpush1.bf16.msra.mxu0 0
    %1661 = vmatprep.subr.bf16.mxu0 0
    %1662 = vmatpush1.bf16.msra.mxu0 0
    %1663 = vmatprep.subr.bf16.mxu0 0
    %1664 = vmatpush1.bf16.msra.mxu0 %v1177
    %1665 = vmatprep.subr.bf16.mxu0 0
    %1666 = vmatpush1.bf16.msra.mxu0 %v1176
    %1667 = vmatprep.subr.bf16.mxu0 0
    %1668 = vmatpush2.bf16.msra.mxu0 0
    %1669 = vmatprep.subr.bf16.mxu0 0
    %1670 = vmatpush2.bf16.msra.mxu0 0
    %1671 = vmatprep.subr.bf16.mxu0 0
    %1672 = vmatpush2.bf16.msra.mxu0 0
    %1673 = vmatprep.subr.bf16.mxu0 0
    %1674 = vmatpush2.bf16.msra.mxu0 0
    %1675 = vmatprep.subr.bf16.mxu0 0
    %1676 = vmatpush2.bf16.msra.mxu0 0
    %1677 = vmatprep.subr.bf16.mxu0 0
    %1678 = vmatpush2.bf16.msra.mxu0 0
    %1679 = vmatprep.subr.bf16.mxu0 0
    %1680 = vmatpush2.bf16.msra.mxu0 0
    %1681 = vmatprep.subr.bf16.mxu0 0
    %1682 = vmatpush2.bf16.msra.mxu0 0
    %1683 = vmatprep.mubr.bf16.mxu0 0
    %1684 = vmatmul.mubr.bf16.gmra.mxu0 %v1646
    %v1685 = vpop.f32.mrf.mxu0
    %v1686 = vadd.f32 0.0, %v1685
    %v1687 = vpop.f32.mrf.mxu0
    %v1688 = vpop.f32.mrf.mxu0
    %v1689 = vadd.f32 0.0, %v1688
    %v1690 = vpop.f32.mrf.mxu0
    %1691 = vmatprep.mubr.bf16.mxu0 0
    %1692 = vmatmul.mubr.bf16.gmra.mxu0 %v1649
    %v1693 = vpop.f32.mrf.mxu0
    %v1694 = vadd.f32 0.0, %v1693
    %v1695 = vpop.f32.mrf.mxu0
    %v1696 = vpop.f32.mrf.mxu0
    %v1697 = vadd.f32 0.0, %v1696
    %v1698 = vpop.f32.mrf.mxu0
    %1699 = vdwg.mxu0
    %v1701 = vsel %vm1184, %v1639, 0
    %v1704 = vsel %vm1184, %v1640, 0
    %1706 = vmatprep.subr.bf16.mxu0 0
    %1707 = vmatpush1.bf16.msra.mxu0 0
    %1708 = vmatprep.subr.bf16.mxu0 0
    %1709 = vmatpush1.bf16.msra.mxu0 0
    %1710 = vmatprep.subr.bf16.mxu0 0
    %1711 = vmatpush1.bf16.msra.mxu0 0
    %1712 = vmatprep.subr.bf16.mxu0 0
    %1713 = vmatpush1.bf16.msra.mxu0 0
    %1714 = vmatprep.subr.bf16.mxu0 0
    %1715 = vmatpush1.bf16.msra.mxu0 0
    %1716 = vmatprep.subr.bf16.mxu0 0
    %1717 = vmatpush1.bf16.msra.mxu0 0
    %1718 = vmatprep.subr.bf16.mxu0 0
    %1719 = vmatpush1.bf16.msra.mxu0 %v1179
    %1720 = vmatprep.subr.bf16.mxu0 0
    %1721 = vmatpush1.bf16.msra.mxu0 %v1178
    %1722 = vmatprep.subr.bf16.mxu0 0
    %1723 = vmatpush2.bf16.msra.mxu0 0
    %1724 = vmatprep.subr.bf16.mxu0 0
    %1725 = vmatpush2.bf16.msra.mxu0 0
    %1726 = vmatprep.subr.bf16.mxu0 0
    %1727 = vmatpush2.bf16.msra.mxu0 0
    %1728 = vmatprep.subr.bf16.mxu0 0
    %1729 = vmatpush2.bf16.msra.mxu0 0
    %1730 = vmatprep.subr.bf16.mxu0 0
    %1731 = vmatpush2.bf16.msra.mxu0 0
    %1732 = vmatprep.subr.bf16.mxu0 0
    %1733 = vmatpush2.bf16.msra.mxu0 0
    %1734 = vmatprep.subr.bf16.mxu0 0
    %1735 = vmatpush2.bf16.msra.mxu0 0
    %1736 = vmatprep.subr.bf16.mxu0 0
    %1737 = vmatpush2.bf16.msra.mxu0 0
    %1738 = vmatprep.mubr.bf16.mxu0 0
    %1739 = vmatmul.mubr.bf16.gmra.mxu0 %v1701
    %v1740 = vpop.f32.mrf.mxu0
    %v1741 = vadd.f32 0.0, %v1740
    %v1742 = vpop.f32.mrf.mxu0
    %v1743 = vpop.f32.mrf.mxu0
    %v1744 = vadd.f32 0.0, %v1743
    %v1745 = vpop.f32.mrf.mxu0
    %1746 = vmatprep.mubr.bf16.mxu0 0
    %1747 = vmatmul.mubr.bf16.gmra.mxu0 %v1704
    %v1748 = vpop.f32.mrf.mxu0
    %v1749 = vadd.f32 0.0, %v1748
    %v1750 = vpop.f32.mrf.mxu0
    %v1751 = vpop.f32.mrf.mxu0
    %v1752 = vadd.f32 0.0, %v1751
    %v1753 = vpop.f32.mrf.mxu0
    %1754 = vdwg.mxu0
    %v1756 = vsel %vm1184, %v1641, 0
    %v1759 = vsel %vm1184, %v1642, 0
    %1761 = vmatprep.subr.bf16.mxu0 0
    %1762 = vmatpush1.bf16.msra.mxu0 0
    %1763 = vmatprep.subr.bf16.mxu0 0
    %1764 = vmatpush1.bf16.msra.mxu0 0
    %1765 = vmatprep.subr.bf16.mxu0 0
    %1766 = vmatpush1.bf16.msra.mxu0 0
    %1767 = vmatprep.subr.bf16.mxu0 0
    %1768 = vmatpush1.bf16.msra.mxu0 0
    %1769 = vmatprep.subr.bf16.mxu0 0
    %1770 = vmatpush1.bf16.msra.mxu0 0
    %1771 = vmatprep.subr.bf16.mxu0 0
    %1772 = vmatpush1.bf16.msra.mxu0 0
    %1773 = vmatprep.subr.bf16.mxu0 0
    %1774 = vmatpush1.bf16.msra.mxu0 %v1181
    %1775 = vmatprep.subr.bf16.mxu0 0
    %1776 = vmatpush1.bf16.msra.mxu0 %v1180
    %1777 = vmatprep.subr.bf16.mxu0 0
    %1778 = vmatpush2.bf16.msra.mxu0 0
    %1779 = vmatprep.subr.bf16.mxu0 0
    %1780 = vmatpush2.bf16.msra.mxu0 0
    %1781 = vmatprep.subr.bf16.mxu0 0
    %1782 = vmatpush2.bf16.msra.mxu0 0
    %1783 = vmatprep.subr.bf16.mxu0 0
    %1784 = vmatpush2.bf16.msra.mxu0 0
    %1785 = vmatprep.subr.bf16.mxu0 0
    %1786 = vmatpush2.bf16.msra.mxu0 0
    %1787 = vmatprep.subr.bf16.mxu0 0
    %1788 = vmatpush2.bf16.msra.mxu0 0
    %1789 = vmatprep.subr.bf16.mxu0 0
    %1790 = vmatpush2.bf16.msra.mxu0 0
    %1791 = vmatprep.subr.bf16.mxu0 0
    %1792 = vmatpush2.bf16.msra.mxu0 0
    %1793 = vmatprep.mubr.bf16.mxu0 0
    %1794 = vmatmul.mubr.bf16.gmra.mxu0 %v1756
    %v1795 = vpop.f32.mrf.mxu0
    %v1796 = vadd.f32 0.0, %v1795
    %v1797 = vpop.f32.mrf.mxu0
    %v1798 = vpop.f32.mrf.mxu0
    %v1799 = vadd.f32 0.0, %v1798
    %v1800 = vpop.f32.mrf.mxu0
    %1801 = vmatprep.mubr.bf16.mxu0 0
    %1802 = vmatmul.mubr.bf16.gmra.mxu0 %v1759
    %v1803 = vpop.f32.mrf.mxu0
    %v1804 = vadd.f32 0.0, %v1803
    %v1805 = vpop.f32.mrf.mxu0
    %v1806 = vpop.f32.mrf.mxu0
    %v1807 = vadd.f32 0.0, %v1806
    %v1808 = vpop.f32.mrf.mxu0
    %1809 = vdwg.mxu0
    %v1811 = vsel %vm1184, %v1643, 0
    %v1814 = vsel %vm1184, %v1644, 0
    %1816 = vmatprep.subr.bf16.mxu0 0
    %1817 = vmatpush1.bf16.msra.mxu0 0
    %1818 = vmatprep.subr.bf16.mxu0 0
    %1819 = vmatpush1.bf16.msra.mxu0 0
    %1820 = vmatprep.subr.bf16.mxu0 0
    %1821 = vmatpush1.bf16.msra.mxu0 0
    %1822 = vmatprep.subr.bf16.mxu0 0
    %1823 = vmatpush1.bf16.msra.mxu0 0
    %1824 = vmatprep.subr.bf16.mxu0 0
    %1825 = vmatpush1.bf16.msra.mxu0 0
    %1826 = vmatprep.subr.bf16.mxu0 0
    %1827 = vmatpush1.bf16.msra.mxu0 0
    %1828 = vmatprep.subr.bf16.mxu0 0
    %1829 = vmatpush1.bf16.msra.mxu0 %v1183
    %1830 = vmatprep.subr.bf16.mxu0 0
    %1831 = vmatpush1.bf16.msra.mxu0 %v1182
    %1832 = vmatprep.subr.bf16.mxu0 0
    %1833 = vmatpush2.bf16.msra.mxu0 0
    %1834 = vmatprep.subr.bf16.mxu0 0
    %1835 = vmatpush2.bf16.msra.mxu0 0
    %1836 = vmatprep.subr.bf16.mxu0 0
    %1837 = vmatpush2.bf16.msra.mxu0 0
    %1838 = vmatprep.subr.bf16.mxu0 0
    %1839 = vmatpush2.bf16.msra.mxu0 0
    %1840 = vmatprep.subr.bf16.mxu0 0
    %1841 = vmatpush2.bf16.msra.mxu0 0
    %1842 = vmatprep.subr.bf16.mxu0 0
    %1843 = vmatpush2.bf16.msra.mxu0 0
    %1844 = vmatprep.subr.bf16.mxu0 0
    %1845 = vmatpush2.bf16.msra.mxu0 0
    %1846 = vmatprep.subr.bf16.mxu0 0
    %1847 = vmatpush2.bf16.msra.mxu0 0
    %1848 = vmatprep.mubr.bf16.mxu0 0
    %1849 = vmatmul.mubr.bf16.gmra.mxu0 %v1811
    %v1850 = vpop.f32.mrf.mxu0
    %v1851 = vadd.f32 0.0, %v1850
    %v1852 = vpop.f32.mrf.mxu0
    %v1853 = vpop.f32.mrf.mxu0
    %v1854 = vadd.f32 0.0, %v1853
    %v1855 = vpop.f32.mrf.mxu0
    %1856 = vmatprep.mubr.bf16.mxu0 0
    %1857 = vmatmul.mubr.bf16.gmra.mxu0 %v1814
    %v1858 = vpop.f32.mrf.mxu0
    %v1859 = vadd.f32 0.0, %v1858
    %v1860 = vpop.f32.mrf.mxu0
    %v1861 = vpop.f32.mrf.mxu0
    %v1862 = vadd.f32 0.0, %v1861
    %v1863 = vpop.f32.mrf.mxu0
    %1864 = vdwg.mxu0
    %1865 = vxpose.xlu0.b32.start [1/16] %v1686, 128
    %1866 = vxpose.xlu0.b32.cont [2/16] %v1689, 128
    %1867 = vxpose.xlu0.b32.cont [3/16] %v1694, 128
    %1868 = vxpose.xlu0.b32.cont [4/16] %v1697, 128
    %1869 = vxpose.xlu0.b32.cont [5/16] 0.0, 128
    %1870 = vxpose.xlu0.b32.cont [6/16] 0.0, 128
    %1871 = vxpose.xlu0.b32.cont [7/16] 0.0, 128
    %1872 = vxpose.xlu0.b32.cont [8/16] 0.0, 128
    %1873 = vxpose.xlu0.b32.cont [9/16] 0.0, 128
    %1874 = vxpose.xlu0.b32.cont [10/16] 0.0, 128
    %1875 = vxpose.xlu0.b32.cont [11/16] 0.0, 128
    %1876 = vxpose.xlu0.b32.cont [12/16] 0.0, 128
    %1877 = vxpose.xlu0.b32.cont [13/16] 0.0, 128
    %1878 = vxpose.xlu0.b32.cont [14/16] 0.0, 128
    %1879 = vxpose.xlu0.b32.cont [15/16] 0.0, 128
    %1880 = vxpose.xlu0.b32.end [16/16] 0.0, 128
    %v1881 = vpop.trf.xlu0
    %v1882 = vpop.trf.xlu0
    %v1883 = vpop.trf.xlu0
    %v1884 = vpop.trf.xlu0
    %v1885 = vpop.trf.xlu0
    %v1886 = vpop.trf.xlu0
    %v1887 = vpop.trf.xlu0
    %v1888 = vpop.trf.xlu0
    %v1889 = vpop.trf.xlu0
    %v1890 = vpop.trf.xlu0
    %v1891 = vpop.trf.xlu0
    %v1892 = vpop.trf.xlu0
    %v1893 = vpop.trf.xlu0
    %v1894 = vpop.trf.xlu0
    %v1895 = vpop.trf.xlu0
    %v1896 = vpop.trf.xlu0
    %1897 = vxpose.xlu0.b32.start [1/16] %v1741, 128
    %1898 = vxpose.xlu0.b32.cont [2/16] %v1744, 128
    %1899 = vxpose.xlu0.b32.cont [3/16] %v1749, 128
    %1900 = vxpose.xlu0.b32.cont [4/16] %v1752, 128
    %1901 = vxpose.xlu0.b32.cont [5/16] 0.0, 128
    %1902 = vxpose.xlu0.b32.cont [6/16] 0.0, 128
    %1903 = vxpose.xlu0.b32.cont [7/16] 0.0, 128
    %1904 = vxpose.xlu0.b32.cont [8/16] 0.0, 128
    %1905 = vxpose.xlu0.b32.cont [9/16] 0.0, 128
    %1906 = vxpose.xlu0.b32.cont [10/16] 0.0, 128
    %1907 = vxpose.xlu0.b32.cont [11/16] 0.0, 128
    %1908 = vxpose.xlu0.b32.cont [12/16] 0.0, 128
    %1909 = vxpose.xlu0.b32.cont [13/16] 0.0, 128
    %1910 = vxpose.xlu0.b32.cont [14/16] 0.0, 128
    %1911 = vxpose.xlu0.b32.cont [15/16] 0.0, 128
    %1912 = vxpose.xlu0.b32.end [16/16] 0.0, 128
    %v1913 = vpop.trf.xlu0
    %v1914 = vpop.trf.xlu0
    %v1915 = vpop.trf.xlu0
    %v1916 = vpop.trf.xlu0
    %v1917 = vpop.trf.xlu0
    %v1918 = vpop.trf.xlu0
    %v1919 = vpop.trf.xlu0
    %v1920 = vpop.trf.xlu0
    %v1921 = vpop.trf.xlu0
    %v1922 = vpop.trf.xlu0
    %v1923 = vpop.trf.xlu0
    %v1924 = vpop.trf.xlu0
    %v1925 = vpop.trf.xlu0
    %v1926 = vpop.trf.xlu0
    %v1927 = vpop.trf.xlu0
    %v1928 = vpop.trf.xlu0
    %1929 = vxpose.xlu0.b32.start [1/16] %v1796, 128
    %1930 = vxpose.xlu0.b32.cont [2/16] %v1799, 128
    %1931 = vxpose.xlu0.b32.cont [3/16] %v1804, 128
    %1932 = vxpose.xlu0.b32.cont [4/16] %v1807, 128
    %1933 = vxpose.xlu0.b32.cont [5/16] 0.0, 128
    %1934 = vxpose.xlu0.b32.cont [6/16] 0.0, 128
    %1935 = vxpose.xlu0.b32.cont [7/16] 0.0, 128
    %1936 = vxpose.xlu0.b32.cont [8/16] 0.0, 128
    %1937 = vxpose.xlu0.b32.cont [9/16] 0.0, 128
    %1938 = vxpose.xlu0.b32.cont [10/16] 0.0, 128
    %1939 = vxpose.xlu0.b32.cont [11/16] 0.0, 128
    %1940 = vxpose.xlu0.b32.cont [12/16] 0.0, 128
    %1941 = vxpose.xlu0.b32.cont [13/16] 0.0, 128
    %1942 = vxpose.xlu0.b32.cont [14/16] 0.0, 128
    %1943 = vxpose.xlu0.b32.cont [15/16] 0.0, 128
    %1944 = vxpose.xlu0.b32.end [16/16] 0.0, 128
    %v1945 = vpop.trf.xlu0
    %v1946 = vpop.trf.xlu0
    %v1947 = vpop.trf.xlu0
    %v1948 = vpop.trf.xlu0
    %v1949 = vpop.trf.xlu0
    %v1950 = vpop.trf.xlu0
    %v1951 = vpop.trf.xlu0
    %v1952 = vpop.trf.xlu0
    %v1953 = vpop.trf.xlu0
    %v1954 = vpop.trf.xlu0
    %v1955 = vpop.trf.xlu0
    %v1956 = vpop.trf.xlu0
    %v1957 = vpop.trf.xlu0
    %v1958 = vpop.trf.xlu0
    %v1959 = vpop.trf.xlu0
    %v1960 = vpop.trf.xlu0
    %1961 = vxpose.xlu0.b32.start [1/16] %v1851, 128
    %1962 = vxpose.xlu0.b32.cont [2/16] %v1854, 128
    %1963 = vxpose.xlu0.b32.cont [3/16] %v1859, 128
    %1964 = vxpose.xlu0.b32.cont [4/16] %v1862, 128
    %1965 = vxpose.xlu0.b32.cont [5/16] 0.0, 128
    %1966 = vxpose.xlu0.b32.cont [6/16] 0.0, 128
    %1967 = vxpose.xlu0.b32.cont [7/16] 0.0, 128
    %1968 = vxpose.xlu0.b32.cont [8/16] 0.0, 128
    %1969 = vxpose.xlu0.b32.cont [9/16] 0.0, 128
    %1970 = vxpose.xlu0.b32.cont [10/16] 0.0, 128
    %1971 = vxpose.xlu0.b32.cont [11/16] 0.0, 128
    %1972 = vxpose.xlu0.b32.cont [12/16] 0.0, 128
    %1973 = vxpose.xlu0.b32.cont [13/16] 0.0, 128
    %1974 = vxpose.xlu0.b32.cont [14/16] 0.0, 128
    %1975 = vxpose.xlu0.b32.cont [15/16] 0.0, 128
    %1976 = vxpose.xlu0.b32.end [16/16] 0.0, 128
    %v1977 = vpop.trf.xlu0
    %v1978 = vpop.trf.xlu0
    %v1979 = vpop.trf.xlu0
    %v1980 = vpop.trf.xlu0
    %v1981 = vpop.trf.xlu0
    %v1982 = vpop.trf.xlu0
    %v1983 = vpop.trf.xlu0
    %v1984 = vpop.trf.xlu0
    %v1985 = vpop.trf.xlu0
    %v1986 = vpop.trf.xlu0
    %v1987 = vpop.trf.xlu0
    %v1988 = vpop.trf.xlu0
    %v1989 = vpop.trf.xlu0
    %v1990 = vpop.trf.xlu0
    %v1991 = vpop.trf.xlu0
    %v1992 = vpop.trf.xlu0
    %1993 = vxpose.xlu0.b32.start [1/16] %v1881, 128
    %1994 = vxpose.xlu0.b32.cont [2/16] %v1882, 128
    %1995 = vxpose.xlu0.b32.cont [3/16] %v1883, 128
    %1996 = vxpose.xlu0.b32.cont [4/16] %v1884, 128
    %1997 = vxpose.xlu0.b32.cont [5/16] %v1913, 128
    %1998 = vxpose.xlu0.b32.cont [6/16] %v1914, 128
    %1999 = vxpose.xlu0.b32.cont [7/16] %v1915, 128
    %2000 = vxpose.xlu0.b32.cont [8/16] %v1916, 128
    %2001 = vxpose.xlu0.b32.cont [9/16] %v1945, 128
    %2002 = vxpose.xlu0.b32.cont [10/16] %v1946, 128
    %2003 = vxpose.xlu0.b32.cont [11/16] %v1947, 128
    %2004 = vxpose.xlu0.b32.cont [12/16] %v1948, 128
    %2005 = vxpose.xlu0.b32.cont [13/16] %v1977, 128
    %2006 = vxpose.xlu0.b32.cont [14/16] %v1978, 128
    %2007 = vxpose.xlu0.b32.cont [15/16] %v1979, 128
    %2008 = vxpose.xlu0.b32.end [16/16] %v1980, 128
    %v2009 = vpop.trf.xlu0
    %v2010 = vpop.trf.xlu0
    %v2011 = vpop.trf.xlu0
    %v2012 = vpop.trf.xlu0
    %v2013 = vpop.trf.xlu0
    %v2014 = vpop.trf.xlu0
    %v2015 = vpop.trf.xlu0
    %v2016 = vpop.trf.xlu0
    %v2017 = vpop.trf.xlu0
    %v2018 = vpop.trf.xlu0
    %v2019 = vpop.trf.xlu0
    %v2020 = vpop.trf.xlu0
    %v2021 = vpop.trf.xlu0
    %v2022 = vpop.trf.xlu0
    %v2023 = vpop.trf.xlu0
    %v2024 = vpop.trf.xlu0
    %v2025 = vld [vmem:[#allocation7] sm:$0xf]
    %v2026 = vld [vmem:[#allocation7 + $0x4] sm:$0xf]
    %v2027 = vld [vmem:[#allocation7 + $0x8] sm:$0xf]
    %v2028 = vld [vmem:[#allocation7 + $0xc] sm:$0xf]
    %v2029 = vld [vmem:[#allocation7 + $0x10] sm:$0xf]
    %v2030 = vld [vmem:[#allocation7 + $0x14] sm:$0xf]
    %v2031 = vld [vmem:[#allocation7 + $0x18] sm:$0xf]
    %v2032 = vld [vmem:[#allocation7 + $0x1c] sm:$0xf]
    %v2033 = vld [vmem:[#allocation7 + $0x20] sm:$0xf]
    %v2034 = vld [vmem:[#allocation7 + $0x24] sm:$0xf]
    %v2035 = vld [vmem:[#allocation7 + $0x28] sm:$0xf]
    %v2036 = vld [vmem:[#allocation7 + $0x2c] sm:$0xf]
    %v2037 = vld [vmem:[#allocation7 + $0x30] sm:$0xf]
    %v2038 = vld [vmem:[#allocation7 + $0x34] sm:$0xf]
    %v2039 = vld [vmem:[#allocation7 + $0x38] sm:$0xf]
    %v2040 = vld [vmem:[#allocation7 + $0x3c] sm:$0xf]
    %v2041 = vpack.c.bf16 %v2010, %v2009
    %v2042 = vpack.c.bf16 %v2012, %v2011
    %v2043 = vlaneseq
    %v2044 = vshrl.u32 %v2043, 7
    %v2045 = vsub.s32 3, %v2044
    %v2046 = vrot.slane %v154, %v2045
    %v2063 = vunpack.c.l.b16 %v2025
    %v2064 = vunpack.c.l.b16 %v2026
    %v2065 = vunpack.c.l.b16 %v2027
    %v2066 = vunpack.c.l.b16 %v2028
    %v2067 = vunpack.c.l.b16 %v2029
    %v2068 = vunpack.c.l.b16 %v2030
    %v2069 = vunpack.c.l.b16 %v2031
    %v2070 = vunpack.c.l.b16 %v2032
    %v2071 = vunpack.c.l.b16 %v2033
    %v2072 = vunpack.c.l.b16 %v2034
    %v2073 = vunpack.c.l.b16 %v2035
    %v2074 = vunpack.c.l.b16 %v2036
    %v2075 = vunpack.c.l.b16 %v2037
    %v2076 = vunpack.c.l.b16 %v2038
    %v2077 = vunpack.c.l.b16 %v2039
    %v2078 = vunpack.c.l.b16 %v2040
    %v2079 = vpack.c.b16 %v2064, %v2063
    %v2080 = vpack.c.b16 %v2066, %v2065
    %v2081 = vpack.c.b16 %v2068, %v2067
    %v2082 = vpack.c.b16 %v2070, %v2069
    %v2083 = vpack.c.b16 %v2072, %v2071
    %v2084 = vpack.c.b16 %v2074, %v2073
    %v2085 = vpack.c.b16 %v2076, %v2075
    %v2086 = vpack.c.b16 %v2078, %v2077
    %2095 = vmatprep.subr.bf16.mxu0 0
    %2096 = vmatpush1.bf16.msra.mxu0 %v2086
    %2097 = vmatprep.subr.bf16.mxu0 0
    %2098 = vmatpush1.bf16.msra.mxu0 %v2085
    %2099 = vmatprep.subr.bf16.mxu0 0
    %2100 = vmatpush1.bf16.msra.mxu0 %v2084
    %2101 = vmatprep.subr.bf16.mxu0 0
    %2102 = vmatpush1.bf16.msra.mxu0 %v2083
    %2103 = vmatprep.subr.bf16.mxu0 0
    %2104 = vmatpush1.bf16.msra.mxu0 %v2082
    %2105 = vmatprep.subr.bf16.mxu0 0
    %2106 = vmatpush1.bf16.msra.mxu0 %v2081
    %2107 = vmatprep.subr.bf16.mxu0 0
    %2108 = vmatpush1.bf16.msra.mxu0 %v2080
    %2109 = vmatprep.subr.bf16.mxu0 0
    %2110 = vmatpush1.bf16.msra.mxu0 %v2079
    %2111 = vmatprep.subr.bf16.mxu0 0
    %2112 = vmatpush2.bf16.msra.mxu0 0
    %2113 = vmatprep.subr.bf16.mxu0 0
    %2114 = vmatpush2.bf16.msra.mxu0 0
    %2115 = vmatprep.subr.bf16.mxu0 0
    %2116 = vmatpush2.bf16.msra.mxu0 0
    %2117 = vmatprep.subr.bf16.mxu0 0
    %2118 = vmatpush2.bf16.msra.mxu0 0
    %2119 = vmatprep.subr.bf16.mxu0 0
    %2120 = vmatpush2.bf16.msra.mxu0 0
    %2121 = vmatprep.subr.bf16.mxu0 0
    %2122 = vmatpush2.bf16.msra.mxu0 0
    %2123 = vmatprep.subr.bf16.mxu0 0
    %2124 = vmatpush2.bf16.msra.mxu0 0
    %2125 = vmatprep.subr.bf16.mxu0 0
    %2126 = vmatpush2.bf16.msra.mxu0 0
    %2127 = vmatprep.mubr.bf16.mxu0 0
    %2128 = vmatmul.mubr.bf16.gmra.mxu0 %v2041
    %v2129 = vpop.f32.mrf.mxu0
    %v2130 = vadd.f32 %v2046, %v2129
    %v2131 = vpop.f32.mrf.mxu0
    %v2132 = vpop.f32.mrf.mxu0
    %v2133 = vadd.f32 %v2046, %v2132
    %v2134 = vpop.f32.mrf.mxu0
    %2135 = vmatprep.mubr.bf16.mxu0 0
    %2136 = vmatmul.mubr.bf16.gmra.mxu0 %v2042
    %v2137 = vpop.f32.mrf.mxu0
    %v2138 = vadd.f32 %v2046, %v2137
    %v2139 = vpop.f32.mrf.mxu0
    %v2140 = vpop.f32.mrf.mxu0
    %v2141 = vadd.f32 %v2046, %v2140
    %v2142 = vpop.f32.mrf.mxu0
    %2143 = vdwg.mxu0
    %v2144 = vadd.f32 %v361, %v2130
    %v2145 = vadd.f32 %v362, %v2133
    %v2146 = vadd.f32 %v363, %v2138
    %v2147 = vadd.f32 %v364, %v2141
    %2148 = vadd.xlane.f32.xlu0 %v2144
    %v2149 = vpop.xlane.xlu0 %2148
    %2150 = vadd.xlane.f32.xlu0 %v2145
    %v2151 = vpop.xlane.xlu0 %2150
    %2152 = vadd.xlane.f32.xlu0 %v2146
    %v2153 = vpop.xlane.xlu0 %2152
    %2154 = vadd.xlane.f32.xlu0 %v2147
    %v2155 = vpop.xlane.xlu0 %2154
    %v2156 = vmul.f32 %v2149, %v312
    %v2157 = vmul.f32 %v2151, %v312
    %v2158 = vmul.f32 %v2153, %v312
    %v2159 = vmul.f32 %v2155, %v312
    %v2160 = vsub.f32 %v2144, %v2156
    %v2161 = vsub.f32 %v2145, %v2157
    %v2162 = vsub.f32 %v2146, %v2158
    %v2163 = vsub.f32 %v2147, %v2159
    %v2164 = vmul.f32 %v2160, %v2160
    %v2165 = vmul.f32 %v2161, %v2161
    %v2166 = vmul.f32 %v2162, %v2162
    %v2167 = vmul.f32 %v2163, %v2163
    %2168 = vadd.xlane.f32.xlu0 %v2164
    %v2169 = vpop.xlane.xlu0 %2168
    %2170 = vadd.xlane.f32.xlu0 %v2165
    %v2171 = vpop.xlane.xlu0 %2170
    %2172 = vadd.xlane.f32.xlu0 %v2166
    %v2173 = vpop.xlane.xlu0 %2172
    %2174 = vadd.xlane.f32.xlu0 %v2167
    %v2175 = vpop.xlane.xlu0 %2174
    %v2176 = vmul.f32 %v2169, %v312
    %v2177 = vmul.f32 %v2171, %v312
    %v2178 = vmul.f32 %v2173, %v312
    %v2179 = vmul.f32 %v2175, %v312
    %v2180 = vadd.f32 %v2176, 1e-12
    %v2181 = vadd.f32 %v2177, 1e-12
    %v2182 = vadd.f32 %v2178, 1e-12
    %v2183 = vadd.f32 %v2179, 1e-12
    %v2184 = vrsqrt.pop %v2180
    %v2185 = vrsqrt.pop %v2181
    %v2186 = vrsqrt.pop %v2182
    %v2187 = vrsqrt.pop %v2183
    %v2188 = vmul.f32 %v2160, %v2184
    %v2189 = vmul.f32 %v2161, %v2185
    %v2190 = vmul.f32 %v2162, %v2186
    %v2191 = vmul.f32 %v2163, %v2187
    %v2192 = vlaneseq
    %v2193 = vshrl.u32 %v2192, 7
    %v2194 = vsub.s32 4, %v2193
    %v2195 = vrot.slane %v154, %v2194
    %v2196 = vmul.f32 %v2188, %v2195
    %v2197 = vmul.f32 %v2189, %v2195
    %v2198 = vmul.f32 %v2190, %v2195
    %v2199 = vmul.f32 %v2191, %v2195
    %v2200 = vlaneseq
    %v2201 = vshrl.u32 %v2200, 7
    %v2202 = vsub.s32 5, %v2201
    %v2203 = vrot.slane %v154, %v2202
    %v2204 = vadd.f32 %v2196, %v2203
    %v2205 = vadd.f32 %v2197, %v2203
    %v2206 = vadd.f32 %v2198, %v2203
    %v2207 = vadd.f32 %v2199, %v2203
    %v2208 = vld [vmem:[#allocation9] sm:$0xff]
    %v2209 = vld [vmem:[#allocation9 + $0x8] sm:$0xff]
    %v2210 = vld [vmem:[#allocation9 + $0x10] sm:$0xff]
    %v2211 = vld [vmem:[#allocation9 + $0x18] sm:$0xff]
    %v2212 = vld [vmem:[#allocation9 + $0x20] sm:$0xff]
    %v2213 = vld [vmem:[#allocation9 + $0x28] sm:$0xff]
    %v2214 = vld [vmem:[#allocation9 + $0x30] sm:$0xff]
    %v2215 = vld [vmem:[#allocation9 + $0x38] sm:$0xff]
    %v2216 = vld [vmem:[#allocation9 + $0x40] sm:$0xff]
    %v2217 = vld [vmem:[#allocation9 + $0x48] sm:$0xff]
    %v2218 = vld [vmem:[#allocation9 + $0x50] sm:$0xff]
    %v2219 = vld [vmem:[#allocation9 + $0x58] sm:$0xff]
    %v2220 = vld [vmem:[#allocation9 + $0x60] sm:$0xff]
    %v2221 = vld [vmem:[#allocation9 + $0x68] sm:$0xff]
    %v2222 = vld [vmem:[#allocation9 + $0x70] sm:$0xff]
    %v2223 = vld [vmem:[#allocation9 + $0x78] sm:$0xff]
    %v2224 = vpack.c.bf16 %v2205, %v2204
    %v2225 = vpack.c.bf16 %v2207, %v2206
    %v2226 = vlaneseq
    %v2227 = vshrl.u32 %v2226, 7
    %v2228 = vsub.s32 6, %v2227
    %v2229 = vrot.slane %v154, %v2228
    %v2230 = vlaneseq
    %v2231 = vshrl.u32 %v2230, 7
    %v2232 = vsub.s32 6, %v2231
    %v2233 = vrot.slane %v155, %v2232
    %v2250 = vunpack.c.l.b16 %v2208
    %v2251 = vunpack.c.h.b16 %v2208
    %v2252 = vunpack.c.l.b16 %v2209
    %v2253 = vunpack.c.h.b16 %v2209
    %v2254 = vunpack.c.l.b16 %v2210
    %v2255 = vunpack.c.h.b16 %v2210
    %v2256 = vunpack.c.l.b16 %v2211
    %v2257 = vunpack.c.h.b16 %v2211
    %v2258 = vunpack.c.l.b16 %v2212
    %v2259 = vunpack.c.h.b16 %v2212
    %v2260 = vunpack.c.l.b16 %v2213
    %v2261 = vunpack.c.h.b16 %v2213
    %v2262 = vunpack.c.l.b16 %v2214
    %v2263 = vunpack.c.h.b16 %v2214
    %v2264 = vunpack.c.l.b16 %v2215
    %v2265 = vunpack.c.h.b16 %v2215
    %v2266 = vunpack.c.l.b16 %v2216
    %v2267 = vunpack.c.h.b16 %v2216
    %v2268 = vunpack.c.l.b16 %v2217
    %v2269 = vunpack.c.h.b16 %v2217
    %v2270 = vunpack.c.l.b16 %v2218
    %v2271 = vunpack.c.h.b16 %v2218
    %v2272 = vunpack.c.l.b16 %v2219
    %v2273 = vunpack.c.h.b16 %v2219
    %v2274 = vunpack.c.l.b16 %v2220
    %v2275 = vunpack.c.h.b16 %v2220
    %v2276 = vunpack.c.l.b16 %v2221
    %v2277 = vunpack.c.h.b16 %v2221
    %v2278 = vunpack.c.l.b16 %v2222
    %v2279 = vunpack.c.h.b16 %v2222
    %v2280 = vunpack.c.l.b16 %v2223
    %v2281 = vunpack.c.h.b16 %v2223
    %v2282 = vpack.c.b16 %v2252, %v2250
    %v2283 = vpack.c.b16 %v2253, %v2251
    %v2284 = vpack.c.b16 %v2256, %v2254
    %v2285 = vpack.c.b16 %v2257, %v2255
    %v2286 = vpack.c.b16 %v2260, %v2258
    %v2287 = vpack.c.b16 %v2261, %v2259
    %v2288 = vpack.c.b16 %v2264, %v2262
    %v2289 = vpack.c.b16 %v2265, %v2263
    %v2290 = vpack.c.b16 %v2268, %v2266
    %v2291 = vpack.c.b16 %v2269, %v2267
    %v2292 = vpack.c.b16 %v2272, %v2270
    %v2293 = vpack.c.b16 %v2273, %v2271
    %v2294 = vpack.c.b16 %v2276, %v2274
    %v2295 = vpack.c.b16 %v2277, %v2275
    %v2296 = vpack.c.b16 %v2280, %v2278
    %v2297 = vpack.c.b16 %v2281, %v2279
    %2314 = vmatprep.subr.bf16.mxu0 %v2297
    %2315 = vmatpush1.bf16.msra.mxu0 %v2296
    %2316 = vmatprep.subr.bf16.mxu0 %v2295
    %2317 = vmatpush1.bf16.msra.mxu0 %v2294
    %2318 = vmatprep.subr.bf16.mxu0 %v2293
    %2319 = vmatpush1.bf16.msra.mxu0 %v2292
    %2320 = vmatprep.subr.bf16.mxu0 %v2291
    %2321 = vmatpush1.bf16.msra.mxu0 %v2290
    %2322 = vmatprep.subr.bf16.mxu0 %v2289
    %2323 = vmatpush1.bf16.msra.mxu0 %v2288
    %2324 = vmatprep.subr.bf16.mxu0 %v2287
    %2325 = vmatpush1.bf16.msra.mxu0 %v2286
    %2326 = vmatprep.subr.bf16.mxu0 %v2285
    %2327 = vmatpush1.bf16.msra.mxu0 %v2284
    %2328 = vmatprep.subr.bf16.mxu0 %v2283
    %2329 = vmatpush1.bf16.msra.mxu0 %v2282
    %2330 = vmatprep.subr.bf16.mxu0 0
    %2331 = vmatpush2.bf16.msra.mxu0 0
    %2332 = vmatprep.subr.bf16.mxu0 0
    %2333 = vmatpush2.bf16.msra.mxu0 0
    %2334 = vmatprep.subr.bf16.mxu0 0
    %2335 = vmatpush2.bf16.msra.mxu0 0
    %2336 = vmatprep.subr.bf16.mxu0 0
    %2337 = vmatpush2.bf16.msra.mxu0 0
    %2338 = vmatprep.subr.bf16.mxu0 0
    %2339 = vmatpush2.bf16.msra.mxu0 0
    %2340 = vmatprep.subr.bf16.mxu0 0
    %2341 = vmatpush2.bf16.msra.mxu0 0
    %2342 = vmatprep.subr.bf16.mxu0 0
    %2343 = vmatpush2.bf16.msra.mxu0 0
    %2344 = vmatprep.subr.bf16.mxu0 0
    %2345 = vmatpush2.bf16.msra.mxu0 0
    %2346 = vmatprep.mubr.bf16.mxu0 0
    %2347 = vmatmul.mubr.bf16.gmra.mxu0 %v2224
    %v2348 = vpop.f32.mrf.mxu0
    %v2349 = vadd.f32 %v2229, %v2348
    %v2350 = vpop.f32.mrf.mxu0
    %v2351 = vadd.f32 %v2233, %v2350
    %v2352 = vpop.f32.mrf.mxu0
    %v2353 = vadd.f32 %v2229, %v2352
    %v2354 = vpop.f32.mrf.mxu0
    %v2355 = vadd.f32 %v2233, %v2354
    %2356 = vmatprep.mubr.bf16.mxu0 0
    %2357 = vmatmul.mubr.bf16.gmra.mxu0 %v2225
    %v2358 = vpop.f32.mrf.mxu0
    %v2359 = vadd.f32 %v2229, %v2358
    %v2360 = vpop.f32.mrf.mxu0
    %v2361 = vadd.f32 %v2233, %v2360
    %v2362 = vpop.f32.mrf.mxu0
    %v2363 = vadd.f32 %v2229, %v2362
    %v2364 = vpop.f32.mrf.mxu0
    %v2365 = vadd.f32 %v2233, %v2364
    %2366 = vdwg.mxu0
    %v2367 = vmul.f32 %v2349, %v2349
    %v2368 = vmul.f32 %v2351, %v2351
    %v2369 = vmul.f32 %v2353, %v2353
    %v2370 = vmul.f32 %v2355, %v2355
    %v2371 = vmul.f32 %v2359, %v2359
    %v2372 = vmul.f32 %v2361, %v2361
    %v2373 = vmul.f32 %v2363, %v2363
    %v2374 = vmul.f32 %v2365, %v2365
    %v2375 = vmul.f32 %v2349, %v2367
    %v2376 = vmul.f32 %v2351, %v2368
    %v2377 = vmul.f32 %v2353, %v2369
    %v2378 = vmul.f32 %v2355, %v2370
    %v2379 = vmul.f32 %v2359, %v2371
    %v2380 = vmul.f32 %v2361, %v2372
    %v2381 = vmul.f32 %v2363, %v2373
    %v2382 = vmul.f32 %v2365, %v2374
    %v2383 = vmul.f32 %v2375, 0.044715
    %v2384 = vmul.f32 %v2376, 0.044715
    %v2385 = vmul.f32 %v2377, 0.044715
    %v2386 = vmul.f32 %v2378, 0.044715
    %v2387 = vmul.f32 %v2379, 0.044715
    %v2388 = vmul.f32 %v2380, 0.044715
    %v2389 = vmul.f32 %v2381, 0.044715
    %v2390 = vmul.f32 %v2382, 0.044715
    %v2391 = vadd.f32 %v2349, %v2383
    %v2392 = vadd.f32 %v2351, %v2384
    %v2393 = vadd.f32 %v2353, %v2385
    %v2394 = vadd.f32 %v2355, %v2386
    %v2395 = vadd.f32 %v2359, %v2387
    %v2396 = vadd.f32 %v2361, %v2388
    %v2397 = vadd.f32 %v2363, %v2389
    %v2398 = vadd.f32 %v2365, %v2390
    %v2399 = vmul.f32 %v2391, 0.7978846
    %v2400 = vmul.f32 %v2392, 0.7978846
    %v2401 = vmul.f32 %v2393, 0.7978846
    %v2402 = vmul.f32 %v2394, 0.7978846
    %v2403 = vmul.f32 %v2395, 0.7978846
    %v2404 = vmul.f32 %v2396, 0.7978846
    %v2405 = vmul.f32 %v2397, 0.7978846
    %v2406 = vmul.f32 %v2398, 0.7978846
    %v2407 = vtanh.pop %v2399
    %v2408 = vtanh.pop %v2400
    %v2409 = vtanh.pop %v2401
    %v2410 = vtanh.pop %v2402
    %v2411 = vtanh.pop %v2403
    %v2412 = vtanh.pop %v2404
    %v2413 = vtanh.pop %v2405
    %v2414 = vtanh.pop %v2406
    %v2415 = vadd.f32 %v2407, 1.0
    %v2416 = vadd.f32 %v2408, 1.0
    %v2417 = vadd.f32 %v2409, 1.0
    %v2418 = vadd.f32 %v2410, 1.0
    %v2419 = vadd.f32 %v2411, 1.0
    %v2420 = vadd.f32 %v2412, 1.0
    %v2421 = vadd.f32 %v2413, 1.0
    %v2422 = vadd.f32 %v2414, 1.0
    %v2423 = vmul.f32 %v2415, 0.5
    %v2424 = vmul.f32 %v2416, 0.5
    %v2425 = vmul.f32 %v2417, 0.5
    %v2426 = vmul.f32 %v2418, 0.5
    %v2427 = vmul.f32 %v2419, 0.5
    %v2428 = vmul.f32 %v2420, 0.5
    %v2429 = vmul.f32 %v2421, 0.5
    %v2430 = vmul.f32 %v2422, 0.5
    %v2431 = vmul.f32 %v2349, %v2423
    %v2432 = vmul.f32 %v2351, %v2424
    %v2433 = vmul.f32 %v2353, %v2425
    %v2434 = vmul.f32 %v2355, %v2426
    %v2435 = vmul.f32 %v2359, %v2427
    %v2436 = vmul.f32 %v2361, %v2428
    %v2437 = vmul.f32 %v2363, %v2429
    %v2438 = vmul.f32 %v2365, %v2430
    %v2439 = vld [vmem:[#allocation10] sm:$0xf]
    %v2440 = vld [vmem:[#allocation10 + $0x4] sm:$0xf]
    %v2441 = vld [vmem:[#allocation10 + $0x8] sm:$0xf]
    %v2442 = vld [vmem:[#allocation10 + $0xc] sm:$0xf]
    %v2443 = vld [vmem:[#allocation10 + $0x10] sm:$0xf]
    %v2444 = vld [vmem:[#allocation10 + $0x14] sm:$0xf]
    %v2445 = vld [vmem:[#allocation10 + $0x18] sm:$0xf]
    %v2446 = vld [vmem:[#allocation10 + $0x1c] sm:$0xf]
    %v2447 = vld [vmem:[#allocation10 + $0x20] sm:$0xf]
    %v2448 = vld [vmem:[#allocation10 + $0x24] sm:$0xf]
    %v2449 = vld [vmem:[#allocation10 + $0x28] sm:$0xf]
    %v2450 = vld [vmem:[#allocation10 + $0x2c] sm:$0xf]
    %v2451 = vld [vmem:[#allocation10 + $0x30] sm:$0xf]
    %v2452 = vld [vmem:[#allocation10 + $0x34] sm:$0xf]
    %v2453 = vld [vmem:[#allocation10 + $0x38] sm:$0xf]
    %v2454 = vld [vmem:[#allocation10 + $0x3c] sm:$0xf]
    %v2455 = vld [vmem:[#allocation10 + $0x40] sm:$0xf]
    %v2456 = vld [vmem:[#allocation10 + $0x44] sm:$0xf]
    %v2457 = vld [vmem:[#allocation10 + $0x48] sm:$0xf]
    %v2458 = vld [vmem:[#allocation10 + $0x4c] sm:$0xf]
    %v2459 = vld [vmem:[#allocation10 + $0x50] sm:$0xf]
    %v2460 = vld [vmem:[#allocation10 + $0x54] sm:$0xf]
    %v2461 = vld [vmem:[#allocation10 + $0x58] sm:$0xf]
    %v2462 = vld [vmem:[#allocation10 + $0x5c] sm:$0xf]
    %v2463 = vld [vmem:[#allocation10 + $0x60] sm:$0xf]
    %v2464 = vld [vmem:[#allocation10 + $0x64] sm:$0xf]
    %v2465 = vld [vmem:[#allocation10 + $0x68] sm:$0xf]
    %v2466 = vld [vmem:[#allocation10 + $0x6c] sm:$0xf]
    %v2467 = vld [vmem:[#allocation10 + $0x70] sm:$0xf]
    %v2468 = vld [vmem:[#allocation10 + $0x74] sm:$0xf]
    %v2469 = vld [vmem:[#allocation10 + $0x78] sm:$0xf]
    %v2470 = vld [vmem:[#allocation10 + $0x7c] sm:$0xf]
    %v2471 = vpack.c.bf16 %v2433, %v2431
    %v2472 = vpack.c.bf16 %v2434, %v2432
    %v2473 = vpack.c.bf16 %v2437, %v2435
    %v2474 = vpack.c.bf16 %v2438, %v2436
    %v2475 = vlaneseq
    %v2476 = vshrl.u32 %v2475, 7
    %v2477 = vsub.s32 7, %v2476
    %v2478 = vrot.slane %v154, %v2477
    %v2511 = vunpack.c.l.b16 %v2439
    %v2512 = vunpack.c.l.b16 %v2440
    %v2513 = vunpack.c.l.b16 %v2441
    %v2514 = vunpack.c.l.b16 %v2442
    %v2515 = vunpack.c.l.b16 %v2443
    %v2516 = vunpack.c.l.b16 %v2444
    %v2517 = vunpack.c.l.b16 %v2445
    %v2518 = vunpack.c.l.b16 %v2446
    %v2519 = vunpack.c.l.b16 %v2447
    %v2520 = vunpack.c.l.b16 %v2448
    %v2521 = vunpack.c.l.b16 %v2449
    %v2522 = vunpack.c.l.b16 %v2450
    %v2523 = vunpack.c.l.b16 %v2451
    %v2524 = vunpack.c.l.b16 %v2452
    %v2525 = vunpack.c.l.b16 %v2453
    %v2526 = vunpack.c.l.b16 %v2454
    %v2527 = vunpack.c.l.b16 %v2455
    %v2528 = vunpack.c.l.b16 %v2456
    %v2529 = vunpack.c.l.b16 %v2457
    %v2530 = vunpack.c.l.b16 %v2458
    %v2531 = vunpack.c.l.b16 %v2459
    %v2532 = vunpack.c.l.b16 %v2460
    %v2533 = vunpack.c.l.b16 %v2461
    %v2534 = vunpack.c.l.b16 %v2462
    %v2535 = vunpack.c.l.b16 %v2463
    %v2536 = vunpack.c.l.b16 %v2464
    %v2537 = vunpack.c.l.b16 %v2465
    %v2538 = vunpack.c.l.b16 %v2466
    %v2539 = vunpack.c.l.b16 %v2467
    %v2540 = vunpack.c.l.b16 %v2468
    %v2541 = vunpack.c.l.b16 %v2469
    %v2542 = vunpack.c.l.b16 %v2470
    %v2543 = vpack.c.b16 %v2512, %v2511
    %v2544 = vpack.c.b16 %v2514, %v2513
    %v2545 = vpack.c.b16 %v2516, %v2515
    %v2546 = vpack.c.b16 %v2518, %v2517
    %v2547 = vpack.c.b16 %v2520, %v2519
    %v2548 = vpack.c.b16 %v2522, %v2521
    %v2549 = vpack.c.b16 %v2524, %v2523
    %v2550 = vpack.c.b16 %v2526, %v2525
    %v2551 = vpack.c.b16 %v2528, %v2527
    %v2552 = vpack.c.b16 %v2530, %v2529
    %v2553 = vpack.c.b16 %v2532, %v2531
    %v2554 = vpack.c.b16 %v2534, %v2533
    %v2555 = vpack.c.b16 %v2536, %v2535
    %v2556 = vpack.c.b16 %v2538, %v2537
    %v2557 = vpack.c.b16 %v2540, %v2539
    %v2558 = vpack.c.b16 %v2542, %v2541
    %2575 = vmatprep.subr.bf16.mxu0 0
    %2576 = vmatpush1.bf16.msra.mxu0 %v2550
    %2577 = vmatprep.subr.bf16.mxu0 0
    %2578 = vmatpush1.bf16.msra.mxu0 %v2549
    %2579 = vmatprep.subr.bf16.mxu0 0
    %2580 = vmatpush1.bf16.msra.mxu0 %v2548
    %2581 = vmatprep.subr.bf16.mxu0 0
    %2582 = vmatpush1.bf16.msra.mxu0 %v2547
    %2583 = vmatprep.subr.bf16.mxu0 0
    %2584 = vmatpush1.bf16.msra.mxu0 %v2546
    %2585 = vmatprep.subr.bf16.mxu0 0
    %2586 = vmatpush1.bf16.msra.mxu0 %v2545
    %2587 = vmatprep.subr.bf16.mxu0 0
    %2588 = vmatpush1.bf16.msra.mxu0 %v2544
    %2589 = vmatprep.subr.bf16.mxu0 0
    %2590 = vmatpush1.bf16.msra.mxu0 %v2543
    %2591 = vmatprep.subr.bf16.mxu0 0
    %2592 = vmatpush2.bf16.msra.mxu0 %v2558
    %2593 = vmatprep.subr.bf16.mxu0 0
    %2594 = vmatpush2.bf16.msra.mxu0 %v2557
    %2595 = vmatprep.subr.bf16.mxu0 0
    %2596 = vmatpush2.bf16.msra.mxu0 %v2556
    %2597 = vmatprep.subr.bf16.mxu0 0
    %2598 = vmatpush2.bf16.msra.mxu0 %v2555
    %2599 = vmatprep.subr.bf16.mxu0 0
    %2600 = vmatpush2.bf16.msra.mxu0 %v2554
    %2601 = vmatprep.subr.bf16.mxu0 0
    %2602 = vmatpush2.bf16.msra.mxu0 %v2553
    %2603 = vmatprep.subr.bf16.mxu0 0
    %2604 = vmatpush2.bf16.msra.mxu0 %v2552
    %2605 = vmatprep.subr.bf16.mxu0 0
    %2606 = vmatpush2.bf16.msra.mxu0 %v2551
    %2607 = vmatprep.mubr.bf16.mxu0 %v2472
    %2608 = vmatmul.mubr.bf16.gmra.mxu0 %v2471
    %v2609 = vpop.f32.mrf.mxu0
    %v2610 = vadd.f32 %v2478, %v2609
    %v2611 = vpop.f32.mrf.mxu0
    %v2612 = vpop.f32.mrf.mxu0
    %v2613 = vadd.f32 %v2478, %v2612
    %v2614 = vpop.f32.mrf.mxu0
    %2615 = vmatprep.mubr.bf16.mxu0 %v2474
    %2616 = vmatmul.mubr.bf16.gmra.mxu0 %v2473
    %v2617 = vpop.f32.mrf.mxu0
    %v2618 = vadd.f32 %v2478, %v2617
    %v2619 = vpop.f32.mrf.mxu0
    %v2620 = vpop.f32.mrf.mxu0
    %v2621 = vadd.f32 %v2478, %v2620
    %v2622 = vpop.f32.mrf.mxu0
    %2623 = vdwg.mxu0
    %v2624 = vadd.f32 %v2204, %v2610
    %v2625 = vadd.f32 %v2205, %v2613
    %v2626 = vadd.f32 %v2206, %v2618
    %v2627 = vadd.f32 %v2207, %v2621
    %2628 = vadd.xlane.f32.xlu0 %v2624
    %v2629 = vpop.xlane.xlu0 %2628
    %2630 = vadd.xlane.f32.xlu0 %v2625
    %v2631 = vpop.xlane.xlu0 %2630
    %2632 = vadd.xlane.f32.xlu0 %v2626
    %v2633 = vpop.xlane.xlu0 %2632
    %2634 = vadd.xlane.f32.xlu0 %v2627
    %v2635 = vpop.xlane.xlu0 %2634
    %v2636 = vmul.f32 %v2629, %v312
    %v2637 = vmul.f32 %v2631, %v312
    %v2638 = vmul.f32 %v2633, %v312
    %v2639 = vmul.f32 %v2635, %v312
    %v2640 = vsub.f32 %v2624, %v2636
    %v2641 = vsub.f32 %v2625, %v2637
    %v2642 = vsub.f32 %v2626, %v2638
    %v2643 = vsub.f32 %v2627, %v2639
    %v2644 = vmul.f32 %v2640, %v2640
    %v2645 = vmul.f32 %v2641, %v2641
    %v2646 = vmul.f32 %v2642, %v2642
    %v2647 = vmul.f32 %v2643, %v2643
    %2648 = vadd.xlane.f32.xlu0 %v2644
    %v2649 = vpop.xlane.xlu0 %2648
    %2650 = vadd.xlane.f32.xlu0 %v2645
    %v2651 = vpop.xlane.xlu0 %2650
    %2652 = vadd.xlane.f32.xlu0 %v2646
    %v2653 = vpop.xlane.xlu0 %2652
    %2654 = vadd.xlane.f32.xlu0 %v2647
    %v2655 = vpop.xlane.xlu0 %2654
    %v2656 = vmul.f32 %v2649, %v312
    %v2657 = vmul.f32 %v2651, %v312
    %v2658 = vmul.f32 %v2653, %v312
    %v2659 = vmul.f32 %v2655, %v312
    %v2660 = vadd.f32 %v2656, 1e-12
    %v2661 = vadd.f32 %v2657, 1e-12
    %v2662 = vadd.f32 %v2658, 1e-12
    %v2663 = vadd.f32 %v2659, 1e-12
    %v2664 = vrsqrt.pop %v2660
    %v2665 = vrsqrt.pop %v2661
    %v2666 = vrsqrt.pop %v2662
    %v2667 = vrsqrt.pop %v2663
    %v2668 = vmul.f32 %v2640, %v2664
    %v2669 = vmul.f32 %v2641, %v2665
    %v2670 = vmul.f32 %v2642, %v2666
    %v2671 = vmul.f32 %v2643, %v2667
    %v2672 = vlaneseq
    %v2673 = vshrl.u32 %v2672, 7
    %v2674 = vsub.s32 0, %v2673
    %v2675 = vrot.slane %v157, %v2674
    %v2676 = vmul.f32 %v2668, %v2675
    %v2677 = vmul.f32 %v2669, %v2675
    %v2678 = vmul.f32 %v2670, %v2675
    %v2679 = vmul.f32 %v2671, %v2675
    %v2680 = vlaneseq
    %v2681 = vshrl.u32 %v2680, 7
    %v2682 = vsub.s32 1, %v2681
    %v2683 = vrot.slane %v157, %v2682
    %v2684 = vadd.f32 %v2676, %v2683
    %v2685 = vadd.f32 %v2677, %v2683
    %v2686 = vadd.f32 %v2678, %v2683
    %v2687 = vadd.f32 %v2679, %v2683
    %s2688 = scalar_lea.vmem [#allocation6], 192
    %v2689 = vld [vmem:[%s2688] sm:$0xff]
    %v2690 = vld [vmem:[%s2688 + $0x8] sm:$0xf]
    %v2691 = vld [vmem:[%s2688 + $0xc] sm:$0xff]
    %v2692 = vld [vmem:[%s2688 + $0x14] sm:$0xf]
    %v2693 = vld [vmem:[%s2688 + $0x18] sm:$0xff]
    %v2694 = vld [vmem:[%s2688 + $0x20] sm:$0xf]
    %v2695 = vld [vmem:[%s2688 + $0x24] sm:$0xff]
    %v2696 = vld [vmem:[%s2688 + $0x2c] sm:$0xf]
    %v2697 = vld [vmem:[%s2688 + $0x30] sm:$0xff]
    %v2698 = vld [vmem:[%s2688 + $0x38] sm:$0xf]
    %v2699 = vld [vmem:[%s2688 + $0x3c] sm:$0xff]
    %v2700 = vld [vmem:[%s2688 + $0x44] sm:$0xf]
    %v2701 = vld [vmem:[%s2688 + $0x48] sm:$0xff]
    %v2702 = vld [vmem:[%s2688 + $0x50] sm:$0xf]
    %v2703 = vld [vmem:[%s2688 + $0x54] sm:$0xff]
    %v2704 = vld [vmem:[%s2688 + $0x5c] sm:$0xf]
    %v2705 = vld [vmem:[%s2688 + $0x60] sm:$0xff]
    %v2706 = vld [vmem:[%s2688 + $0x68] sm:$0xf]
    %v2707 = vld [vmem:[%s2688 + $0x6c] sm:$0xff]
    %v2708 = vld [vmem:[%s2688 + $0x74] sm:$0xf]
    %v2709 = vld [vmem:[%s2688 + $0x78] sm:$0xff]
    %v2710 = vld [vmem:[%s2688 + $0x80] sm:$0xf]
    %v2711 = vld [vmem:[%s2688 + $0x84] sm:$0xff]
    %v2712 = vld [vmem:[%s2688 + $0x8c] sm:$0xf]
    %v2713 = vld [vmem:[%s2688 + $0x90] sm:$0xff]
    %v2714 = vld [vmem:[%s2688 + $0x98] sm:$0xf]
    %v2715 = vld [vmem:[%s2688 + $0x9c] sm:$0xff]
    %v2716 = vld [vmem:[%s2688 + $0xa4] sm:$0xf]
    %v2717 = vld [vmem:[%s2688 + $0xa8] sm:$0xff]
    %v2718 = vld [vmem:[%s2688 + $0xb0] sm:$0xf]
    %v2719 = vld [vmem:[%s2688 + $0xb4] sm:$0xff]
    %v2720 = vld [vmem:[%s2688 + $0xbc] sm:$0xf]
    %v2721 = vpack.c.bf16 %v2685, %v2684
    %v2722 = vpack.c.bf16 %v2687, %v2686
    %v2723 = vlaneseq
    %v2724 = vshrl.u32 %v2723, 7
    %v2725 = vsub.s32 2, %v2724
    %v2726 = vrot.slane %v157, %v2725
    %v2727 = vlaneseq
    %v2728 = vshrl.u32 %v2727, 7
    %v2729 = vsub.s32 2, %v2728
    %v2730 = vrot.slane %v158, %v2729
    %v2731 = vlaneseq
    %v2732 = vshrl.u32 %v2731, 7
    %v2733 = vsub.s32 2, %v2732
    %v2734 = vrot.slane %v159, %v2733
    %v2767 = vunpack.c.l.b16 %v2689
    %v2768 = vunpack.c.h.b16 %v2689
    %v2769 = vunpack.c.l.b16 %v2690
    %v2770 = vunpack.c.l.b16 %v2691
    %v2771 = vunpack.c.h.b16 %v2691
    %v2772 = vunpack.c.l.b16 %v2692
    %v2773 = vunpack.c.l.b16 %v2693
    %v2774 = vunpack.c.h.b16 %v2693
    %v2775 = vunpack.c.l.b16 %v2694
    %v2776 = vunpack.c.l.b16 %v2695
    %v2777 = vunpack.c.h.b16 %v2695
    %v2778 = vunpack.c.l.b16 %v2696
    %v2779 = vunpack.c.l.b16 %v2697
    %v2780 = vunpack.c.h.b16 %v2697
    %v2781 = vunpack.c.l.b16 %v2698
    %v2782 = vunpack.c.l.b16 %v2699
    %v2783 = vunpack.c.h.b16 %v2699
    %v2784 = vunpack.c.l.b16 %v2700
    %v2785 = vunpack.c.l.b16 %v2701
    %v2786 = vunpack.c.h.b16 %v2701
    %v2787 = vunpack.c.l.b16 %v2702
    %v2788 = vunpack.c.l.b16 %v2703
    %v2789 = vunpack.c.h.b16 %v2703
    %v2790 = vunpack.c.l.b16 %v2704
    %v2791 = vunpack.c.l.b16 %v2705
    %v2792 = vunpack.c.h.b16 %v2705
    %v2793 = vunpack.c.l.b16 %v2706
    %v2794 = vunpack.c.l.b16 %v2707
    %v2795 = vunpack.c.h.b16 %v2707
    %v2796 = vunpack.c.l.b16 %v2708
    %v2797 = vunpack.c.l.b16 %v2709
    %v2798 = vunpack.c.h.b16 %v2709
    %v2799 = vunpack.c.l.b16 %v2710
    %v2800 = vunpack.c.l.b16 %v2711
    %v2801 = vunpack.c.h.b16 %v2711
    %v2802 = vunpack.c.l.b16 %v2712
    %v2803 = vunpack.c.l.b16 %v2713
    %v2804 = vunpack.c.h.b16 %v2713
    %v2805 = vunpack.c.l.b16 %v2714
    %v2806 = vunpack.c.l.b16 %v2715
    %v2807 = vunpack.c.h.b16 %v2715
    %v2808 = vunpack.c.l.b16 %v2716
    %v2809 = vunpack.c.l.b16 %v2717
    %v2810 = vunpack.c.h.b16 %v2717
    %v2811 = vunpack.c.l.b16 %v2718
    %v2812 = vunpack.c.l.b16 %v2719
    %v2813 = vunpack.c.h.b16 %v2719
    %v2814 = vunpack.c.l.b16 %v2720
    %v2815 = vpack.c.b16 %v2770, %v2767
    %v2816 = vpack.c.b16 %v2771, %v2768
    %v2817 = vpack.c.b16 %v2772, %v2769
    %v2818 = vpack.c.b16 %v2776, %v2773
    %v2819 = vpack.c.b16 %v2777, %v2774
    %v2820 = vpack.c.b16 %v2778, %v2775
    %v2821 = vpack.c.b16 %v2782, %v2779
    %v2822 = vpack.c.b16 %v2783, %v2780
    %v2823 = vpack.c.b16 %v2784, %v2781
    %v2824 = vpack.c.b16 %v2788, %v2785
    %v2825 = vpack.c.b16 %v2789, %v2786
    %v2826 = vpack.c.b16 %v2790, %v2787
    %v2827 = vpack.c.b16 %v2794, %v2791
    %v2828 = vpack.c.b16 %v2795, %v2792
    %v2829 = vpack.c.b16 %v2796, %v2793
    %v2830 = vpack.c.b16 %v2800, %v2797
    %v2831 = vpack.c.b16 %v2801, %v2798
    %v2832 = vpack.c.b16 %v2802, %v2799
    %v2833 = vpack.c.b16 %v2806, %v2803
    %v2834 = vpack.c.b16 %v2807, %v2804
    %v2835 = vpack.c.b16 %v2808, %v2805
    %v2836 = vpack.c.b16 %v2812, %v2809
    %v2837 = vpack.c.b16 %v2813, %v2810
    %v2838 = vpack.c.b16 %v2814, %v2811
    %2863 = vmatprep.subr.bf16.mxu0 %v2837
    %2864 = vmatpush1.bf16.msra.mxu0 %v2836
    %2865 = vmatprep.subr.bf16.mxu0 %v2834
    %2866 = vmatpush1.bf16.msra.mxu0 %v2833
    %2867 = vmatprep.subr.bf16.mxu0 %v2831
    %2868 = vmatpush1.bf16.msra.mxu0 %v2830
    %2869 = vmatprep.subr.bf16.mxu0 %v2828
    %2870 = vmatpush1.bf16.msra.mxu0 %v2827
    %2871 = vmatprep.subr.bf16.mxu0 %v2825
    %2872 = vmatpush1.bf16.msra.mxu0 %v2824
    %2873 = vmatprep.subr.bf16.mxu0 %v2822
    %2874 = vmatpush1.bf16.msra.mxu0 %v2821
    %2875 = vmatprep.subr.bf16.mxu0 %v2819
    %2876 = vmatpush1.bf16.msra.mxu0 %v2818
    %2877 = vmatprep.subr.bf16.mxu0 %v2816
    %2878 = vmatpush1.bf16.msra.mxu0 %v2815
    %2879 = vmatprep.subr.bf16.mxu0 0
    %2880 = vmatpush2.bf16.msra.mxu0 0
    %2881 = vmatprep.subr.bf16.mxu0 0
    %2882 = vmatpush2.bf16.msra.mxu0 0
    %2883 = vmatprep.subr.bf16.mxu0 0
    %2884 = vmatpush2.bf16.msra.mxu0 0
    %2885 = vmatprep.subr.bf16.mxu0 0
    %2886 = vmatpush2.bf16.msra.mxu0 0
    %2887 = vmatprep.subr.bf16.mxu0 0
    %2888 = vmatpush2.bf16.msra.mxu0 0
    %2889 = vmatprep.subr.bf16.mxu0 0
    %2890 = vmatpush2.bf16.msra.mxu0 0
    %2891 = vmatprep.subr.bf16.mxu0 0
    %2892 = vmatpush2.bf16.msra.mxu0 0
    %2893 = vmatprep.subr.bf16.mxu0 0
    %2894 = vmatpush2.bf16.msra.mxu0 0
    %2895 = vmatprep.mubr.bf16.mxu0 0
    %2896 = vmatmul.mubr.bf16.gmra.mxu0 %v2721
    %v2897 = vpop.f32.mrf.mxu0
    %v2898 = vadd.f32 %v2726, %v2897
    %v2899 = vpop.f32.mrf.mxu0
    %v2900 = vadd.f32 %v2730, %v2899
    %v2901 = vpop.f32.mrf.mxu0
    %v2902 = vadd.f32 %v2726, %v2901
    %v2903 = vpop.f32.mrf.mxu0
    %v2904 = vadd.f32 %v2730, %v2903
    %2905 = vmatprep.mubr.bf16.mxu0 0
    %2906 = vmatmul.mubr.bf16.gmra.mxu0 %v2722
    %v2907 = vpop.f32.mrf.mxu0
    %v2908 = vadd.f32 %v2726, %v2907
    %v2909 = vpop.f32.mrf.mxu0
    %v2910 = vadd.f32 %v2730, %v2909
    %v2911 = vpop.f32.mrf.mxu0
    %v2912 = vadd.f32 %v2726, %v2911
    %v2913 = vpop.f32.mrf.mxu0
    %v2914 = vadd.f32 %v2730, %v2913
    %2915 = vdwg.mxu0
    %2916 = vmatprep.subr.bf16.mxu0 0
    %2917 = vmatpush1.bf16.msra.mxu0 %v2838
    %2918 = vmatprep.subr.bf16.mxu0 0
    %2919 = vmatpush1.bf16.msra.mxu0 %v2835
    %2920 = vmatprep.subr.bf16.mxu0 0
    %2921 = vmatpush1.bf16.msra.mxu0 %v2832
    %2922 = vmatprep.subr.bf16.mxu0 0
    %2923 = vmatpush1.bf16.msra.mxu0 %v2829
    %2924 = vmatprep.subr.bf16.mxu0 0
    %2925 = vmatpush1.bf16.msra.mxu0 %v2826
    %2926 = vmatprep.subr.bf16.mxu0 0
    %2927 = vmatpush1.bf16.msra.mxu0 %v2823
    %2928 = vmatprep.subr.bf16.mxu0 0
    %2929 = vmatpush1.bf16.msra.mxu0 %v2820
    %2930 = vmatprep.subr.bf16.mxu0 0
    %2931 = vmatpush1.bf16.msra.mxu0 %v2817
    %2932 = vmatprep.subr.bf16.mxu0 0
    %2933 = vmatpush2.bf16.msra.mxu0 0
    %2934 = vmatprep.subr.bf16.mxu0 0
    %2935 = vmatpush2.bf16.msra.mxu0 0
    %2936 = vmatprep.subr.bf16.mxu0 0
    %2937 = vmatpush2.bf16.msra.mxu0 0
    %2938 = vmatprep.subr.bf16.mxu0 0
    %2939 = vmatpush2.bf16.msra.mxu0 0
    %2940 = vmatprep.subr.bf16.mxu0 0
    %2941 = vmatpush2.bf16.msra.mxu0 0
    %2942 = vmatprep.subr.bf16.mxu0 0
    %2943 = vmatpush2.bf16.msra.mxu0 0
    %2944 = vmatprep.subr.bf16.mxu0 0
    %2945 = vmatpush2.bf16.msra.mxu0 0
    %2946 = vmatprep.subr.bf16.mxu0 0
    %2947 = vmatpush2.bf16.msra.mxu0 0
    %2948 = vmatprep.mubr.bf16.mxu0 0
    %2949 = vmatmul.mubr.bf16.gmra.mxu0 %v2721
    %v2950 = vpop.f32.mrf.mxu0
    %v2951 = vadd.f32 %v2734, %v2950
    %v2952 = vpop.f32.mrf.mxu0
    %v2953 = vpop.f32.mrf.mxu0
    %v2954 = vadd.f32 %v2734, %v2953
    %v2955 = vpop.f32.mrf.mxu0
    %2956 = vmatprep.mubr.bf16.mxu0 0
    %2957 = vmatmul.mubr.bf16.gmra.mxu0 %v2722
    %v2958 = vpop.f32.mrf.mxu0
    %v2959 = vadd.f32 %v2734, %v2958
    %v2960 = vpop.f32.mrf.mxu0
    %v2961 = vpop.f32.mrf.mxu0
    %v2962 = vadd.f32 %v2734, %v2961
    %v2963 = vpop.f32.mrf.mxu0
    %2964 = vdwg.mxu0
    %2965 = vxpose.xlu0.b32.start [1/16] %v2898, 128
    %2966 = vxpose.xlu0.b32.cont [2/16] %v2902, 128
    %2967 = vxpose.xlu0.b32.cont [3/16] %v2908, 128
    %2968 = vxpose.xlu0.b32.cont [4/16] %v2912, 128
    %2969 = vxpose.xlu0.b32.cont [5/16] 0.0, 128
    %2970 = vxpose.xlu0.b32.cont [6/16] 0.0, 128
    %2971 = vxpose.xlu0.b32.cont [7/16] 0.0, 128
    %2972 = vxpose.xlu0.b32.cont [8/16] 0.0, 128
    %2973 = vxpose.xlu0.b32.cont [9/16] 0.0, 128
    %2974 = vxpose.xlu0.b32.cont [10/16] 0.0, 128
    %2975 = vxpose.xlu0.b32.cont [11/16] 0.0, 128
    %2976 = vxpose.xlu0.b32.cont [12/16] 0.0, 128
    %2977 = vxpose.xlu0.b32.cont [13/16] 0.0, 128
    %2978 = vxpose.xlu0.b32.cont [14/16] 0.0, 128
    %2979 = vxpose.xlu0.b32.cont [15/16] 0.0, 128
    %2980 = vxpose.xlu0.b32.end [16/16] 0.0, 128
    %v2981 = vpop.trf.xlu0
    %v2982 = vpop.trf.xlu0
    %v2983 = vpop.trf.xlu0
    %v2984 = vpop.trf.xlu0
    %v2985 = vpop.trf.xlu0
    %v2986 = vpop.trf.xlu0
    %v2987 = vpop.trf.xlu0
    %v2988 = vpop.trf.xlu0
    %v2989 = vpop.trf.xlu0
    %v2990 = vpop.trf.xlu0
    %v2991 = vpop.trf.xlu0
    %v2992 = vpop.trf.xlu0
    %v2993 = vpop.trf.xlu0
    %v2994 = vpop.trf.xlu0
    %v2995 = vpop.trf.xlu0
    %v2996 = vpop.trf.xlu0
    %2997 = vxpose.xlu0.b32.start [1/16] %v2900, 128
    %2998 = vxpose.xlu0.b32.cont [2/16] %v2904, 128
    %2999 = vxpose.xlu0.b32.cont [3/16] %v2910, 128
    %3000 = vxpose.xlu0.b32.cont [4/16] %v2914, 128
    %3001 = vxpose.xlu0.b32.cont [5/16] 0.0, 128
    %3002 = vxpose.xlu0.b32.cont [6/16] 0.0, 128
    %3003 = vxpose.xlu0.b32.cont [7/16] 0.0, 128
    %3004 = vxpose.xlu0.b32.cont [8/16] 0.0, 128
    %3005 = vxpose.xlu0.b32.cont [9/16] 0.0, 128
    %3006 = vxpose.xlu0.b32.cont [10/16] 0.0, 128
    %3007 = vxpose.xlu0.b32.cont [11/16] 0.0, 128
    %3008 = vxpose.xlu0.b32.cont [12/16] 0.0, 128
    %3009 = vxpose.xlu0.b32.cont [13/16] 0.0, 128
    %3010 = vxpose.xlu0.b32.cont [14/16] 0.0, 128
    %3011 = vxpose.xlu0.b32.cont [15/16] 0.0, 128
    %3012 = vxpose.xlu0.b32.end [16/16] 0.0, 128
    %v3013 = vpop.trf.xlu0
    %v3014 = vpop.trf.xlu0
    %v3015 = vpop.trf.xlu0
    %v3016 = vpop.trf.xlu0
    %v3017 = vpop.trf.xlu0
    %v3018 = vpop.trf.xlu0
    %v3019 = vpop.trf.xlu0
    %v3020 = vpop.trf.xlu0
    %v3021 = vpop.trf.xlu0
    %v3022 = vpop.trf.xlu0
    %v3023 = vpop.trf.xlu0
    %v3024 = vpop.trf.xlu0
    %v3025 = vpop.trf.xlu0
    %v3026 = vpop.trf.xlu0
    %v3027 = vpop.trf.xlu0
    %v3028 = vpop.trf.xlu0
    %3029 = vxpose.xlu0.b32.start [1/16] %v2951, 128
    %3030 = vxpose.xlu0.b32.cont [2/16] %v2954, 128
    %3031 = vxpose.xlu0.b32.cont [3/16] %v2959, 128
    %3032 = vxpose.xlu0.b32.cont [4/16] %v2962, 128
    %3033 = vxpose.xlu0.b32.cont [5/16] 0.0, 128
    %3034 = vxpose.xlu0.b32.cont [6/16] 0.0, 128
    %3035 = vxpose.xlu0.b32.cont [7/16] 0.0, 128
    %3036 = vxpose.xlu0.b32.cont [8/16] 0.0, 128
    %3037 = vxpose.xlu0.b32.cont [9/16] 0.0, 128
    %3038 = vxpose.xlu0.b32.cont [10/16] 0.0, 128
    %3039 = vxpose.xlu0.b32.cont [11/16] 0.0, 128
    %3040 = vxpose.xlu0.b32.cont [12/16] 0.0, 128
    %3041 = vxpose.xlu0.b32.cont [13/16] 0.0, 128
    %3042 = vxpose.xlu0.b32.cont [14/16] 0.0, 128
    %3043 = vxpose.xlu0.b32.cont [15/16] 0.0, 128
    %3044 = vxpose.xlu0.b32.end [16/16] 0.0, 128
    %v3045 = vpop.trf.xlu0
    %v3046 = vpop.trf.xlu0
    %v3047 = vpop.trf.xlu0
    %v3048 = vpop.trf.xlu0
    %v3049 = vpop.trf.xlu0
    %v3050 = vpop.trf.xlu0
    %v3051 = vpop.trf.xlu0
    %v3052 = vpop.trf.xlu0
    %v3053 = vpop.trf.xlu0
    %v3054 = vpop.trf.xlu0
    %v3055 = vpop.trf.xlu0
    %v3056 = vpop.trf.xlu0
    %v3057 = vpop.trf.xlu0
    %v3058 = vpop.trf.xlu0
    %v3059 = vpop.trf.xlu0
    %v3060 = vpop.trf.xlu0
    %3061 = vxpose.xlu0.b32.start [1/16] %v2981, 128
    %3062 = vxpose.xlu0.b32.cont [2/16] %v2982, 128
    %3063 = vxpose.xlu0.b32.cont [3/16] %v2983, 128
    %3064 = vxpose.xlu0.b32.cont [4/16] %v2984, 128
    %3065 = vxpose.xlu0.b32.cont [5/16] 0.0, 128
    %3066 = vxpose.xlu0.b32.cont [6/16] 0.0, 128
    %3067 = vxpose.xlu0.b32.cont [7/16] 0.0, 128
    %3068 = vxpose.xlu0.b32.cont [8/16] 0.0, 128
    %3069 = vxpose.xlu0.b32.cont [9/16] 0.0, 128
    %3070 = vxpose.xlu0.b32.cont [10/16] 0.0, 128
    %3071 = vxpose.xlu0.b32.cont [11/16] 0.0, 128
    %3072 = vxpose.xlu0.b32.cont [12/16] 0.0, 128
    %3073 = vxpose.xlu0.b32.cont [13/16] 0.0, 128
    %3074 = vxpose.xlu0.b32.cont [14/16] 0.0, 128
    %3075 = vxpose.xlu0.b32.cont [15/16] 0.0, 128
    %3076 = vxpose.xlu0.b32.end [16/16] 0.0, 128
    %v3077 = vpop.trf.xlu0
    %v3078 = vpop.trf.xlu0
    %v3079 = vpop.trf.xlu0
    %v3080 = vpop.trf.xlu0
    %v3081 = vpop.trf.xlu0
    %v3082 = vpop.trf.xlu0
    %v3083 = vpop.trf.xlu0
    %v3084 = vpop.trf.xlu0
    %v3085 = vpop.trf.xlu0
    %v3086 = vpop.trf.xlu0
    %v3087 = vpop.trf.xlu0
    %v3088 = vpop.trf.xlu0
    %v3089 = vpop.trf.xlu0
    %v3090 = vpop.trf.xlu0
    %v3091 = vpop.trf.xlu0
    %v3092 = vpop.trf.xlu0
    %3093 = vxpose.xlu0.b32.start [1/16] %v2985, 128
    %3094 = vxpose.xlu0.b32.cont [2/16] %v2986, 128
    %3095 = vxpose.xlu0.b32.cont [3/16] %v2987, 128
    %3096 = vxpose.xlu0.b32.cont [4/16] %v2988, 128
    %3097 = vxpose.xlu0.b32.cont [5/16] 0.0, 128
    %3098 = vxpose.xlu0.b32.cont [6/16] 0.0, 128
    %3099 = vxpose.xlu0.b32.cont [7/16] 0.0, 128
    %3100 = vxpose.xlu0.b32.cont [8/16] 0.0, 128
    %3101 = vxpose.xlu0.b32.cont [9/16] 0.0, 128
    %3102 = vxpose.xlu0.b32.cont [10/16] 0.0, 128
    %3103 = vxpose.xlu0.b32.cont [11/16] 0.0, 128
    %3104 = vxpose.xlu0.b32.cont [12/16] 0.0, 128
    %3105 = vxpose.xlu0.b32.cont [13/16] 0.0, 128
    %3106 = vxpose.xlu0.b32.cont [14/16] 0.0, 128
    %3107 = vxpose.xlu0.b32.cont [15/16] 0.0, 128
    %3108 = vxpose.xlu0.b32.end [16/16] 0.0, 128
    %v3109 = vpop.trf.xlu0
    %v3110 = vpop.trf.xlu0
    %v3111 = vpop.trf.xlu0
    %v3112 = vpop.trf.xlu0
    %v3113 = vpop.trf.xlu0
    %v3114 = vpop.trf.xlu0
    %v3115 = vpop.trf.xlu0
    %v3116 = vpop.trf.xlu0
    %v3117 = vpop.trf.xlu0
    %v3118 = vpop.trf.xlu0
    %v3119 = vpop.trf.xlu0
    %v3120 = vpop.trf.xlu0
    %v3121 = vpop.trf.xlu0
    %v3122 = vpop.trf.xlu0
    %v3123 = vpop.trf.xlu0
    %v3124 = vpop.trf.xlu0
    %3125 = vxpose.xlu0.b32.start [1/16] %v2989, 128
    %3126 = vxpose.xlu0.b32.cont [2/16] %v2990, 128
    %3127 = vxpose.xlu0.b32.cont [3/16] %v2991, 128
    %3128 = vxpose.xlu0.b32.cont [4/16] %v2992, 128
    %3129 = vxpose.xlu0.b32.cont [5/16] 0.0, 128
    %3130 = vxpose.xlu0.b32.cont [6/16] 0.0, 128
    %3131 = vxpose.xlu0.b32.cont [7/16] 0.0, 128
    %3132 = vxpose.xlu0.b32.cont [8/16] 0.0, 128
    %3133 = vxpose.xlu0.b32.cont [9/16] 0.0, 128
    %3134 = vxpose.xlu0.b32.cont [10/16] 0.0, 128
    %3135 = vxpose.xlu0.b32.cont [11/16] 0.0, 128
    %3136 = vxpose.xlu0.b32.cont [12/16] 0.0, 128
    %3137 = vxpose.xlu0.b32.cont [13/16] 0.0, 128
    %3138 = vxpose.xlu0.b32.cont [14/16] 0.0, 128
    %3139 = vxpose.xlu0.b32.cont [15/16] 0.0, 128
    %3140 = vxpose.xlu0.b32.end [16/16] 0.0, 128
    %v3141 = vpop.trf.xlu0
    %v3142 = vpop.trf.xlu0
    %v3143 = vpop.trf.xlu0
    %v3144 = vpop.trf.xlu0
    %v3145 = vpop.trf.xlu0
    %v3146 = vpop.trf.xlu0
    %v3147 = vpop.trf.xlu0
    %v3148 = vpop.trf.xlu0
    %v3149 = vpop.trf.xlu0
    %v3150 = vpop.trf.xlu0
    %v3151 = vpop.trf.xlu0
    %v3152 = vpop.trf.xlu0
    %v3153 = vpop.trf.xlu0
    %v3154 = vpop.trf.xlu0
    %v3155 = vpop.trf.xlu0
    %v3156 = vpop.trf.xlu0
    %3157 = vxpose.xlu0.b32.start [1/16] %v2993, 128
    %3158 = vxpose.xlu0.b32.cont [2/16] %v2994, 128
    %3159 = vxpose.xlu0.b32.cont [3/16] %v2995, 128
    %3160 = vxpose.xlu0.b32.cont [4/16] %v2996, 128
    %3161 = vxpose.xlu0.b32.cont [5/16] 0.0, 128
    %3162 = vxpose.xlu0.b32.cont [6/16] 0.0, 128
    %3163 = vxpose.xlu0.b32.cont [7/16] 0.0, 128
    %3164 = vxpose.xlu0.b32.cont [8/16] 0.0, 128
    %3165 = vxpose.xlu0.b32.cont [9/16] 0.0, 128
    %3166 = vxpose.xlu0.b32.cont [10/16] 0.0, 128
    %3167 = vxpose.xlu0.b32.cont [11/16] 0.0, 128
    %3168 = vxpose.xlu0.b32.cont [12/16] 0.0, 128
    %3169 = vxpose.xlu0.b32.cont [13/16] 0.0, 128
    %3170 = vxpose.xlu0.b32.cont [14/16] 0.0, 128
    %3171 = vxpose.xlu0.b32.cont [15/16] 0.0, 128
    %3172 = vxpose.xlu0.b32.end [16/16] 0.0, 128
    %v3173 = vpop.trf.xlu0
    %v3174 = vpop.trf.xlu0
    %v3175 = vpop.trf.xlu0
    %v3176 = vpop.trf.xlu0
    %v3177 = vpop.trf.xlu0
    %v3178 = vpop.trf.xlu0
    %v3179 = vpop.trf.xlu0
    %v3180 = vpop.trf.xlu0
    %v3181 = vpop.trf.xlu0
    %v3182 = vpop.trf.xlu0
    %v3183 = vpop.trf.xlu0
    %v3184 = vpop.trf.xlu0
    %v3185 = vpop.trf.xlu0
    %v3186 = vpop.trf.xlu0
    %v3187 = vpop.trf.xlu0
    %v3188 = vpop.trf.xlu0
    %v3189 = vpack.c.bf16 %v3078, %v3077
    %v3190 = vpack.c.bf16 %v3080, %v3079
    %v3191 = vpack.c.bf16 %v3110, %v3109
    %v3192 = vpack.c.bf16 %v3112, %v3111
    %v3193 = vpack.c.bf16 %v3142, %v3141
    %v3194 = vpack.c.bf16 %v3144, %v3143
    %v3195 = vpack.c.bf16 %v3174, %v3173
    %v3196 = vpack.c.bf16 %v3176, %v3175
    %3197 = vxpose.xlu0.b32.start [1/16] %v3013, 128
    %3198 = vxpose.xlu0.b32.cont [2/16] %v3014, 128
    %3199 = vxpose.xlu0.b32.cont [3/16] %v3015, 128
    %3200 = vxpose.xlu0.b32.cont [4/16] %v3016, 128
    %3201 = vxpose.xlu0.b32.cont [5/16] 0.0, 128
    %3202 = vxpose.xlu0.b32.cont [6/16] 0.0, 128
    %3203 = vxpose.xlu0.b32.cont [7/16] 0.0, 128
    %3204 = vxpose.xlu0.b32.cont [8/16] 0.0, 128
    %3205 = vxpose.xlu0.b32.cont [9/16] 0.0, 128
    %3206 = vxpose.xlu0.b32.cont [10/16] 0.0, 128
    %3207 = vxpose.xlu0.b32.cont [11/16] 0.0, 128
    %3208 = vxpose.xlu0.b32.cont [12/16] 0.0, 128
    %3209 = vxpose.xlu0.b32.cont [13/16] 0.0, 128
    %3210 = vxpose.xlu0.b32.cont [14/16] 0.0, 128
    %3211 = vxpose.xlu0.b32.cont [15/16] 0.0, 128
    %3212 = vxpose.xlu0.b32.end [16/16] 0.0, 128
    %v3213 = vpop.trf.xlu0
    %v3214 = vpop.trf.xlu0
    %v3215 = vpop.trf.xlu0
    %v3216 = vpop.trf.xlu0
    %v3217 = vpop.trf.xlu0
    %v3218 = vpop.trf.xlu0
    %v3219 = vpop.trf.xlu0
    %v3220 = vpop.trf.xlu0
    %v3221 = vpop.trf.xlu0
    %v3222 = vpop.trf.xlu0
    %v3223 = vpop.trf.xlu0
    %v3224 = vpop.trf.xlu0
    %v3225 = vpop.trf.xlu0
    %v3226 = vpop.trf.xlu0
    %v3227 = vpop.trf.xlu0
    %v3228 = vpop.trf.xlu0
    %3229 = vxpose.xlu0.b32.start [1/16] %v3017, 128
    %3230 = vxpose.xlu0.b32.cont [2/16] %v3018, 128
    %3231 = vxpose.xlu0.b32.cont [3/16] %v3019, 128
    %3232 = vxpose.xlu0.b32.cont [4/16] %v3020, 128
    %3233 = vxpose.xlu0.b32.cont [5/16] 0.0, 128
    %3234 = vxpose.xlu0.b32.cont [6/16] 0.0, 128
    %3235 = vxpose.xlu0.b32.cont [7/16] 0.0, 128
    %3236 = vxpose.xlu0.b32.cont [8/16] 0.0, 128
    %3237 = vxpose.xlu0.b32.cont [9/16] 0.0, 128
    %3238 = vxpose.xlu0.b32.cont [10/16] 0.0, 128
    %3239 = vxpose.xlu0.b32.cont [11/16] 0.0, 128
    %3240 = vxpose.xlu0.b32.cont [12/16] 0.0, 128
    %3241 = vxpose.xlu0.b32.cont [13/16] 0.0, 128
    %3242 = vxpose.xlu0.b32.cont [14/16] 0.0, 128
    %3243 = vxpose.xlu0.b32.cont [15/16] 0.0, 128
    %3244 = vxpose.xlu0.b32.end [16/16] 0.0, 128
    %v3245 = vpop.trf.xlu0
    %v3246 = vpop.trf.xlu0
    %v3247 = vpop.trf.xlu0
    %v3248 = vpop.trf.xlu0
    %v3249 = vpop.trf.xlu0
    %v3250 = vpop.trf.xlu0
    %v3251 = vpop.trf.xlu0
    %v3252 = vpop.trf.xlu0
    %v3253 = vpop.trf.xlu0
    %v3254 = vpop.trf.xlu0
    %v3255 = vpop.trf.xlu0
    %v3256 = vpop.trf.xlu0
    %v3257 = vpop.trf.xlu0
    %v3258 = vpop.trf.xlu0
    %v3259 = vpop.trf.xlu0
    %v3260 = vpop.trf.xlu0
    %3261 = vxpose.xlu0.b32.start [1/16] %v3021, 128
    %3262 = vxpose.xlu0.b32.cont [2/16] %v3022, 128
    %3263 = vxpose.xlu0.b32.cont [3/16] %v3023, 128
    %3264 = vxpose.xlu0.b32.cont [4/16] %v3024, 128
    %3265 = vxpose.xlu0.b32.cont [5/16] 0.0, 128
    %3266 = vxpose.xlu0.b32.cont [6/16] 0.0, 128
    %3267 = vxpose.xlu0.b32.cont [7/16] 0.0, 128
    %3268 = vxpose.xlu0.b32.cont [8/16] 0.0, 128
    %3269 = vxpose.xlu0.b32.cont [9/16] 0.0, 128
    %3270 = vxpose.xlu0.b32.cont [10/16] 0.0, 128
    %3271 = vxpose.xlu0.b32.cont [11/16] 0.0, 128
    %3272 = vxpose.xlu0.b32.cont [12/16] 0.0, 128
    %3273 = vxpose.xlu0.b32.cont [13/16] 0.0, 128
    %3274 = vxpose.xlu0.b32.cont [14/16] 0.0, 128
    %3275 = vxpose.xlu0.b32.cont [15/16] 0.0, 128
    %3276 = vxpose.xlu0.b32.end [16/16] 0.0, 128
    %v3277 = vpop.trf.xlu0
    %v3278 = vpop.trf.xlu0
    %v3279 = vpop.trf.xlu0
    %v3280 = vpop.trf.xlu0
    %v3281 = vpop.trf.xlu0
    %v3282 = vpop.trf.xlu0
    %v3283 = vpop.trf.xlu0
    %v3284 = vpop.trf.xlu0
    %v3285 = vpop.trf.xlu0
    %v3286 = vpop.trf.xlu0
    %v3287 = vpop.trf.xlu0
    %v3288 = vpop.trf.xlu0
    %v3289 = vpop.trf.xlu0
    %v3290 = vpop.trf.xlu0
    %v3291 = vpop.trf.xlu0
    %v3292 = vpop.trf.xlu0
    %3293 = vxpose.xlu0.b32.start [1/16] %v3025, 128
    %3294 = vxpose.xlu0.b32.cont [2/16] %v3026, 128
    %3295 = vxpose.xlu0.b32.cont [3/16] %v3027, 128
    %3296 = vxpose.xlu0.b32.cont [4/16] %v3028, 128
    %3297 = vxpose.xlu0.b32.cont [5/16] 0.0, 128
    %3298 = vxpose.xlu0.b32.cont [6/16] 0.0, 128
    %3299 = vxpose.xlu0.b32.cont [7/16] 0.0, 128
    %3300 = vxpose.xlu0.b32.cont [8/16] 0.0, 128
    %3301 = vxpose.xlu0.b32.cont [9/16] 0.0, 128
    %3302 = vxpose.xlu0.b32.cont [10/16] 0.0, 128
    %3303 = vxpose.xlu0.b32.cont [11/16] 0.0, 128
    %3304 = vxpose.xlu0.b32.cont [12/16] 0.0, 128
    %3305 = vxpose.xlu0.b32.cont [13/16] 0.0, 128
    %3306 = vxpose.xlu0.b32.cont [14/16] 0.0, 128
    %3307 = vxpose.xlu0.b32.cont [15/16] 0.0, 128
    %3308 = vxpose.xlu0.b32.end [16/16] 0.0, 128
    %v3309 = vpop.trf.xlu0
    %v3310 = vpop.trf.xlu0
    %v3311 = vpop.trf.xlu0
    %v3312 = vpop.trf.xlu0
    %v3313 = vpop.trf.xlu0
    %v3314 = vpop.trf.xlu0
    %v3315 = vpop.trf.xlu0
    %v3316 = vpop.trf.xlu0
    %v3317 = vpop.trf.xlu0
    %v3318 = vpop.trf.xlu0
    %v3319 = vpop.trf.xlu0
    %v3320 = vpop.trf.xlu0
    %v3321 = vpop.trf.xlu0
    %v3322 = vpop.trf.xlu0
    %v3323 = vpop.trf.xlu0
    %v3324 = vpop.trf.xlu0
    %v3325 = vpack.c.bf16 %v3214, %v3213
    %v3326 = vpack.c.bf16 %v3216, %v3215
    %v3327 = vpack.c.bf16 %v3246, %v3245
    %v3328 = vpack.c.bf16 %v3248, %v3247
    %v3329 = vpack.c.bf16 %v3278, %v3277
    %v3330 = vpack.c.bf16 %v3280, %v3279
    %v3331 = vpack.c.bf16 %v3310, %v3309
    %v3332 = vpack.c.bf16 %v3312, %v3311
    %3333 = vxpose.xlu0.b32.start [1/16] %v3045, 128
    %3334 = vxpose.xlu0.b32.cont [2/16] %v3046, 128
    %3335 = vxpose.xlu0.b32.cont [3/16] %v3047, 128
    %3336 = vxpose.xlu0.b32.cont [4/16] %v3048, 128
    %3337 = vxpose.xlu0.b32.cont [5/16] 0.0, 128
    %3338 = vxpose.xlu0.b32.cont [6/16] 0.0, 128
    %3339 = vxpose.xlu0.b32.cont [7/16] 0.0, 128
    %3340 = vxpose.xlu0.b32.cont [8/16] 0.0, 128
    %3341 = vxpose.xlu0.b32.cont [9/16] 0.0, 128
    %3342 = vxpose.xlu0.b32.cont [10/16] 0.0, 128
    %3343 = vxpose.xlu0.b32.cont [11/16] 0.0, 128
    %3344 = vxpose.xlu0.b32.cont [12/16] 0.0, 128
    %3345 = vxpose.xlu0.b32.cont [13/16] 0.0, 128
    %3346 = vxpose.xlu0.b32.cont [14/16] 0.0, 128
    %3347 = vxpose.xlu0.b32.cont [15/16] 0.0, 128
    %3348 = vxpose.xlu0.b32.end [16/16] 0.0, 128
    %v3349 = vpop.trf.xlu0
    %v3350 = vpop.trf.xlu0
    %v3351 = vpop.trf.xlu0
    %v3352 = vpop.trf.xlu0
    %v3353 = vpop.trf.xlu0
    %v3354 = vpop.trf.xlu0
    %v3355 = vpop.trf.xlu0
    %v3356 = vpop.trf.xlu0
    %v3357 = vpop.trf.xlu0
    %v3358 = vpop.trf.xlu0
    %v3359 = vpop.trf.xlu0
    %v3360 = vpop.trf.xlu0
    %v3361 = vpop.trf.xlu0
    %v3362 = vpop.trf.xlu0
    %v3363 = vpop.trf.xlu0
    %v3364 = vpop.trf.xlu0
    %3365 = vxpose.xlu0.b32.start [1/16] %v3049, 128
    %3366 = vxpose.xlu0.b32.cont [2/16] %v3050, 128
    %3367 = vxpose.xlu0.b32.cont [3/16] %v3051, 128
    %3368 = vxpose.xlu0.b32.cont [4/16] %v3052, 128
    %3369 = vxpose.xlu0.b32.cont [5/16] 0.0, 128
    %3370 = vxpose.xlu0.b32.cont [6/16] 0.0, 128
    %3371 = vxpose.xlu0.b32.cont [7/16] 0.0, 128
    %3372 = vxpose.xlu0.b32.cont [8/16] 0.0, 128
    %3373 = vxpose.xlu0.b32.cont [9/16] 0.0, 128
    %3374 = vxpose.xlu0.b32.cont [10/16] 0.0, 128
    %3375 = vxpose.xlu0.b32.cont [11/16] 0.0, 128
    %3376 = vxpose.xlu0.b32.cont [12/16] 0.0, 128
    %3377 = vxpose.xlu0.b32.cont [13/16] 0.0, 128
    %3378 = vxpose.xlu0.b32.cont [14/16] 0.0, 128
    %3379 = vxpose.xlu0.b32.cont [15/16] 0.0, 128
    %3380 = vxpose.xlu0.b32.end [16/16] 0.0, 128
    %v3381 = vpop.trf.xlu0
    %v3382 = vpop.trf.xlu0
    %v3383 = vpop.trf.xlu0
    %v3384 = vpop.trf.xlu0
    %v3385 = vpop.trf.xlu0
    %v3386 = vpop.trf.xlu0
    %v3387 = vpop.trf.xlu0
    %v3388 = vpop.trf.xlu0
    %v3389 = vpop.trf.xlu0
    %v3390 = vpop.trf.xlu0
    %v3391 = vpop.trf.xlu0
    %v3392 = vpop.trf.xlu0
    %v3393 = vpop.trf.xlu0
    %v3394 = vpop.trf.xlu0
    %v3395 = vpop.trf.xlu0
    %v3396 = vpop.trf.xlu0
    %3397 = vxpose.xlu0.b32.start [1/16] %v3053, 128
    %3398 = vxpose.xlu0.b32.cont [2/16] %v3054, 128
    %3399 = vxpose.xlu0.b32.cont [3/16] %v3055, 128
    %3400 = vxpose.xlu0.b32.cont [4/16] %v3056, 128
    %3401 = vxpose.xlu0.b32.cont [5/16] 0.0, 128
    %3402 = vxpose.xlu0.b32.cont [6/16] 0.0, 128
    %3403 = vxpose.xlu0.b32.cont [7/16] 0.0, 128
    %3404 = vxpose.xlu0.b32.cont [8/16] 0.0, 128
    %3405 = vxpose.xlu0.b32.cont [9/16] 0.0, 128
    %3406 = vxpose.xlu0.b32.cont [10/16] 0.0, 128
    %3407 = vxpose.xlu0.b32.cont [11/16] 0.0, 128
    %3408 = vxpose.xlu0.b32.cont [12/16] 0.0, 128
    %3409 = vxpose.xlu0.b32.cont [13/16] 0.0, 128
    %3410 = vxpose.xlu0.b32.cont [14/16] 0.0, 128
    %3411 = vxpose.xlu0.b32.cont [15/16] 0.0, 128
    %3412 = vxpose.xlu0.b32.end [16/16] 0.0, 128
    %v3413 = vpop.trf.xlu0
    %v3414 = vpop.trf.xlu0
    %v3415 = vpop.trf.xlu0
    %v3416 = vpop.trf.xlu0
    %v3417 = vpop.trf.xlu0
    %v3418 = vpop.trf.xlu0
    %v3419 = vpop.trf.xlu0
    %v3420 = vpop.trf.xlu0
    %v3421 = vpop.trf.xlu0
    %v3422 = vpop.trf.xlu0
    %v3423 = vpop.trf.xlu0
    %v3424 = vpop.trf.xlu0
    %v3425 = vpop.trf.xlu0
    %v3426 = vpop.trf.xlu0
    %v3427 = vpop.trf.xlu0
    %v3428 = vpop.trf.xlu0
    %3429 = vxpose.xlu0.b32.start [1/16] %v3057, 128
    %3430 = vxpose.xlu0.b32.cont [2/16] %v3058, 128
    %3431 = vxpose.xlu0.b32.cont [3/16] %v3059, 128
    %3432 = vxpose.xlu0.b32.cont [4/16] %v3060, 128
    %3433 = vxpose.xlu0.b32.cont [5/16] 0.0, 128
    %3434 = vxpose.xlu0.b32.cont [6/16] 0.0, 128
    %3435 = vxpose.xlu0.b32.cont [7/16] 0.0, 128
    %3436 = vxpose.xlu0.b32.cont [8/16] 0.0, 128
    %3437 = vxpose.xlu0.b32.cont [9/16] 0.0, 128
    %3438 = vxpose.xlu0.b32.cont [10/16] 0.0, 128
    %3439 = vxpose.xlu0.b32.cont [11/16] 0.0, 128
    %3440 = vxpose.xlu0.b32.cont [12/16] 0.0, 128
    %3441 = vxpose.xlu0.b32.cont [13/16] 0.0, 128
    %3442 = vxpose.xlu0.b32.cont [14/16] 0.0, 128
    %3443 = vxpose.xlu0.b32.cont [15/16] 0.0, 128
    %3444 = vxpose.xlu0.b32.end [16/16] 0.0, 128
    %v3445 = vpop.trf.xlu0
    %v3446 = vpop.trf.xlu0
    %v3447 = vpop.trf.xlu0
    %v3448 = vpop.trf.xlu0
    %v3449 = vpop.trf.xlu0
    %v3450 = vpop.trf.xlu0
    %v3451 = vpop.trf.xlu0
    %v3452 = vpop.trf.xlu0
    %v3453 = vpop.trf.xlu0
    %v3454 = vpop.trf.xlu0
    %v3455 = vpop.trf.xlu0
    %v3456 = vpop.trf.xlu0
    %v3457 = vpop.trf.xlu0
    %v3458 = vpop.trf.xlu0
    %v3459 = vpop.trf.xlu0
    %v3460 = vpop.trf.xlu0
    %v3461 = vpack.c.bf16 %v3350, %v3349
    %v3462 = vpack.c.bf16 %v3352, %v3351
    %v3463 = vpack.c.bf16 %v3382, %v3381
    %v3464 = vpack.c.bf16 %v3384, %v3383
    %v3465 = vpack.c.bf16 %v3414, %v3413
    %v3466 = vpack.c.bf16 %v3416, %v3415
    %v3467 = vpack.c.bf16 %v3446, %v3445
    %v3468 = vpack.c.bf16 %v3448, %v3447
    %v3470 = vsel %vm1184, %v3189, 0
    %v3473 = vsel %vm1184, %v3190, 0
    %v3476 = vsel %vm1184, %v3325, 0
    %v3479 = vsel %vm1184, %v3326, 0
    %3481 = vmatprep.subr.bf16.mxu0 0
    %3482 = vmatpush1.bf16.xpose.msra.mxu0 0
    %3483 = vmatprep.subr.bf16.mxu0 0
    %3484 = vmatpush1.bf16.xpose.msra.mxu0 0
    %3485 = vmatprep.subr.bf16.mxu0 0
    %3486 = vmatpush1.bf16.xpose.msra.mxu0 0
    %3487 = vmatprep.subr.bf16.mxu0 0
    %3488 = vmatpush1.bf16.xpose.msra.mxu0 0
    %3489 = vmatprep.subr.bf16.mxu0 0
    %3490 = vmatpush1.bf16.xpose.msra.mxu0 0
    %3491 = vmatprep.subr.bf16.mxu0 0
    %3492 = vmatpush1.bf16.xpose.msra.mxu0 0
    %3493 = vmatprep.subr.bf16.mxu0 0
    %3494 = vmatpush1.bf16.xpose.msra.mxu0 %v3479
    %3495 = vmatprep.subr.bf16.mxu0 0
    %3496 = vmatpush1.bf16.xpose.msra.mxu0 %v3476
    %3497 = vmatprep.subr.bf16.mxu0 0
    %3498 = vmatpush2.bf16.xpose.msra.mxu0 0
    %3499 = vmatprep.subr.bf16.mxu0 0
    %3500 = vmatpush2.bf16.xpose.msra.mxu0 0
    %3501 = vmatprep.subr.bf16.mxu0 0
    %3502 = vmatpush2.bf16.xpose.msra.mxu0 0
    %3503 = vmatprep.subr.bf16.mxu0 0
    %3504 = vmatpush2.bf16.xpose.msra.mxu0 0
    %3505 = vmatprep.subr.bf16.mxu0 0
    %3506 = vmatpush2.bf16.xpose.msra.mxu0 0
    %3507 = vmatprep.subr.bf16.mxu0 0
    %3508 = vmatpush2.bf16.xpose.msra.mxu0 0
    %3509 = vmatprep.subr.bf16.mxu0 0
    %3510 = vmatpush2.bf16.xpose.msra.mxu0 0
    %3511 = vmatprep.subr.bf16.mxu0 0
    %3512 = vmatpush2.bf16.xpose.msra.mxu0 0
    %3513 = vmatprep.mubr.bf16.mxu0 0
    %3514 = vmatmul.mubr.bf16.gmra.mxu0 %v3470
    %v3515 = vpop.f32.mrf.mxu0
    %v3516 = vadd.f32 0.0, %v3515
    %v3517 = vpop.f32.mrf.mxu0
    %v3518 = vpop.f32.mrf.mxu0
    %v3519 = vadd.f32 0.0, %v3518
    %v3520 = vpop.f32.mrf.mxu0
    %3521 = vmatprep.mubr.bf16.mxu0 0
    %3522 = vmatmul.mubr.bf16.gmra.mxu0 %v3473
    %v3523 = vpop.f32.mrf.mxu0
    %v3524 = vadd.f32 0.0, %v3523
    %v3525 = vpop.f32.mrf.mxu0
    %v3526 = vpop.f32.mrf.mxu0
    %v3527 = vadd.f32 0.0, %v3526
    %v3528 = vpop.f32.mrf.mxu0
    %3529 = vdwg.mxu0
    %v3531 = vsel %vm1184, %v3191, 0
    %v3534 = vsel %vm1184, %v3192, 0
    %v3537 = vsel %vm1184, %v3327, 0
    %v3540 = vsel %vm1184, %v3328, 0
    %3542 = vmatprep.subr.bf16.mxu0 0
    %3543 = vmatpush1.bf16.xpose.msra.mxu0 0
    %3544 = vmatprep.subr.bf16.mxu0 0
    %3545 = vmatpush1.bf16.xpose.msra.mxu0 0
    %3546 = vmatprep.subr.bf16.mxu0 0
    %3547 = vmatpush1.bf16.xpose.msra.mxu0 0
    %3548 = vmatprep.subr.bf16.mxu0 0
    %3549 = vmatpush1.bf16.xpose.msra.mxu0 0
    %3550 = vmatprep.subr.bf16.mxu0 0
    %3551 = vmatpush1.bf16.xpose.msra.mxu0 0
    %3552 = vmatprep.subr.bf16.mxu0 0
    %3553 = vmatpush1.bf16.xpose.msra.mxu0 0
    %3554 = vmatprep.subr.bf16.mxu0 0
    %3555 = vmatpush1.bf16.xpose.msra.mxu0 %v3540
    %3556 = vmatprep.subr.bf16.mxu0 0
    %3557 = vmatpush1.bf16.xpose.msra.mxu0 %v3537
    %3558 = vmatprep.subr.bf16.mxu0 0
    %3559 = vmatpush2.bf16.xpose.msra.mxu0 0
    %3560 = vmatprep.subr.bf16.mxu0 0
    %3561 = vmatpush2.bf16.xpose.msra.mxu0 0
    %3562 = vmatprep.subr.bf16.mxu0 0
    %3563 = vmatpush2.bf16.xpose.msra.mxu0 0
    %3564 = vmatprep.subr.bf16.mxu0 0
    %3565 = vmatpush2.bf16.xpose.msra.mxu0 0
    %3566 = vmatprep.subr.bf16.mxu0 0
    %3567 = vmatpush2.bf16.xpose.msra.mxu0 0
    %3568 = vmatprep.subr.bf16.mxu0 0
    %3569 = vmatpush2.bf16.xpose.msra.mxu0 0
    %3570 = vmatprep.subr.bf16.mxu0 0
    %3571 = vmatpush2.bf16.xpose.msra.mxu0 0
    %3572 = vmatprep.subr.bf16.mxu0 0
    %3573 = vmatpush2.bf16.xpose.msra.mxu0 0
    %3574 = vmatprep.mubr.bf16.mxu0 0
    %3575 = vmatmul.mubr.bf16.gmra.mxu0 %v3531
    %v3576 = vpop.f32.mrf.mxu0
    %v3577 = vadd.f32 0.0, %v3576
    %v3578 = vpop.f32.mrf.mxu0
    %v3579 = vpop.f32.mrf.mxu0
    %v3580 = vadd.f32 0.0, %v3579
    %v3581 = vpop.f32.mrf.mxu0
    %3582 = vmatprep.mubr.bf16.mxu0 0
    %3583 = vmatmul.mubr.bf16.gmra.mxu0 %v3534
    %v3584 = vpop.f32.mrf.mxu0
    %v3585 = vadd.f32 0.0, %v3584
    %v3586 = vpop.f32.mrf.mxu0
    %v3587 = vpop.f32.mrf.mxu0
    %v3588 = vadd.f32 0.0, %v3587
    %v3589 = vpop.f32.mrf.mxu0
    %3590 = vdwg.mxu0
    %v3592 = vsel %vm1184, %v3193, 0
    %v3595 = vsel %vm1184, %v3194, 0
    %v3598 = vsel %vm1184, %v3329, 0
    %v3601 = vsel %vm1184, %v3330, 0
    %3603 = vmatprep.subr.bf16.mxu0 0
    %3604 = vmatpush1.bf16.xpose.msra.mxu0 0
    %3605 = vmatprep.subr.bf16.mxu0 0
    %3606 = vmatpush1.bf16.xpose.msra.mxu0 0
    %3607 = vmatprep.subr.bf16.mxu0 0
    %3608 = vmatpush1.bf16.xpose.msra.mxu0 0
    %3609 = vmatprep.subr.bf16.mxu0 0
    %3610 = vmatpush1.bf16.xpose.msra.mxu0 0
    %3611 = vmatprep.subr.bf16.mxu0 0
    %3612 = vmatpush1.bf16.xpose.msra.mxu0 0
    %3613 = vmatprep.subr.bf16.mxu0 0
    %3614 = vmatpush1.bf16.xpose.msra.mxu0 0
    %3615 = vmatprep.subr.bf16.mxu0 0
    %3616 = vmatpush1.bf16.xpose.msra.mxu0 %v3601
    %3617 = vmatprep.subr.bf16.mxu0 0
    %3618 = vmatpush1.bf16.xpose.msra.mxu0 %v3598
    %3619 = vmatprep.subr.bf16.mxu0 0
    %3620 = vmatpush2.bf16.xpose.msra.mxu0 0
    %3621 = vmatprep.subr.bf16.mxu0 0
    %3622 = vmatpush2.bf16.xpose.msra.mxu0 0
    %3623 = vmatprep.subr.bf16.mxu0 0
    %3624 = vmatpush2.bf16.xpose.msra.mxu0 0
    %3625 = vmatprep.subr.bf16.mxu0 0
    %3626 = vmatpush2.bf16.xpose.msra.mxu0 0
    %3627 = vmatprep.subr.bf16.mxu0 0
    %3628 = vmatpush2.bf16.xpose.msra.mxu0 0
    %3629 = vmatprep.subr.bf16.mxu0 0
    %3630 = vmatpush2.bf16.xpose.msra.mxu0 0
    %3631 = vmatprep.subr.bf16.mxu0 0
    %3632 = vmatpush2.bf16.xpose.msra.mxu0 0
    %3633 = vmatprep.subr.bf16.mxu0 0
    %3634 = vmatpush2.bf16.xpose.msra.mxu0 0
    %3635 = vmatprep.mubr.bf16.mxu0 0
    %3636 = vmatmul.mubr.bf16.gmra.mxu0 %v3592
    %v3637 = vpop.f32.mrf.mxu0
    %v3638 = vadd.f32 0.0, %v3637
    %v3639 = vpop.f32.mrf.mxu0
    %v3640 = vpop.f32.mrf.mxu0
    %v3641 = vadd.f32 0.0, %v3640
    %v3642 = vpop.f32.mrf.mxu0
    %3643 = vmatprep.mubr.bf16.mxu0 0
    %3644 = vmatmul.mubr.bf16.gmra.mxu0 %v3595
    %v3645 = vpop.f32.mrf.mxu0
    %v3646 = vadd.f32 0.0, %v3645
    %v3647 = vpop.f32.mrf.mxu0
    %v3648 = vpop.f32.mrf.mxu0
    %v3649 = vadd.f32 0.0, %v3648
    %v3650 = vpop.f32.mrf.mxu0
    %3651 = vdwg.mxu0
    %v3653 = vsel %vm1184, %v3195, 0
    %v3656 = vsel %vm1184, %v3196, 0
    %v3659 = vsel %vm1184, %v3331, 0
    %v3662 = vsel %vm1184, %v3332, 0
    %3664 = vmatprep.subr.bf16.mxu0 0
    %3665 = vmatpush1.bf16.xpose.msra.mxu0 0
    %3666 = vmatprep.subr.bf16.mxu0 0
    %3667 = vmatpush1.bf16.xpose.msra.mxu0 0
    %3668 = vmatprep.subr.bf16.mxu0 0
    %3669 = vmatpush1.bf16.xpose.msra.mxu0 0
    %3670 = vmatprep.subr.bf16.mxu0 0
    %3671 = vmatpush1.bf16.xpose.msra.mxu0 0
    %3672 = vmatprep.subr.bf16.mxu0 0
    %3673 = vmatpush1.bf16.xpose.msra.mxu0 0
    %3674 = vmatprep.subr.bf16.mxu0 0
    %3675 = vmatpush1.bf16.xpose.msra.mxu0 0
    %3676 = vmatprep.subr.bf16.mxu0 0
    %3677 = vmatpush1.bf16.xpose.msra.mxu0 %v3662
    %3678 = vmatprep.subr.bf16.mxu0 0
    %3679 = vmatpush1.bf16.xpose.msra.mxu0 %v3659
    %3680 = vmatprep.subr.bf16.mxu0 0
    %3681 = vmatpush2.bf16.xpose.msra.mxu0 0
    %3682 = vmatprep.subr.bf16.mxu0 0
    %3683 = vmatpush2.bf16.xpose.msra.mxu0 0
    %3684 = vmatprep.subr.bf16.mxu0 0
    %3685 = vmatpush2.bf16.xpose.msra.mxu0 0
    %3686 = vmatprep.subr.bf16.mxu0 0
    %3687 = vmatpush2.bf16.xpose.msra.mxu0 0
    %3688 = vmatprep.subr.bf16.mxu0 0
    %3689 = vmatpush2.bf16.xpose.msra.mxu0 0
    %3690 = vmatprep.subr.bf16.mxu0 0
    %3691 = vmatpush2.bf16.xpose.msra.mxu0 0
    %3692 = vmatprep.subr.bf16.mxu0 0
    %3693 = vmatpush2.bf16.xpose.msra.mxu0 0
    %3694 = vmatprep.subr.bf16.mxu0 0
    %3695 = vmatpush2.bf16.xpose.msra.mxu0 0
    %3696 = vmatprep.mubr.bf16.mxu0 0
    %3697 = vmatmul.mubr.bf16.gmra.mxu0 %v3653
    %v3698 = vpop.f32.mrf.mxu0
    %v3699 = vadd.f32 0.0, %v3698
    %v3700 = vpop.f32.mrf.mxu0
    %v3701 = vpop.f32.mrf.mxu0
    %v3702 = vadd.f32 0.0, %v3701
    %v3703 = vpop.f32.mrf.mxu0
    %3704 = vmatprep.mubr.bf16.mxu0 0
    %3705 = vmatmul.mubr.bf16.gmra.mxu0 %v3656
    %v3706 = vpop.f32.mrf.mxu0
    %v3707 = vadd.f32 0.0, %v3706
    %v3708 = vpop.f32.mrf.mxu0
    %v3709 = vpop.f32.mrf.mxu0
    %v3710 = vadd.f32 0.0, %v3709
    %v3711 = vpop.f32.mrf.mxu0
    %3712 = vdwg.mxu0
    %v3713 = vmul.f32 %v3516, 0.17677669
    %v3714 = vmul.f32 %v3519, 0.17677669
    %v3715 = vmul.f32 %v3524, 0.17677669
    %v3716 = vmul.f32 %v3527, 0.17677669
    %v3717 = vmul.f32 %v3577, 0.17677669
    %v3718 = vmul.f32 %v3580, 0.17677669
    %v3719 = vmul.f32 %v3585, 0.17677669
    %v3720 = vmul.f32 %v3588, 0.17677669
    %v3721 = vmul.f32 %v3638, 0.17677669
    %v3722 = vmul.f32 %v3641, 0.17677669
    %v3723 = vmul.f32 %v3646, 0.17677669
    %v3724 = vmul.f32 %v3649, 0.17677669
    %v3725 = vmul.f32 %v3699, 0.17677669
    %v3726 = vmul.f32 %v3702, 0.17677669
    %v3727 = vmul.f32 %v3707, 0.17677669
    %v3728 = vmul.f32 %v3710, 0.17677669
    %v3729 = vadd.f32 %v3713, %v400
    %v3730 = vadd.f32 %v3714, %v401
    %v3731 = vadd.f32 %v3715, %v402
    %v3732 = vadd.f32 %v3716, %v403
    %v3733 = vadd.f32 %v3717, %v400
    %v3734 = vadd.f32 %v3718, %v401
    %v3735 = vadd.f32 %v3719, %v402
    %v3736 = vadd.f32 %v3720, %v403
    %v3737 = vadd.f32 %v3721, %v400
    %v3738 = vadd.f32 %v3722, %v401
    %v3739 = vadd.f32 %v3723, %v402
    %v3740 = vadd.f32 %v3724, %v403
    %v3741 = vadd.f32 %v3725, %v400
    %v3742 = vadd.f32 %v3726, %v401
    %v3743 = vadd.f32 %v3727, %v402
    %v3744 = vadd.f32 %v3728, %v403
    %v3745 = vsel %vm1184, %v3729, -inf
    %3746 = vmax.xlane.f32.xlu0 %v3745
    %v3747 = vpop.xlane.xlu0 %3746
    %v3748 = vsel %vm1184, %v3730, -inf
    %3749 = vmax.xlane.f32.xlu0 %v3748
    %v3750 = vpop.xlane.xlu0 %3749
    %v3751 = vsel %vm1184, %v3731, -inf
    %3752 = vmax.xlane.f32.xlu0 %v3751
    %v3753 = vpop.xlane.xlu0 %3752
    %v3754 = vsel %vm1184, %v3732, -inf
    %3755 = vmax.xlane.f32.xlu0 %v3754
    %v3756 = vpop.xlane.xlu0 %3755
    %v3757 = vsel %vm1184, %v3733, -inf
    %3758 = vmax.xlane.f32.xlu0 %v3757
    %v3759 = vpop.xlane.xlu0 %3758
    %v3760 = vsel %vm1184, %v3734, -inf
    %3761 = vmax.xlane.f32.xlu0 %v3760
    %v3762 = vpop.xlane.xlu0 %3761
    %v3763 = vsel %vm1184, %v3735, -inf
    %3764 = vmax.xlane.f32.xlu0 %v3763
    %v3765 = vpop.xlane.xlu0 %3764
    %v3766 = vsel %vm1184, %v3736, -inf
    %3767 = vmax.xlane.f32.xlu0 %v3766
    %v3768 = vpop.xlane.xlu0 %3767
    %v3769 = vsel %vm1184, %v3737, -inf
    %3770 = vmax.xlane.f32.xlu0 %v3769
    %v3771 = vpop.xlane.xlu0 %3770
    %v3772 = vsel %vm1184, %v3738, -inf
    %3773 = vmax.xlane.f32.xlu0 %v3772
    %v3774 = vpop.xlane.xlu0 %3773
    %v3775 = vsel %vm1184, %v3739, -inf
    %3776 = vmax.xlane.f32.xlu0 %v3775
    %v3777 = vpop.xlane.xlu0 %3776
    %v3778 = vsel %vm1184, %v3740, -inf
    %3779 = vmax.xlane.f32.xlu0 %v3778
    %v3780 = vpop.xlane.xlu0 %3779
    %v3781 = vsel %vm1184, %v3741, -inf
    %3782 = vmax.xlane.f32.xlu0 %v3781
    %v3783 = vpop.xlane.xlu0 %3782
    %v3784 = vsel %vm1184, %v3742, -inf
    %3785 = vmax.xlane.f32.xlu0 %v3784
    %v3786 = vpop.xlane.xlu0 %3785
    %v3787 = vsel %vm1184, %v3743, -inf
    %3788 = vmax.xlane.f32.xlu0 %v3787
    %v3789 = vpop.xlane.xlu0 %3788
    %v3790 = vsel %vm1184, %v3744, -inf
    %3791 = vmax.xlane.f32.xlu0 %v3790
    %v3792 = vpop.xlane.xlu0 %3791
    %v3793 = vsub.f32 %v3729, %v3747
    %v3794 = vsub.f32 %v3730, %v3750
    %v3795 = vsub.f32 %v3731, %v3753
    %v3796 = vsub.f32 %v3732, %v3756
    %v3797 = vsub.f32 %v3733, %v3759
    %v3798 = vsub.f32 %v3734, %v3762
    %v3799 = vsub.f32 %v3735, %v3765
    %v3800 = vsub.f32 %v3736, %v3768
    %v3801 = vsub.f32 %v3737, %v3771
    %v3802 = vsub.f32 %v3738, %v3774
    %v3803 = vsub.f32 %v3739, %v3777
    %v3804 = vsub.f32 %v3740, %v3780
    %v3805 = vsub.f32 %v3741, %v3783
    %v3806 = vsub.f32 %v3742, %v3786
    %v3807 = vsub.f32 %v3743, %v3789
    %v3808 = vsub.f32 %v3744, %v3792
    %v3809 = vmul.f32 %v3793, 1.442695
    %v3810 = vpow.pop %v3809
    %v3811 = vmul.f32 %v3794, 1.442695
    %v3812 = vpow.pop %v3811
    %v3813 = vmul.f32 %v3795, 1.442695
    %v3814 = vpow.pop %v3813
    %v3815 = vmul.f32 %v3796, 1.442695
    %v3816 = vpow.pop %v3815
    %v3817 = vmul.f32 %v3797, 1.442695
    %v3818 = vpow.pop %v3817
    %v3819 = vmul.f32 %v3798, 1.442695
    %v3820 = vpow.pop %v3819
    %v3821 = vmul.f32 %v3799, 1.442695
    %v3822 = vpow.pop %v3821
    %v3823 = vmul.f32 %v3800, 1.442695
    %v3824 = vpow.pop %v3823
    %v3825 = vmul.f32 %v3801, 1.442695
    %v3826 = vpow.pop %v3825
    %v3827 = vmul.f32 %v3802, 1.442695
    %v3828 = vpow.pop %v3827
    %v3829 = vmul.f32 %v3803, 1.442695
    %v3830 = vpow.pop %v3829
    %v3831 = vmul.f32 %v3804, 1.442695
    %v3832 = vpow.pop %v3831
    %v3833 = vmul.f32 %v3805, 1.442695
    %v3834 = vpow.pop %v3833
    %v3835 = vmul.f32 %v3806, 1.442695
    %v3836 = vpow.pop %v3835
    %v3837 = vmul.f32 %v3807, 1.442695
    %v3838 = vpow.pop %v3837
    %v3839 = vmul.f32 %v3808, 1.442695
    %v3840 = vpow.pop %v3839
    %v3841 = vsel %vm1184, %v3810, 0.0
    %3842 = vadd.xlane.f32.xlu0 %v3841
    %v3843 = vpop.xlane.xlu0 %3842
    %v3844 = vsel %vm1184, %v3812, 0.0
    %3845 = vadd.xlane.f32.xlu0 %v3844
    %v3846 = vpop.xlane.xlu0 %3845
    %v3847 = vsel %vm1184, %v3814, 0.0
    %3848 = vadd.xlane.f32.xlu0 %v3847
    %v3849 = vpop.xlane.xlu0 %3848
    %v3850 = vsel %vm1184, %v3816, 0.0
    %3851 = vadd.xlane.f32.xlu0 %v3850
    %v3852 = vpop.xlane.xlu0 %3851
    %v3853 = vsel %vm1184, %v3818, 0.0
    %3854 = vadd.xlane.f32.xlu0 %v3853
    %v3855 = vpop.xlane.xlu0 %3854
    %v3856 = vsel %vm1184, %v3820, 0.0
    %3857 = vadd.xlane.f32.xlu0 %v3856
    %v3858 = vpop.xlane.xlu0 %3857
    %v3859 = vsel %vm1184, %v3822, 0.0
    %3860 = vadd.xlane.f32.xlu0 %v3859
    %v3861 = vpop.xlane.xlu0 %3860
    %v3862 = vsel %vm1184, %v3824, 0.0
    %3863 = vadd.xlane.f32.xlu0 %v3862
    %v3864 = vpop.xlane.xlu0 %3863
    %v3865 = vsel %vm1184, %v3826, 0.0
    %3866 = vadd.xlane.f32.xlu0 %v3865
    %v3867 = vpop.xlane.xlu0 %3866
    %v3868 = vsel %vm1184, %v3828, 0.0
    %3869 = vadd.xlane.f32.xlu0 %v3868
    %v3870 = vpop.xlane.xlu0 %3869
    %v3871 = vsel %vm1184, %v3830, 0.0
    %3872 = vadd.xlane.f32.xlu0 %v3871
    %v3873 = vpop.xlane.xlu0 %3872
    %v3874 = vsel %vm1184, %v3832, 0.0
    %3875 = vadd.xlane.f32.xlu0 %v3874
    %v3876 = vpop.xlane.xlu0 %3875
    %v3877 = vsel %vm1184, %v3834, 0.0
    %3878 = vadd.xlane.f32.xlu0 %v3877
    %v3879 = vpop.xlane.xlu0 %3878
    %v3880 = vsel %vm1184, %v3836, 0.0
    %3881 = vadd.xlane.f32.xlu0 %v3880
    %v3882 = vpop.xlane.xlu0 %3881
    %v3883 = vsel %vm1184, %v3838, 0.0
    %3884 = vadd.xlane.f32.xlu0 %v3883
    %v3885 = vpop.xlane.xlu0 %3884
    %v3886 = vsel %vm1184, %v3840, 0.0
    %3887 = vadd.xlane.f32.xlu0 %v3886
    %v3888 = vpop.xlane.xlu0 %3887
    %v3889 = vrcp.pop %v3843
    %v3890 = vrcp.pop %v3846
    %v3891 = vrcp.pop %v3849
    %v3892 = vrcp.pop %v3852
    %v3893 = vrcp.pop %v3855
    %v3894 = vrcp.pop %v3858
    %v3895 = vrcp.pop %v3861
    %v3896 = vrcp.pop %v3864
    %v3897 = vrcp.pop %v3867
    %v3898 = vrcp.pop %v3870
    %v3899 = vrcp.pop %v3873
    %v3900 = vrcp.pop %v3876
    %v3901 = vrcp.pop %v3879
    %v3902 = vrcp.pop %v3882
    %v3903 = vrcp.pop %v3885
    %v3904 = vrcp.pop %v3888
    %v3905 = vmul.f32 %v3810, %v3889
    %v3906 = vmul.f32 %v3812, %v3890
    %v3907 = vmul.f32 %v3814, %v3891
    %v3908 = vmul.f32 %v3816, %v3892
    %v3909 = vmul.f32 %v3818, %v3893
    %v3910 = vmul.f32 %v3820, %v3894
    %v3911 = vmul.f32 %v3822, %v3895
    %v3912 = vmul.f32 %v3824, %v3896
    %v3913 = vmul.f32 %v3826, %v3897
    %v3914 = vmul.f32 %v3828, %v3898
    %v3915 = vmul.f32 %v3830, %v3899
    %v3916 = vmul.f32 %v3832, %v3900
    %v3917 = vmul.f32 %v3834, %v3901
    %v3918 = vmul.f32 %v3836, %v3902
    %v3919 = vmul.f32 %v3838, %v3903
    %v3920 = vmul.f32 %v3840, %v3904
    %v3921 = vpack.c.bf16 %v3906, %v3905
    %v3922 = vpack.c.bf16 %v3908, %v3907
    %v3923 = vpack.c.bf16 %v3910, %v3909
    %v3924 = vpack.c.bf16 %v3912, %v3911
    %v3925 = vpack.c.bf16 %v3914, %v3913
    %v3926 = vpack.c.bf16 %v3916, %v3915
    %v3927 = vpack.c.bf16 %v3918, %v3917
    %v3928 = vpack.c.bf16 %v3920, %v3919
    %v3930 = vsel %vm1184, %v3921, 0
    %v3933 = vsel %vm1184, %v3922, 0
    %3935 = vmatprep.subr.bf16.mxu0 0
    %3936 = vmatpush1.bf16.msra.mxu0 0
    %3937 = vmatprep.subr.bf16.mxu0 0
    %3938 = vmatpush1.bf16.msra.mxu0 0
    %3939 = vmatprep.subr.bf16.mxu0 0
    %3940 = vmatpush1.bf16.msra.mxu0 0
    %3941 = vmatprep.subr.bf16.mxu0 0
    %3942 = vmatpush1.bf16.msra.mxu0 0
    %3943 = vmatprep.subr.bf16.mxu0 0
    %3944 = vmatpush1.bf16.msra.mxu0 0
    %3945 = vmatprep.subr.bf16.mxu0 0
    %3946 = vmatpush1.bf16.msra.mxu0 0
    %3947 = vmatprep.subr.bf16.mxu0 0
    %3948 = vmatpush1.bf16.msra.mxu0 %v3462
    %3949 = vmatprep.subr.bf16.mxu0 0
    %3950 = vmatpush1.bf16.msra.mxu0 %v3461
    %3951 = vmatprep.subr.bf16.mxu0 0
    %3952 = vmatpush2.bf16.msra.mxu0 0
    %3953 = vmatprep.subr.bf16.mxu0 0
    %3954 = vmatpush2.bf16.msra.mxu0 0
    %3955 = vmatprep.subr.bf16.mxu0 0
    %3956 = vmatpush2.bf16.msra.mxu0 0
    %3957 = vmatprep.subr.bf16.mxu0 0
    %3958 = vmatpush2.bf16.msra.mxu0 0
    %3959 = vmatprep.subr.bf16.mxu0 0
    %3960 = vmatpush2.bf16.msra.mxu0 0
    %3961 = vmatprep.subr.bf16.mxu0 0
    %3962 = vmatpush2.bf16.msra.mxu0 0
    %3963 = vmatprep.subr.bf16.mxu0 0
    %3964 = vmatpush2.bf16.msra.mxu0 0
    %3965 = vmatprep.subr.bf16.mxu0 0
    %3966 = vmatpush2.bf16.msra.mxu0 0
    %3967 = vmatprep.mubr.bf16.mxu0 0
    %3968 = vmatmul.mubr.bf16.gmra.mxu0 %v3930
    %v3969 = vpop.f32.mrf.mxu0
    %v3970 = vadd.f32 0.0, %v3969
    %v3971 = vpop.f32.mrf.mxu0
    %v3972 = vpop.f32.mrf.mxu0
    %v3973 = vadd.f32 0.0, %v3972
    %v3974 = vpop.f32.mrf.mxu0
    %3975 = vmatprep.mubr.bf16.mxu0 0
    %3976 = vmatmul.mubr.bf16.gmra.mxu0 %v3933
    %v3977 = vpop.f32.mrf.mxu0
    %v3978 = vadd.f32 0.0, %v3977
    %v3979 = vpop.f32.mrf.mxu0
    %v3980 = vpop.f32.mrf.mxu0
    %v3981 = vadd.f32 0.0, %v3980
    %v3982 = vpop.f32.mrf.mxu0
    %3983 = vdwg.mxu0
    %v3985 = vsel %vm1184, %v3923, 0
    %v3988 = vsel %vm1184, %v3924, 0
    %3990 = vmatprep.subr.bf16.mxu0 0
    %3991 = vmatpush1.bf16.msra.mxu0 0
    %3992 = vmatprep.subr.bf16.mxu0 0
    %3993 = vmatpush1.bf16.msra.mxu0 0
    %3994 = vmatprep.subr.bf16.mxu0 0
    %3995 = vmatpush1.bf16.msra.mxu0 0
    %3996 = vmatprep.subr.bf16.mxu0 0
    %3997 = vmatpush1.bf16.msra.mxu0 0
    %3998 = vmatprep.subr.bf16.mxu0 0
    %3999 = vmatpush1.bf16.msra.mxu0 0
    %4000 = vmatprep.subr.bf16.mxu0 0
    %4001 = vmatpush1.bf16.msra.mxu0 0
    %4002 = vmatprep.subr.bf16.mxu0 0
    %4003 = vmatpush1.bf16.msra.mxu0 %v3464
    %4004 = vmatprep.subr.bf16.mxu0 0
    %4005 = vmatpush1.bf16.msra.mxu0 %v3463
    %4006 = vmatprep.subr.bf16.mxu0 0
    %4007 = vmatpush2.bf16.msra.mxu0 0
    %4008 = vmatprep.subr.bf16.mxu0 0
    %4009 = vmatpush2.bf16.msra.mxu0 0
    %4010 = vmatprep.subr.bf16.mxu0 0
    %4011 = vmatpush2.bf16.msra.mxu0 0
    %4012 = vmatprep.subr.bf16.mxu0 0
    %4013 = vmatpush2.bf16.msra.mxu0 0
    %4014 = vmatprep.subr.bf16.mxu0 0
    %4015 = vmatpush2.bf16.msra.mxu0 0
    %4016 = vmatprep.subr.bf16.mxu0 0
    %4017 = vmatpush2.bf16.msra.mxu0 0
    %4018 = vmatprep.subr.bf16.mxu0 0
    %4019 = vmatpush2.bf16.msra.mxu0 0
    %4020 = vmatprep.subr.bf16.mxu0 0
    %4021 = vmatpush2.bf16.msra.mxu0 0
    %4022 = vmatprep.mubr.bf16.mxu0 0
    %4023 = vmatmul.mubr.bf16.gmra.mxu0 %v3985
    %v4024 = vpop.f32.mrf.mxu0
    %v4025 = vadd.f32 0.0, %v4024
    %v4026 = vpop.f32.mrf.mxu0
    %v4027 = vpop.f32.mrf.mxu0
    %v4028 = vadd.f32 0.0, %v4027
    %v4029 = vpop.f32.mrf.mxu0
    %4030 = vmatprep.mubr.bf16.mxu0 0
    %4031 = vmatmul.mubr.bf16.gmra.mxu0 %v3988
    %v4032 = vpop.f32.mrf.mxu0
    %v4033 = vadd.f32 0.0, %v4032
    %v4034 = vpop.f32.mrf.mxu0
    %v4035 = vpop.f32.mrf.mxu0
    %v4036 = vadd.f32 0.0, %v4035
    %v4037 = vpop.f32.mrf.mxu0
    %4038 = vdwg.mxu0
    %v4040 = vsel %vm1184, %v3925, 0
    %v4043 = vsel %vm1184, %v3926, 0
    %4045 = vmatprep.subr.bf16.mxu0 0
    %4046 = vmatpush1.bf16.msra.mxu0 0
    %4047 = vmatprep.subr.bf16.mxu0 0
    %4048 = vmatpush1.bf16.msra.mxu0 0
    %4049 = vmatprep.subr.bf16.mxu0 0
    %4050 = vmatpush1.bf16.msra.mxu0 0
    %4051 = vmatprep.subr.bf16.mxu0 0
    %4052 = vmatpush1.bf16.msra.mxu0 0
    %4053 = vmatprep.subr.bf16.mxu0 0
    %4054 = vmatpush1.bf16.msra.mxu0 0
    %4055 = vmatprep.subr.bf16.mxu0 0
    %4056 = vmatpush1.bf16.msra.mxu0 0
    %4057 = vmatprep.subr.bf16.mxu0 0
    %4058 = vmatpush1.bf16.msra.mxu0 %v3466
    %4059 = vmatprep.subr.bf16.mxu0 0
    %4060 = vmatpush1.bf16.msra.mxu0 %v3465
    %4061 = vmatprep.subr.bf16.mxu0 0
    %4062 = vmatpush2.bf16.msra.mxu0 0
    %4063 = vmatprep.subr.bf16.mxu0 0
    %4064 = vmatpush2.bf16.msra.mxu0 0
    %4065 = vmatprep.subr.bf16.mxu0 0
    %4066 = vmatpush2.bf16.msra.mxu0 0
    %4067 = vmatprep.subr.bf16.mxu0 0
    %4068 = vmatpush2.bf16.msra.mxu0 0
    %4069 = vmatprep.subr.bf16.mxu0 0
    %4070 = vmatpush2.bf16.msra.mxu0 0
    %4071 = vmatprep.subr.bf16.mxu0 0
    %4072 = vmatpush2.bf16.msra.mxu0 0
    %4073 = vmatprep.subr.bf16.mxu0 0
    %4074 = vmatpush2.bf16.msra.mxu0 0
    %4075 = vmatprep.subr.bf16.mxu0 0
    %4076 = vmatpush2.bf16.msra.mxu0 0
    %4077 = vmatprep.mubr.bf16.mxu0 0
    %4078 = vmatmul.mubr.bf16.gmra.mxu0 %v4040
    %v4079 = vpop.f32.mrf.mxu0
    %v4080 = vadd.f32 0.0, %v4079
    %v4081 = vpop.f32.mrf.mxu0
    %v4082 = vpop.f32.mrf.mxu0
    %v4083 = vadd.f32 0.0, %v4082
    %v4084 = vpop.f32.mrf.mxu0
    %4085 = vmatprep.mubr.bf16.mxu0 0
    %4086 = vmatmul.mubr.bf16.gmra.mxu0 %v4043
    %v4087 = vpop.f32.mrf.mxu0
    %v4088 = vadd.f32 0.0, %v4087
    %v4089 = vpop.f32.mrf.mxu0
    %v4090 = vpop.f32.mrf.mxu0
    %v4091 = vadd.f32 0.0, %v4090
    %v4092 = vpop.f32.mrf.mxu0
    %4093 = vdwg.mxu0
    %v4095 = vsel %vm1184, %v3927, 0
    %v4098 = vsel %vm1184, %v3928, 0
    %4100 = vmatprep.subr.bf16.mxu0 0
    %4101 = vmatpush1.bf16.msra.mxu0 0
    %4102 = vmatprep.subr.bf16.mxu0 0
    %4103 = vmatpush1.bf16.msra.mxu0 0
    %4104 = vmatprep.subr.bf16.mxu0 0
    %4105 = vmatpush1.bf16.msra.mxu0 0
    %4106 = vmatprep.subr.bf16.mxu0 0
    %4107 = vmatpush1.bf16.msra.mxu0 0
    %4108 = vmatprep.subr.bf16.mxu0 0
    %4109 = vmatpush1.bf16.msra.mxu0 0
    %4110 = vmatprep.subr.bf16.mxu0 0
    %4111 = vmatpush1.bf16.msra.mxu0 0
    %4112 = vmatprep.subr.bf16.mxu0 0
    %4113 = vmatpush1.bf16.msra.mxu0 %v3468
    %4114 = vmatprep.subr.bf16.mxu0 0
    %4115 = vmatpush1.bf16.msra.mxu0 %v3467
    %4116 = vmatprep.subr.bf16.mxu0 0
    %4117 = vmatpush2.bf16.msra.mxu0 0
    %4118 = vmatprep.subr.bf16.mxu0 0
    %4119 = vmatpush2.bf16.msra.mxu0 0
    %4120 = vmatprep.subr.bf16.mxu0 0
    %4121 = vmatpush2.bf16.msra.mxu0 0
    %4122 = vmatprep.subr.bf16.mxu0 0
    %4123 = vmatpush2.bf16.msra.mxu0 0
    %4124 = vmatprep.subr.bf16.mxu0 0
    %4125 = vmatpush2.bf16.msra.mxu0 0
    %4126 = vmatprep.subr.bf16.mxu0 0
    %4127 = vmatpush2.bf16.msra.mxu0 0
    %4128 = vmatprep.subr.bf16.mxu0 0
    %4129 = vmatpush2.bf16.msra.mxu0 0
    %4130 = vmatprep.subr.bf16.mxu0 0
    %4131 = vmatpush2.bf16.msra.mxu0 0
    %4132 = vmatprep.mubr.bf16.mxu0 0
    %4133 = vmatmul.mubr.bf16.gmra.mxu0 %v4095
    %v4134 = vpop.f32.mrf.mxu0
    %v4135 = vadd.f32 0.0, %v4134
    %v4136 = vpop.f32.mrf.mxu0
    %v4137 = vpop.f32.mrf.mxu0
    %v4138 = vadd.f32 0.0, %v4137
    %v4139 = vpop.f32.mrf.mxu0
    %4140 = vmatprep.mubr.bf16.mxu0 0
    %4141 = vmatmul.mubr.bf16.gmra.mxu0 %v4098
    %v4142 = vpop.f32.mrf.mxu0
    %v4143 = vadd.f32 0.0, %v4142
    %v4144 = vpop.f32.mrf.mxu0
    %v4145 = vpop.f32.mrf.mxu0
    %v4146 = vadd.f32 0.0, %v4145
    %v4147 = vpop.f32.mrf.mxu0
    %4148 = vdwg.mxu0
    %4149 = vxpose.xlu0.b32.start [1/16] %v3970, 128
    %4150 = vxpose.xlu0.b32.cont [2/16] %v3973, 128
    %4151 = vxpose.xlu0.b32.cont [3/16] %v3978, 128
    %4152 = vxpose.xlu0.b32.cont [4/16] %v3981, 128
    %4153 = vxpose.xlu0.b32.cont [5/16] 0.0, 128
    %4154 = vxpose.xlu0.b32.cont [6/16] 0.0, 128
    %4155 = vxpose.xlu0.b32.cont [7/16] 0.0, 128
    %4156 = vxpose.xlu0.b32.cont [8/16] 0.0, 128
    %4157 = vxpose.xlu0.b32.cont [9/16] 0.0, 128
    %4158 = vxpose.xlu0.b32.cont [10/16] 0.0, 128
    %4159 = vxpose.xlu0.b32.cont [11/16] 0.0, 128
    %4160 = vxpose.xlu0.b32.cont [12/16] 0.0, 128
    %4161 = vxpose.xlu0.b32.cont [13/16] 0.0, 128
    %4162 = vxpose.xlu0.b32.cont [14/16] 0.0, 128
    %4163 = vxpose.xlu0.b32.cont [15/16] 0.0, 128
    %4164 = vxpose.xlu0.b32.end [16/16] 0.0, 128
    %v4165 = vpop.trf.xlu0
    %v4166 = vpop.trf.xlu0
    %v4167 = vpop.trf.xlu0
    %v4168 = vpop.trf.xlu0
    %v4169 = vpop.trf.xlu0
    %v4170 = vpop.trf.xlu0
    %v4171 = vpop.trf.xlu0
    %v4172 = vpop.trf.xlu0
    %v4173 = vpop.trf.xlu0
    %v4174 = vpop.trf.xlu0
    %v4175 = vpop.trf.xlu0
    %v4176 = vpop.trf.xlu0
    %v4177 = vpop.trf.xlu0
    %v4178 = vpop.trf.xlu0
    %v4179 = vpop.trf.xlu0
    %v4180 = vpop.trf.xlu0
    %4181 = vxpose.xlu0.b32.start [1/16] %v4025, 128
    %4182 = vxpose.xlu0.b32.cont [2/16] %v4028, 128
    %4183 = vxpose.xlu0.b32.cont [3/16] %v4033, 128
    %4184 = vxpose.xlu0.b32.cont [4/16] %v4036, 128
    %4185 = vxpose.xlu0.b32.cont [5/16] 0.0, 128
    %4186 = vxpose.xlu0.b32.cont [6/16] 0.0, 128
    %4187 = vxpose.xlu0.b32.cont [7/16] 0.0, 128
    %4188 = vxpose.xlu0.b32.cont [8/16] 0.0, 128
    %4189 = vxpose.xlu0.b32.cont [9/16] 0.0, 128
    %4190 = vxpose.xlu0.b32.cont [10/16] 0.0, 128
    %4191 = vxpose.xlu0.b32.cont [11/16] 0.0, 128
    %4192 = vxpose.xlu0.b32.cont [12/16] 0.0, 128
    %4193 = vxpose.xlu0.b32.cont [13/16] 0.0, 128
    %4194 = vxpose.xlu0.b32.cont [14/16] 0.0, 128
    %4195 = vxpose.xlu0.b32.cont [15/16] 0.0, 128
    %4196 = vxpose.xlu0.b32.end [16/16] 0.0, 128
    %v4197 = vpop.trf.xlu0
    %v4198 = vpop.trf.xlu0
    %v4199 = vpop.trf.xlu0
    %v4200 = vpop.trf.xlu0
    %v4201 = vpop.trf.xlu0
    %v4202 = vpop.trf.xlu0
    %v4203 = vpop.trf.xlu0
    %v4204 = vpop.trf.xlu0
    %v4205 = vpop.trf.xlu0
    %v4206 = vpop.trf.xlu0
    %v4207 = vpop.trf.xlu0
    %v4208 = vpop.trf.xlu0
    %v4209 = vpop.trf.xlu0
    %v4210 = vpop.trf.xlu0
    %v4211 = vpop.trf.xlu0
    %v4212 = vpop.trf.xlu0
    %4213 = vxpose.xlu0.b32.start [1/16] %v4080, 128
    %4214 = vxpose.xlu0.b32.cont [2/16] %v4083, 128
    %4215 = vxpose.xlu0.b32.cont [3/16] %v4088, 128
    %4216 = vxpose.xlu0.b32.cont [4/16] %v4091, 128
    %4217 = vxpose.xlu0.b32.cont [5/16] 0.0, 128
    %4218 = vxpose.xlu0.b32.cont [6/16] 0.0, 128
    %4219 = vxpose.xlu0.b32.cont [7/16] 0.0, 128
    %4220 = vxpose.xlu0.b32.cont [8/16] 0.0, 128
    %4221 = vxpose.xlu0.b32.cont [9/16] 0.0, 128
    %4222 = vxpose.xlu0.b32.cont [10/16] 0.0, 128
    %4223 = vxpose.xlu0.b32.cont [11/16] 0.0, 128
    %4224 = vxpose.xlu0.b32.cont [12/16] 0.0, 128
    %4225 = vxpose.xlu0.b32.cont [13/16] 0.0, 128
    %4226 = vxpose.xlu0.b32.cont [14/16] 0.0, 128
    %4227 = vxpose.xlu0.b32.cont [15/16] 0.0, 128
    %4228 = vxpose.xlu0.b32.end [16/16] 0.0, 128
    %v4229 = vpop.trf.xlu0
    %v4230 = vpop.trf.xlu0
    %v4231 = vpop.trf.xlu0
    %v4232 = vpop.trf.xlu0
    %v4233 = vpop.trf.xlu0
    %v4234 = vpop.trf.xlu0
    %v4235 = vpop.trf.xlu0
    %v4236 = vpop.trf.xlu0
    %v4237 = vpop.trf.xlu0
    %v4238 = vpop.trf.xlu0
    %v4239 = vpop.trf.xlu0
    %v4240 = vpop.trf.xlu0
    %v4241 = vpop.trf.xlu0
    %v4242 = vpop.trf.xlu0
    %v4243 = vpop.trf.xlu0
    %v4244 = vpop.trf.xlu0
    %4245 = vxpose.xlu0.b32.start [1/16] %v4135, 128
    %4246 = vxpose.xlu0.b32.cont [2/16] %v4138, 128
    %4247 = vxpose.xlu0.b32.cont [3/16] %v4143, 128
    %4248 = vxpose.xlu0.b32.cont [4/16] %v4146, 128
    %4249 = vxpose.xlu0.b32.cont [5/16] 0.0, 128
    %4250 = vxpose.xlu0.b32.cont [6/16] 0.0, 128
    %4251 = vxpose.xlu0.b32.cont [7/16] 0.0, 128
    %4252 = vxpose.xlu0.b32.cont [8/16] 0.0, 128
    %4253 = vxpose.xlu0.b32.cont [9/16] 0.0, 128
    %4254 = vxpose.xlu0.b32.cont [10/16] 0.0, 128
    %4255 = vxpose.xlu0.b32.cont [11/16] 0.0, 128
    %4256 = vxpose.xlu0.b32.cont [12/16] 0.0, 128
    %4257 = vxpose.xlu0.b32.cont [13/16] 0.0, 128
    %4258 = vxpose.xlu0.b32.cont [14/16] 0.0, 128
    %4259 = vxpose.xlu0.b32.cont [15/16] 0.0, 128
    %4260 = vxpose.xlu0.b32.end [16/16] 0.0, 128
    %v4261 = vpop.trf.xlu0
    %v4262 = vpop.trf.xlu0
    %v4263 = vpop.trf.xlu0
    %v4264 = vpop.trf.xlu0
    %v4265 = vpop.trf.xlu0
    %v4266 = vpop.trf.xlu0
    %v4267 = vpop.trf.xlu0
    %v4268 = vpop.trf.xlu0
    %v4269 = vpop.trf.xlu0
    %v4270 = vpop.trf.xlu0
    %v4271 = vpop.trf.xlu0
    %v4272 = vpop.trf.xlu0
    %v4273 = vpop.trf.xlu0
    %v4274 = vpop.trf.xlu0
    %v4275 = vpop.trf.xlu0
    %v4276 = vpop.trf.xlu0
    %4277 = vxpose.xlu0.b32.start [1/16] %v4165, 128
    %4278 = vxpose.xlu0.b32.cont [2/16] %v4166, 128
    %4279 = vxpose.xlu0.b32.cont [3/16] %v4167, 128
    %4280 = vxpose.xlu0.b32.cont [4/16] %v4168, 128
    %4281 = vxpose.xlu0.b32.cont [5/16] %v4197, 128
    %4282 = vxpose.xlu0.b32.cont [6/16] %v4198, 128
    %4283 = vxpose.xlu0.b32.cont [7/16] %v4199, 128
    %4284 = vxpose.xlu0.b32.cont [8/16] %v4200, 128
    %4285 = vxpose.xlu0.b32.cont [9/16] %v4229, 128
    %4286 = vxpose.xlu0.b32.cont [10/16] %v4230, 128
    %4287 = vxpose.xlu0.b32.cont [11/16] %v4231, 128
    %4288 = vxpose.xlu0.b32.cont [12/16] %v4232, 128
    %4289 = vxpose.xlu0.b32.cont [13/16] %v4261, 128
    %4290 = vxpose.xlu0.b32.cont [14/16] %v4262, 128
    %4291 = vxpose.xlu0.b32.cont [15/16] %v4263, 128
    %4292 = vxpose.xlu0.b32.end [16/16] %v4264, 128
    %v4293 = vpop.trf.xlu0
    %v4294 = vpop.trf.xlu0
    %v4295 = vpop.trf.xlu0
    %v4296 = vpop.trf.xlu0
    %v4297 = vpop.trf.xlu0
    %v4298 = vpop.trf.xlu0
    %v4299 = vpop.trf.xlu0
    %v4300 = vpop.trf.xlu0
    %v4301 = vpop.trf.xlu0
    %v4302 = vpop.trf.xlu0
    %v4303 = vpop.trf.xlu0
    %v4304 = vpop.trf.xlu0
    %v4305 = vpop.trf.xlu0
    %v4306 = vpop.trf.xlu0
    %v4307 = vpop.trf.xlu0
    %v4308 = vpop.trf.xlu0
    %s4309 = scalar_lea.vmem [#allocation7], 64
    %v4310 = vld [vmem:[%s4309] sm:$0xf]
    %v4311 = vld [vmem:[%s4309 + $0x4] sm:$0xf]
    %v4312 = vld [vmem:[%s4309 + $0x8] sm:$0xf]
    %v4313 = vld [vmem:[%s4309 + $0xc] sm:$0xf]
    %v4314 = vld [vmem:[%s4309 + $0x10] sm:$0xf]
    %v4315 = vld [vmem:[%s4309 + $0x14] sm:$0xf]
    %v4316 = vld [vmem:[%s4309 + $0x18] sm:$0xf]
    %v4317 = vld [vmem:[%s4309 + $0x1c] sm:$0xf]
    %v4318 = vld [vmem:[%s4309 + $0x20] sm:$0xf]
    %v4319 = vld [vmem:[%s4309 + $0x24] sm:$0xf]
    %v4320 = vld [vmem:[%s4309 + $0x28] sm:$0xf]
    %v4321 = vld [vmem:[%s4309 + $0x2c] sm:$0xf]
    %v4322 = vld [vmem:[%s4309 + $0x30] sm:$0xf]
    %v4323 = vld [vmem:[%s4309 + $0x34] sm:$0xf]
    %v4324 = vld [vmem:[%s4309 + $0x38] sm:$0xf]
    %v4325 = vld [vmem:[%s4309 + $0x3c] sm:$0xf]
    %v4326 = vpack.c.bf16 %v4294, %v4293
    %v4327 = vpack.c.bf16 %v4296, %v4295
    %v4328 = vlaneseq
    %v4329 = vshrl.u32 %v4328, 7
    %v4330 = vsub.s32 3, %v4329
    %v4331 = vrot.slane %v157, %v4330
    %v4348 = vunpack.c.l.b16 %v4310
    %v4349 = vunpack.c.l.b16 %v4311
    %v4350 = vunpack.c.l.b16 %v4312
    %v4351 = vunpack.c.l.b16 %v4313
    %v4352 = vunpack.c.l.b16 %v4314
    %v4353 = vunpack.c.l.b16 %v4315
    %v4354 = vunpack.c.l.b16 %v4316
    %v4355 = vunpack.c.l.b16 %v4317
    %v4356 = vunpack.c.l.b16 %v4318
    %v4357 = vunpack.c.l.b16 %v4319
    %v4358 = vunpack.c.l.b16 %v4320
    %v4359 = vunpack.c.l.b16 %v4321
    %v4360 = vunpack.c.l.b16 %v4322
    %v4361 = vunpack.c.l.b16 %v4323
    %v4362 = vunpack.c.l.b16 %v4324
    %v4363 = vunpack.c.l.b16 %v4325
    %v4364 = vpack.c.b16 %v4349, %v4348
    %v4365 = vpack.c.b16 %v4351, %v4350
    %v4366 = vpack.c.b16 %v4353, %v4352
    %v4367 = vpack.c.b16 %v4355, %v4354
    %v4368 = vpack.c.b16 %v4357, %v4356
    %v4369 = vpack.c.b16 %v4359, %v4358
    %v4370 = vpack.c.b16 %v4361, %v4360
    %v4371 = vpack.c.b16 %v4363, %v4362
    %4380 = vmatprep.subr.bf16.mxu0 0
    %4381 = vmatpush1.bf16.msra.mxu0 %v4371
    %4382 = vmatprep.subr.bf16.mxu0 0
    %4383 = vmatpush1.bf16.msra.mxu0 %v4370
    %4384 = vmatprep.subr.bf16.mxu0 0
    %4385 = vmatpush1.bf16.msra.mxu0 %v4369
    %4386 = vmatprep.subr.bf16.mxu0 0
    %4387 = vmatpush1.bf16.msra.mxu0 %v4368
    %4388 = vmatprep.subr.bf16.mxu0 0
    %4389 = vmatpush1.bf16.msra.mxu0 %v4367
    %4390 = vmatprep.subr.bf16.mxu0 0
    %4391 = vmatpush1.bf16.msra.mxu0 %v4366
    %4392 = vmatprep.subr.bf16.mxu0 0
    %4393 = vmatpush1.bf16.msra.mxu0 %v4365
    %4394 = vmatprep.subr.bf16.mxu0 0
    %4395 = vmatpush1.bf16.msra.mxu0 %v4364
    %4396 = vmatprep.subr.bf16.mxu0 0
    %4397 = vmatpush2.bf16.msra.mxu0 0
    %4398 = vmatprep.subr.bf16.mxu0 0
    %4399 = vmatpush2.bf16.msra.mxu0 0
    %4400 = vmatprep.subr.bf16.mxu0 0
    %4401 = vmatpush2.bf16.msra.mxu0 0
    %4402 = vmatprep.subr.bf16.mxu0 0
    %4403 = vmatpush2.bf16.msra.mxu0 0
    %4404 = vmatprep.subr.bf16.mxu0 0
    %4405 = vmatpush2.bf16.msra.mxu0 0
    %4406 = vmatprep.subr.bf16.mxu0 0
    %4407 = vmatpush2.bf16.msra.mxu0 0
    %4408 = vmatprep.subr.bf16.mxu0 0
    %4409 = vmatpush2.bf16.msra.mxu0 0
    %4410 = vmatprep.subr.bf16.mxu0 0
    %4411 = vmatpush2.bf16.msra.mxu0 0
    %4412 = vmatprep.mubr.bf16.mxu0 0
    %4413 = vmatmul.mubr.bf16.gmra.mxu0 %v4326
    %v4414 = vpop.f32.mrf.mxu0
    %v4415 = vadd.f32 %v4331, %v4414
    %v4416 = vpop.f32.mrf.mxu0
    %v4417 = vpop.f32.mrf.mxu0
    %v4418 = vadd.f32 %v4331, %v4417
    %v4419 = vpop.f32.mrf.mxu0
    %4420 = vmatprep.mubr.bf16.mxu0 0
    %4421 = vmatmul.mubr.bf16.gmra.mxu0 %v4327
    %v4422 = vpop.f32.mrf.mxu0
    %v4423 = vadd.f32 %v4331, %v4422
    %v4424 = vpop.f32.mrf.mxu0
    %v4425 = vpop.f32.mrf.mxu0
    %v4426 = vadd.f32 %v4331, %v4425
    %v4427 = vpop.f32.mrf.mxu0
    %4428 = vdwg.mxu0
    %v4429 = vadd.f32 %v2684, %v4415
    %v4430 = vadd.f32 %v2685, %v4418
    %v4431 = vadd.f32 %v2686, %v4423
    %v4432 = vadd.f32 %v2687, %v4426
    %4433 = vadd.xlane.f32.xlu0 %v4429
    %v4434 = vpop.xlane.xlu0 %4433
    %4435 = vadd.xlane.f32.xlu0 %v4430
    %v4436 = vpop.xlane.xlu0 %4435
    %4437 = vadd.xlane.f32.xlu0 %v4431
    %v4438 = vpop.xlane.xlu0 %4437
    %4439 = vadd.xlane.f32.xlu0 %v4432
    %v4440 = vpop.xlane.xlu0 %4439
    %v4441 = vmul.f32 %v4434, %v312
    %v4442 = vmul.f32 %v4436, %v312
    %v4443 = vmul.f32 %v4438, %v312
    %v4444 = vmul.f32 %v4440, %v312
    %v4445 = vsub.f32 %v4429, %v4441
    %v4446 = vsub.f32 %v4430, %v4442
    %v4447 = vsub.f32 %v4431, %v4443
    %v4448 = vsub.f32 %v4432, %v4444
    %v4449 = vmul.f32 %v4445, %v4445
    %v4450 = vmul.f32 %v4446, %v4446
    %v4451 = vmul.f32 %v4447, %v4447
    %v4452 = vmul.f32 %v4448, %v4448
    %4453 = vadd.xlane.f32.xlu0 %v4449
    %v4454 = vpop.xlane.xlu0 %4453
    %4455 = vadd.xlane.f32.xlu0 %v4450
    %v4456 = vpop.xlane.xlu0 %4455
    %4457 = vadd.xlane.f32.xlu0 %v4451
    %v4458 = vpop.xlane.xlu0 %4457
    %4459 = vadd.xlane.f32.xlu0 %v4452
    %v4460 = vpop.xlane.xlu0 %4459
    %v4461 = vmul.f32 %v4454, %v312
    %v4462 = vmul.f32 %v4456, %v312
    %v4463 = vmul.f32 %v4458, %v312
    %v4464 = vmul.f32 %v4460, %v312
    %v4465 = vadd.f32 %v4461, 1e-12
    %v4466 = vadd.f32 %v4462, 1e-12
    %v4467 = vadd.f32 %v4463, 1e-12
    %v4468 = vadd.f32 %v4464, 1e-12
    %v4469 = vrsqrt.pop %v4465
    %v4470 = vrsqrt.pop %v4466
    %v4471 = vrsqrt.pop %v4467
    %v4472 = vrsqrt.pop %v4468
    %v4473 = vmul.f32 %v4445, %v4469
    %v4474 = vmul.f32 %v4446, %v4470
    %v4475 = vmul.f32 %v4447, %v4471
    %v4476 = vmul.f32 %v4448, %v4472
    %v4477 = vlaneseq
    %v4478 = vshrl.u32 %v4477, 7
    %v4479 = vsub.s32 4, %v4478
    %v4480 = vrot.slane %v157, %v4479
    %v4481 = vmul.f32 %v4473, %v4480
    %v4482 = vmul.f32 %v4474, %v4480
    %v4483 = vmul.f32 %v4475, %v4480
    %v4484 = vmul.f32 %v4476, %v4480
    %v4485 = vlaneseq
    %v4486 = vshrl.u32 %v4485, 7
    %v4487 = vsub.s32 5, %v4486
    %v4488 = vrot.slane %v157, %v4487
    %v4489 = vadd.f32 %v4481, %v4488
    %v4490 = vadd.f32 %v4482, %v4488
    %v4491 = vadd.f32 %v4483, %v4488
    %v4492 = vadd.f32 %v4484, %v4488
    %s4493 = scalar_lea.vmem [#allocation9], 128
    %v4494 = vld [vmem:[%s4493] sm:$0xff]
    %v4495 = vld [vmem:[%s4493 + $0x8] sm:$0xff]
    %v4496 = vld [vmem:[%s4493 + $0x10] sm:$0xff]
    %v4497 = vld [vmem:[%s4493 + $0x18] sm:$0xff]
    %v4498 = vld [vmem:[%s4493 + $0x20] sm:$0xff]
    %v4499 = vld [vmem:[%s4493 + $0x28] sm:$0xff]
    %v4500 = vld [vmem:[%s4493 + $0x30] sm:$0xff]
    %v4501 = vld [vmem:[%s4493 + $0x38] sm:$0xff]
    %v4502 = vld [vmem:[%s4493 + $0x40] sm:$0xff]
    %v4503 = vld [vmem:[%s4493 + $0x48] sm:$0xff]
    %v4504 = vld [vmem:[%s4493 + $0x50] sm:$0xff]
    %v4505 = vld [vmem:[%s4493 + $0x58] sm:$0xff]
    %v4506 = vld [vmem:[%s4493 + $0x60] sm:$0xff]
    %v4507 = vld [vmem:[%s4493 + $0x68] sm:$0xff]
    %v4508 = vld [vmem:[%s4493 + $0x70] sm:$0xff]
    %v4509 = vld [vmem:[%s4493 + $0x78] sm:$0xff]
    %v4510 = vpack.c.bf16 %v4490, %v4489
    %v4511 = vpack.c.bf16 %v4492, %v4491
    %v4512 = vlaneseq
    %v4513 = vshrl.u32 %v4512, 7
    %v4514 = vsub.s32 6, %v4513
    %v4515 = vrot.slane %v157, %v4514
    %v4516 = vlaneseq
    %v4517 = vshrl.u32 %v4516, 7
    %v4518 = vsub.s32 6, %v4517
    %v4519 = vrot.slane %v158, %v4518
    %v4536 = vunpack.c.l.b16 %v4494
    %v4537 = vunpack.c.h.b16 %v4494
    %v4538 = vunpack.c.l.b16 %v4495
    %v4539 = vunpack.c.h.b16 %v4495
    %v4540 = vunpack.c.l.b16 %v4496
    %v4541 = vunpack.c.h.b16 %v4496
    %v4542 = vunpack.c.l.b16 %v4497
    %v4543 = vunpack.c.h.b16 %v4497
    %v4544 = vunpack.c.l.b16 %v4498
    %v4545 = vunpack.c.h.b16 %v4498
    %v4546 = vunpack.c.l.b16 %v4499
    %v4547 = vunpack.c.h.b16 %v4499
    %v4548 = vunpack.c.l.b16 %v4500
    %v4549 = vunpack.c.h.b16 %v4500
    %v4550 = vunpack.c.l.b16 %v4501
    %v4551 = vunpack.c.h.b16 %v4501
    %v4552 = vunpack.c.l.b16 %v4502
    %v4553 = vunpack.c.h.b16 %v4502
    %v4554 = vunpack.c.l.b16 %v4503
    %v4555 = vunpack.c.h.b16 %v4503
    %v4556 = vunpack.c.l.b16 %v4504
    %v4557 = vunpack.c.h.b16 %v4504
    %v4558 = vunpack.c.l.b16 %v4505
    %v4559 = vunpack.c.h.b16 %v4505
    %v4560 = vunpack.c.l.b16 %v4506
    %v4561 = vunpack.c.h.b16 %v4506
    %v4562 = vunpack.c.l.b16 %v4507
    %v4563 = vunpack.c.h.b16 %v4507
    %v4564 = vunpack.c.l.b16 %v4508
    %v4565 = vunpack.c.h.b16 %v4508
    %v4566 = vunpack.c.l.b16 %v4509
    %v4567 = vunpack.c.h.b16 %v4509
    %v4568 = vpack.c.b16 %v4538, %v4536
    %v4569 = vpack.c.b16 %v4539, %v4537
    %v4570 = vpack.c.b16 %v4542, %v4540
    %v4571 = vpack.c.b16 %v4543, %v4541
    %v4572 = vpack.c.b16 %v4546, %v4544
    %v4573 = vpack.c.b16 %v4547, %v4545
    %v4574 = vpack.c.b16 %v4550, %v4548
    %v4575 = vpack.c.b16 %v4551, %v4549
    %v4576 = vpack.c.b16 %v4554, %v4552
    %v4577 = vpack.c.b16 %v4555, %v4553
    %v4578 = vpack.c.b16 %v4558, %v4556
    %v4579 = vpack.c.b16 %v4559, %v4557
    %v4580 = vpack.c.b16 %v4562, %v4560
    %v4581 = vpack.c.b16 %v4563, %v4561
    %v4582 = vpack.c.b16 %v4566, %v4564
    %v4583 = vpack.c.b16 %v4567, %v4565
    %4600 = vmatprep.subr.bf16.mxu0 %v4583
    %4601 = vmatpush1.bf16.msra.mxu0 %v4582
    %4602 = vmatprep.subr.bf16.mxu0 %v4581
    %4603 = vmatpush1.bf16.msra.mxu0 %v4580
    %4604 = vmatprep.subr.bf16.mxu0 %v4579
    %4605 = vmatpush1.bf16.msra.mxu0 %v4578
    %4606 = vmatprep.subr.bf16.mxu0 %v4577
    %4607 = vmatpush1.bf16.msra.mxu0 %v4576
    %4608 = vmatprep.subr.bf16.mxu0 %v4575
    %4609 = vmatpush1.bf16.msra.mxu0 %v4574
    %4610 = vmatprep.subr.bf16.mxu0 %v4573
    %4611 = vmatpush1.bf16.msra.mxu0 %v4572
    %4612 = vmatprep.subr.bf16.mxu0 %v4571
    %4613 = vmatpush1.bf16.msra.mxu0 %v4570
    %4614 = vmatprep.subr.bf16.mxu0 %v4569
    %4615 = vmatpush1.bf16.msra.mxu0 %v4568
    %4616 = vmatprep.subr.bf16.mxu0 0
    %4617 = vmatpush2.bf16.msra.mxu0 0
    %4618 = vmatprep.subr.bf16.mxu0 0
    %4619 = vmatpush2.bf16.msra.mxu0 0
    %4620 = vmatprep.subr.bf16.mxu0 0
    %4621 = vmatpush2.bf16.msra.mxu0 0
    %4622 = vmatprep.subr.bf16.mxu0 0
    %4623 = vmatpush2.bf16.msra.mxu0 0
    %4624 = vmatprep.subr.bf16.mxu0 0
    %4625 = vmatpush2.bf16.msra.mxu0 0
    %4626 = vmatprep.subr.bf16.mxu0 0
    %4627 = vmatpush2.bf16.msra.mxu0 0
    %4628 = vmatprep.subr.bf16.mxu0 0
    %4629 = vmatpush2.bf16.msra.mxu0 0
    %4630 = vmatprep.subr.bf16.mxu0 0
    %4631 = vmatpush2.bf16.msra.mxu0 0
    %4632 = vmatprep.mubr.bf16.mxu0 0
    %4633 = vmatmul.mubr.bf16.gmra.mxu0 %v4510
    %v4634 = vpop.f32.mrf.mxu0
    %v4635 = vadd.f32 %v4515, %v4634
    %v4636 = vpop.f32.mrf.mxu0
    %v4637 = vadd.f32 %v4519, %v4636
    %v4638 = vpop.f32.mrf.mxu0
    %v4639 = vadd.f32 %v4515, %v4638
    %v4640 = vpop.f32.mrf.mxu0
    %v4641 = vadd.f32 %v4519, %v4640
    %4642 = vmatprep.mubr.bf16.mxu0 0
    %4643 = vmatmul.mubr.bf16.gmra.mxu0 %v4511
    %v4644 = vpop.f32.mrf.mxu0
    %v4645 = vadd.f32 %v4515, %v4644
    %v4646 = vpop.f32.mrf.mxu0
    %v4647 = vadd.f32 %v4519, %v4646
    %v4648 = vpop.f32.mrf.mxu0
    %v4649 = vadd.f32 %v4515, %v4648
    %v4650 = vpop.f32.mrf.mxu0
    %v4651 = vadd.f32 %v4519, %v4650
    %4652 = vdwg.mxu0
    %v4653 = vmul.f32 %v4635, %v4635
    %v4654 = vmul.f32 %v4637, %v4637
    %v4655 = vmul.f32 %v4639, %v4639
    %v4656 = vmul.f32 %v4641, %v4641
    %v4657 = vmul.f32 %v4645, %v4645
    %v4658 = vmul.f32 %v4647, %v4647
    %v4659 = vmul.f32 %v4649, %v4649
    %v4660 = vmul.f32 %v4651, %v4651
    %v4661 = vmul.f32 %v4635, %v4653
    %v4662 = vmul.f32 %v4637, %v4654
    %v4663 = vmul.f32 %v4639, %v4655
    %v4664 = vmul.f32 %v4641, %v4656
    %v4665 = vmul.f32 %v4645, %v4657
    %v4666 = vmul.f32 %v4647, %v4658
    %v4667 = vmul.f32 %v4649, %v4659
    %v4668 = vmul.f32 %v4651, %v4660
    %v4669 = vmul.f32 %v4661, 0.044715
    %v4670 = vmul.f32 %v4662, 0.044715
    %v4671 = vmul.f32 %v4663, 0.044715
    %v4672 = vmul.f32 %v4664, 0.044715
    %v4673 = vmul.f32 %v4665, 0.044715
    %v4674 = vmul.f32 %v4666, 0.044715
    %v4675 = vmul.f32 %v4667, 0.044715
    %v4676 = vmul.f32 %v4668, 0.044715
    %v4677 = vadd.f32 %v4635, %v4669
    %v4678 = vadd.f32 %v4637, %v4670
    %v4679 = vadd.f32 %v4639, %v4671
    %v4680 = vadd.f32 %v4641, %v4672
    %v4681 = vadd.f32 %v4645, %v4673
    %v4682 = vadd.f32 %v4647, %v4674
    %v4683 = vadd.f32 %v4649, %v4675
    %v4684 = vadd.f32 %v4651, %v4676
    %v4685 = vmul.f32 %v4677, 0.7978846
    %v4686 = vmul.f32 %v4678, 0.7978846
    %v4687 = vmul.f32 %v4679, 0.7978846
    %v4688 = vmul.f32 %v4680, 0.7978846
    %v4689 = vmul.f32 %v4681, 0.7978846
    %v4690 = vmul.f32 %v4682, 0.7978846
    %v4691 = vmul.f32 %v4683, 0.7978846
    %v4692 = vmul.f32 %v4684, 0.7978846
    %v4693 = vtanh.pop %v4685
    %v4694 = vtanh.pop %v4686
    %v4695 = vtanh.pop %v4687
    %v4696 = vtanh.pop %v4688
    %v4697 = vtanh.pop %v4689
    %v4698 = vtanh.pop %v4690
    %v4699 = vtanh.pop %v4691
    %v4700 = vtanh.pop %v4692
    %v4701 = vadd.f32 %v4693, 1.0
    %v4702 = vadd.f32 %v4694, 1.0
    %v4703 = vadd.f32 %v4695, 1.0
    %v4704 = vadd.f32 %v4696, 1.0
    %v4705 = vadd.f32 %v4697, 1.0
    %v4706 = vadd.f32 %v4698, 1.0
    %v4707 = vadd.f32 %v4699, 1.0
    %v4708 = vadd.f32 %v4700, 1.0
    %v4709 = vmul.f32 %v4701, 0.5
    %v4710 = vmul.f32 %v4702, 0.5
    %v4711 = vmul.f32 %v4703, 0.5
    %v4712 = vmul.f32 %v4704, 0.5
    %v4713 = vmul.f32 %v4705, 0.5
    %v4714 = vmul.f32 %v4706, 0.5
    %v4715 = vmul.f32 %v4707, 0.5
    %v4716 = vmul.f32 %v4708, 0.5
    %v4717 = vmul.f32 %v4635, %v4709
    %v4718 = vmul.f32 %v4637, %v4710
    %v4719 = vmul.f32 %v4639, %v4711
    %v4720 = vmul.f32 %v4641, %v4712
    %v4721 = vmul.f32 %v4645, %v4713
    %v4722 = vmul.f32 %v4647, %v4714
    %v4723 = vmul.f32 %v4649, %v4715
    %v4724 = vmul.f32 %v4651, %v4716
    %s4725 = scalar_lea.vmem [#allocation10], 128
    %v4726 = vld [vmem:[%s4725] sm:$0xf]
    %v4727 = vld [vmem:[%s4725 + $0x4] sm:$0xf]
    %v4728 = vld [vmem:[%s4725 + $0x8] sm:$0xf]
    %v4729 = vld [vmem:[%s4725 + $0xc] sm:$0xf]
    %v4730 = vld [vmem:[%s4725 + $0x10] sm:$0xf]
    %v4731 = vld [vmem:[%s4725 + $0x14] sm:$0xf]
    %v4732 = vld [vmem:[%s4725 + $0x18] sm:$0xf]
    %v4733 = vld [vmem:[%s4725 + $0x1c] sm:$0xf]
    %v4734 = vld [vmem:[%s4725 + $0x20] sm:$0xf]
    %v4735 = vld [vmem:[%s4725 + $0x24] sm:$0xf]
    %v4736 = vld [vmem:[%s4725 + $0x28] sm:$0xf]
    %v4737 = vld [vmem:[%s4725 + $0x2c] sm:$0xf]
    %v4738 = vld [vmem:[%s4725 + $0x30] sm:$0xf]
    %v4739 = vld [vmem:[%s4725 + $0x34] sm:$0xf]
    %v4740 = vld [vmem:[%s4725 + $0x38] sm:$0xf]
    %v4741 = vld [vmem:[%s4725 + $0x3c] sm:$0xf]
    %v4742 = vld [vmem:[%s4725 + $0x40] sm:$0xf]
    %v4743 = vld [vmem:[%s4725 + $0x44] sm:$0xf]
    %v4744 = vld [vmem:[%s4725 + $0x48] sm:$0xf]
    %v4745 = vld [vmem:[%s4725 + $0x4c] sm:$0xf]
    %v4746 = vld [vmem:[%s4725 + $0x50] sm:$0xf]
    %v4747 = vld [vmem:[%s4725 + $0x54] sm:$0xf]
    %v4748 = vld [vmem:[%s4725 + $0x58] sm:$0xf]
    %v4749 = vld [vmem:[%s4725 + $0x5c] sm:$0xf]
    %v4750 = vld [vmem:[%s4725 + $0x60] sm:$0xf]
    %v4751 = vld [vmem:[%s4725 + $0x64] sm:$0xf]
    %v4752 = vld [vmem:[%s4725 + $0x68] sm:$0xf]
    %v4753 = vld [vmem:[%s4725 + $0x6c] sm:$0xf]
    %v4754 = vld [vmem:[%s4725 + $0x70] sm:$0xf]
    %v4755 = vld [vmem:[%s4725 + $0x74] sm:$0xf]
    %v4756 = vld [vmem:[%s4725 + $0x78] sm:$0xf]
    %v4757 = vld [vmem:[%s4725 + $0x7c] sm:$0xf]
    %v4758 = vpack.c.bf16 %v4719, %v4717
    %v4759 = vpack.c.bf16 %v4720, %v4718
    %v4760 = vpack.c.bf16 %v4723, %v4721
    %v4761 = vpack.c.bf16 %v4724, %v4722
    %v4762 = vlaneseq
    %v4763 = vshrl.u32 %v4762, 7
    %v4764 = vsub.s32 7, %v4763
    %v4765 = vrot.slane %v157, %v4764
    %v4798 = vunpack.c.l.b16 %v4726
    %v4799 = vunpack.c.l.b16 %v4727
    %v4800 = vunpack.c.l.b16 %v4728
    %v4801 = vunpack.c.l.b16 %v4729
    %v4802 = vunpack.c.l.b16 %v4730
    %v4803 = vunpack.c.l.b16 %v4731
    %v4804 = vunpack.c.l.b16 %v4732
    %v4805 = vunpack.c.l.b16 %v4733
    %v4806 = vunpack.c.l.b16 %v4734
    %v4807 = vunpack.c.l.b16 %v4735
    %v4808 = vunpack.c.l.b16 %v4736
    %v4809 = vunpack.c.l.b16 %v4737
    %v4810 = vunpack.c.l.b16 %v4738
    %v4811 = vunpack.c.l.b16 %v4739
    %v4812 = vunpack.c.l.b16 %v4740
    %v4813 = vunpack.c.l.b16 %v4741
    %v4814 = vunpack.c.l.b16 %v4742
    %v4815 = vunpack.c.l.b16 %v4743
    %v4816 = vunpack.c.l.b16 %v4744
    %v4817 = vunpack.c.l.b16 %v4745
    %v4818 = vunpack.c.l.b16 %v4746
    %v4819 = vunpack.c.l.b16 %v4747
    %v4820 = vunpack.c.l.b16 %v4748
    %v4821 = vunpack.c.l.b16 %v4749
    %v4822 = vunpack.c.l.b16 %v4750
    %v4823 = vunpack.c.l.b16 %v4751
    %v4824 = vunpack.c.l.b16 %v4752
    %v4825 = vunpack.c.l.b16 %v4753
    %v4826 = vunpack.c.l.b16 %v4754
    %v4827 = vunpack.c.l.b16 %v4755
    %v4828 = vunpack.c.l.b16 %v4756
    %v4829 = vunpack.c.l.b16 %v4757
    %v4830 = vpack.c.b16 %v4799, %v4798
    %v4831 = vpack.c.b16 %v4801, %v4800
    %v4832 = vpack.c.b16 %v4803, %v4802
    %v4833 = vpack.c.b16 %v4805, %v4804
    %v4834 = vpack.c.b16 %v4807, %v4806
    %v4835 = vpack.c.b16 %v4809, %v4808
    %v4836 = vpack.c.b16 %v4811, %v4810
    %v4837 = vpack.c.b16 %v4813, %v4812
    %v4838 = vpack.c.b16 %v4815, %v4814
    %v4839 = vpack.c.b16 %v4817, %v4816
    %v4840 = vpack.c.b16 %v4819, %v4818
    %v4841 = vpack.c.b16 %v4821, %v4820
    %v4842 = vpack.c.b16 %v4823, %v4822
    %v4843 = vpack.c.b16 %v4825, %v4824
    %v4844 = vpack.c.b16 %v4827, %v4826
    %v4845 = vpack.c.b16 %v4829, %v4828
    %4862 = vmatprep.subr.bf16.mxu0 0
    %4863 = vmatpush1.bf16.msra.mxu0 %v4837
    %4864 = vmatprep.subr.bf16.mxu0 0
    %4865 = vmatpush1.bf16.msra.mxu0 %v4836
    %4866 = vmatprep.subr.bf16.mxu0 0
    %4867 = vmatpush1.bf16.msra.mxu0 %v4835
    %4868 = vmatprep.subr.bf16.mxu0 0
    %4869 = vmatpush1.bf16.msra.mxu0 %v4834
    %4870 = vmatprep.subr.bf16.mxu0 0
    %4871 = vmatpush1.bf16.msra.mxu0 %v4833
    %4872 = vmatprep.subr.bf16.mxu0 0
    %4873 = vmatpush1.bf16.msra.mxu0 %v4832
    %4874 = vmatprep.subr.bf16.mxu0 0
    %4875 = vmatpush1.bf16.msra.mxu0 %v4831
    %4876 = vmatprep.subr.bf16.mxu0 0
    %4877 = vmatpush1.bf16.msra.mxu0 %v4830
    %4878 = vmatprep.subr.bf16.mxu0 0
    %4879 = vmatpush2.bf16.msra.mxu0 %v4845
    %4880 = vmatprep.subr.bf16.mxu0 0
    %4881 = vmatpush2.bf16.msra.mxu0 %v4844
    %4882 = vmatprep.subr.bf16.mxu0 0
    %4883 = vmatpush2.bf16.msra.mxu0 %v4843
    %4884 = vmatprep.subr.bf16.mxu0 0
    %4885 = vmatpush2.bf16.msra.mxu0 %v4842
    %4886 = vmatprep.subr.bf16.mxu0 0
    %4887 = vmatpush2.bf16.msra.mxu0 %v4841
    %4888 = vmatprep.subr.bf16.mxu0 0
    %4889 = vmatpush2.bf16.msra.mxu0 %v4840
    %4890 = vmatprep.subr.bf16.mxu0 0
    %4891 = vmatpush2.bf16.msra.mxu0 %v4839
    %4892 = vmatprep.subr.bf16.mxu0 0
    %4893 = vmatpush2.bf16.msra.mxu0 %v4838
    %4894 = vmatprep.mubr.bf16.mxu0 %v4759
    %4895 = vmatmul.mubr.bf16.gmra.mxu0 %v4758
    %v4896 = vpop.f32.mrf.mxu0
    %v4897 = vadd.f32 %v4765, %v4896
    %v4898 = vpop.f32.mrf.mxu0
    %v4899 = vpop.f32.mrf.mxu0
    %v4900 = vpop.f32.mrf.mxu0
    %4901 = vmatprep.mubr.bf16.mxu0 %v4761
    %4902 = vmatmul.mubr.bf16.gmra.mxu0 %v4760
    %v4903 = vpop.f32.mrf.mxu0
    %v4904 = vadd.f32 %v4765, %v4903
    %v4905 = vpop.f32.mrf.mxu0
    %v4906 = vpop.f32.mrf.mxu0
    %v4907 = vpop.f32.mrf.mxu0
    %4908 = vdwg.mxu0
    %v4909 = vadd.f32 %v4489, %v4897
    %v4910 = vadd.f32 %v4491, %v4904
    %4911 = vadd.xlane.f32.xlu0 %v4909
    %v4912 = vpop.xlane.xlu0 %4911
    %4913 = vadd.xlane.f32.xlu0 %v4910
    %v4914 = vpop.xlane.xlu0 %4913
    %v4915 = vmul.f32 %v4912, %v312
    %v4916 = vmul.f32 %v4914, %v312
    %v4917 = vsub.f32 %v4909, %v4915
    %v4918 = vsub.f32 %v4910, %v4916
    %v4919 = vmul.f32 %v4917, %v4917
    %v4920 = vmul.f32 %v4918, %v4918
    %4921 = vadd.xlane.f32.xlu0 %v4919
    %v4922 = vpop.xlane.xlu0 %4921
    %4923 = vadd.xlane.f32.xlu0 %v4920
    %v4924 = vpop.xlane.xlu0 %4923
    %v4925 = vmul.f32 %v4922, %v312
    %v4926 = vmul.f32 %v4924, %v312
    %v4927 = vadd.f32 %v4925, 1e-12
    %v4928 = vadd.f32 %v4926, 1e-12
    %v4929 = vrsqrt.pop %v4927
    %v4930 = vrsqrt.pop %v4928
    %v4931 = vmul.f32 %v4917, %v4929
    %v4932 = vmul.f32 %v4918, %v4930
    %v4933 = vlaneseq
    %v4934 = vshrl.u32 %v4933, 7
    %v4935 = vsub.s32 0, %v4934
    %v4936 = vrot.slane %v160, %v4935
    %v4937 = vmul.f32 %v4931, %v4936
    %v4938 = vmul.f32 %v4932, %v4936
    %v4939 = vlaneseq
    %v4940 = vshrl.u32 %v4939, 7
    %v4941 = vsub.s32 1, %v4940
    %v4942 = vrot.slane %v160, %v4941
    %v4943 = vadd.f32 %v4937, %v4942
    %v4944 = vadd.f32 %v4938, %v4942
    %v4947 = vrot.slane %v4944, 7
    %vm4948 = vcmask 1041409
    %v4949 = vsel %vm4948, %v4947, %v4943
    %vm4951 = vcmask 1041408
    %v4952 = vsel %vm4951, %v4949, 0.0
    %v4953 = vld [vmem:[#allocation12] sm:$0xf]
    %v4954 = vld [vmem:[#allocation12 + $0x4] sm:$0xf]
    %v4955 = vld [vmem:[#allocation12 + $0x8] sm:$0xf]
    %v4956 = vld [vmem:[#allocation12 + $0xc] sm:$0xf]
    %v4957 = vld [vmem:[#allocation12 + $0x10] sm:$0xf]
    %v4958 = vld [vmem:[#allocation12 + $0x14] sm:$0xf]
    %v4959 = vld [vmem:[#allocation12 + $0x18] sm:$0xf]
    %v4960 = vld [vmem:[#allocation12 + $0x1c] sm:$0xf]
    %v4961 = vld [vmem:[#allocation12 + $0x20] sm:$0xf]
    %v4962 = vld [vmem:[#allocation12 + $0x24] sm:$0xf]
    %v4963 = vld [vmem:[#allocation12 + $0x28] sm:$0xf]
    %v4964 = vld [vmem:[#allocation12 + $0x2c] sm:$0xf]
    %v4965 = vld [vmem:[#allocation12 + $0x30] sm:$0xf]
    %v4966 = vld [vmem:[#allocation12 + $0x34] sm:$0xf]
    %v4967 = vld [vmem:[#allocation12 + $0x38] sm:$0xf]
    %v4968 = vld [vmem:[#allocation12 + $0x3c] sm:$0xf]
    %v4969 = vpack.c.bf16 %v4952, %v4952
    %v4970 = vlaneseq
    %v4971 = vshrl.u32 %v4970, 7
    %v4972 = vsub.s32 2, %v4971
    %v4973 = vrot.slane %v160, %v4972
    %v4990 = vunpack.c.l.b16 %v4953
    %v4991 = vunpack.c.l.b16 %v4954
    %v4992 = vunpack.c.l.b16 %v4955
    %v4993 = vunpack.c.l.b16 %v4956
    %v4994 = vunpack.c.l.b16 %v4957
    %v4995 = vunpack.c.l.b16 %v4958
    %v4996 = vunpack.c.l.b16 %v4959
    %v4997 = vunpack.c.l.b16 %v4960
    %v4998 = vunpack.c.l.b16 %v4961
    %v4999 = vunpack.c.l.b16 %v4962
    %v5000 = vunpack.c.l.b16 %v4963
    %v5001 = vunpack.c.l.b16 %v4964
    %v5002 = vunpack.c.l.b16 %v4965
    %v5003 = vunpack.c.l.b16 %v4966
    %v5004 = vunpack.c.l.b16 %v4967
    %v5005 = vunpack.c.l.b16 %v4968
    %v5006 = vpack.c.b16 %v4991, %v4990
    %v5007 = vpack.c.b16 %v4993, %v4992
    %v5008 = vpack.c.b16 %v4995, %v4994
    %v5009 = vpack.c.b16 %v4997, %v4996
    %v5010 = vpack.c.b16 %v4999, %v4998
    %v5011 = vpack.c.b16 %v5001, %v5000
    %v5012 = vpack.c.b16 %v5003, %v5002
    %v5013 = vpack.c.b16 %v5005, %v5004
    %5022 = vmatprep.subr.bf16.mxu0 0
    %5023 = vmatpush1.bf16.msra.mxu0 %v5013
    %5024 = vmatprep.subr.bf16.mxu0 0
    %5025 = vmatpush1.bf16.msra.mxu0 %v5012
    %5026 = vmatprep.subr.bf16.mxu0 0
    %5027 = vmatpush1.bf16.msra.mxu0 %v5011
    %5028 = vmatprep.subr.bf16.mxu0 0
    %5029 = vmatpush1.bf16.msra.mxu0 %v5010
    %5030 = vmatprep.subr.bf16.mxu0 0
    %5031 = vmatpush1.bf16.msra.mxu0 %v5009
    %5032 = vmatprep.subr.bf16.mxu0 0
    %5033 = vmatpush1.bf16.msra.mxu0 %v5008
    %5034 = vmatprep.subr.bf16.mxu0 0
    %5035 = vmatpush1.bf16.msra.mxu0 %v5007
    %5036 = vmatprep.subr.bf16.mxu0 0
    %5037 = vmatpush1.bf16.msra.mxu0 %v5006
    %5038 = vmatprep.subr.bf16.mxu0 0
    %5039 = vmatpush2.bf16.msra.mxu0 0
    %5040 = vmatprep.subr.bf16.mxu0 0
    %5041 = vmatpush2.bf16.msra.mxu0 0
    %5042 = vmatprep.subr.bf16.mxu0 0
    %5043 = vmatpush2.bf16.msra.mxu0 0
    %5044 = vmatprep.subr.bf16.mxu0 0
    %5045 = vmatpush2.bf16.msra.mxu0 0
    %5046 = vmatprep.subr.bf16.mxu0 0
    %5047 = vmatpush2.bf16.msra.mxu0 0
    %5048 = vmatprep.subr.bf16.mxu0 0
    %5049 = vmatpush2.bf16.msra.mxu0 0
    %5050 = vmatprep.subr.bf16.mxu0 0
    %5051 = vmatpush2.bf16.msra.mxu0 0
    %5052 = vmatprep.subr.bf16.mxu0 0
    %5053 = vmatpush2.bf16.msra.mxu0 0
    %5054 = vmatprep.mubr.bf16.mxu0 0
    %5055 = vmatmul.mubr.bf16.gmra.mxu0 %v4969
    %v5056 = vpop.f32.mrf.mxu0
    %v5057 = vadd.f32 %v4973, %v5056
    %v5058 = vpop.f32.mrf.mxu0
    %v5059 = vpop.f32.mrf.mxu0
    %v5060 = vpop.f32.mrf.mxu0
    %5061 = vdwg.mxu0
    %v5062 = vtanh.pop %v5057
    %v5063 = vld [vmem:[#allocation13] sm:$0xf]
    %v5064 = vld [vmem:[#allocation13 + $0x4] sm:$0xf]
    %v5065 = vld [vmem:[#allocation13 + $0x8] sm:$0xf]
    %v5066 = vld [vmem:[#allocation13 + $0xc] sm:$0xf]
    %v5067 = vld [vmem:[#allocation13 + $0x10] sm:$0xf]
    %v5068 = vld [vmem:[#allocation13 + $0x14] sm:$0xf]
    %v5069 = vld [vmem:[#allocation13 + $0x18] sm:$0xf]
    %v5070 = vld [vmem:[#allocation13 + $0x1c] sm:$0xf]
    %v5071 = vld [vmem:[#allocation13 + $0x20] sm:$0xf]
    %v5072 = vld [vmem:[#allocation13 + $0x24] sm:$0xf]
    %v5073 = vld [vmem:[#allocation13 + $0x28] sm:$0xf]
    %v5074 = vld [vmem:[#allocation13 + $0x2c] sm:$0xf]
    %v5075 = vld [vmem:[#allocation13 + $0x30] sm:$0xf]
    %v5076 = vld [vmem:[#allocation13 + $0x34] sm:$0xf]
    %v5077 = vld [vmem:[#allocation13 + $0x38] sm:$0xf]
    %v5078 = vld [vmem:[#allocation13 + $0x3c] sm:$0xf]
    %v5079 = vpack.c.bf16 %v5062, %v5062
    %v5080 = vlaneseq
    %v5081 = vshrl.u32 %v5080, 7
    %v5082 = vsub.s32 3, %v5081
    %v5083 = vrot.slane %v160, %v5082
    %v5100 = vunpack.c.l.b16 %v5063
    %v5101 = vunpack.c.l.b16 %v5064
    %v5102 = vunpack.c.l.b16 %v5065
    %v5103 = vunpack.c.l.b16 %v5066
    %v5104 = vunpack.c.l.b16 %v5067
    %v5105 = vunpack.c.l.b16 %v5068
    %v5106 = vunpack.c.l.b16 %v5069
    %v5107 = vunpack.c.l.b16 %v5070
    %v5108 = vunpack.c.l.b16 %v5071
    %v5109 = vunpack.c.l.b16 %v5072
    %v5110 = vunpack.c.l.b16 %v5073
    %v5111 = vunpack.c.l.b16 %v5074
    %v5112 = vunpack.c.l.b16 %v5075
    %v5113 = vunpack.c.l.b16 %v5076
    %v5114 = vunpack.c.l.b16 %v5077
    %v5115 = vunpack.c.l.b16 %v5078
    %v5116 = vpack.c.b16 %v5101, %v5100
    %v5117 = vpack.c.b16 %v5103, %v5102
    %v5118 = vpack.c.b16 %v5105, %v5104
    %v5119 = vpack.c.b16 %v5107, %v5106
    %v5120 = vpack.c.b16 %v5109, %v5108
    %v5121 = vpack.c.b16 %v5111, %v5110
    %v5122 = vpack.c.b16 %v5113, %v5112
    %v5123 = vpack.c.b16 %v5115, %v5114
    %5132 = vmatprep.subr.bf16.mxu0 0
    %5133 = vmatpush1.bf16.msra.mxu0 %v5123
    %5134 = vmatprep.subr.bf16.mxu0 0
    %5135 = vmatpush1.bf16.msra.mxu0 %v5122
    %5136 = vmatprep.subr.bf16.mxu0 0
    %5137 = vmatpush1.bf16.msra.mxu0 %v5121
    %5138 = vmatprep.subr.bf16.mxu0 0
    %5139 = vmatpush1.bf16.msra.mxu0 %v5120
    %5140 = vmatprep.subr.bf16.mxu0 0
    %5141 = vmatpush1.bf16.msra.mxu0 %v5119
    %5142 = vmatprep.subr.bf16.mxu0 0
    %5143 = vmatpush1.bf16.msra.mxu0 %v5118
    %5144 = vmatprep.subr.bf16.mxu0 0
    %5145 = vmatpush1.bf16.msra.mxu0 %v5117
    %5146 = vmatprep.subr.bf16.mxu0 0
    %5147 = vmatpush1.bf16.msra.mxu0 %v5116
    %5148 = vmatprep.subr.bf16.mxu0 0
    %5149 = vmatpush2.bf16.msra.mxu0 0
    %5150 = vmatprep.subr.bf16.mxu0 0
    %5151 = vmatpush2.bf16.msra.mxu0 0
    %5152 = vmatprep.subr.bf16.mxu0 0
    %5153 = vmatpush2.bf16.msra.mxu0 0
    %5154 = vmatprep.subr.bf16.mxu0 0
    %5155 = vmatpush2.bf16.msra.mxu0 0
    %5156 = vmatprep.subr.bf16.mxu0 0
    %5157 = vmatpush2.bf16.msra.mxu0 0
    %5158 = vmatprep.subr.bf16.mxu0 0
    %5159 = vmatpush2.bf16.msra.mxu0 0
    %5160 = vmatprep.subr.bf16.mxu0 0
    %5161 = vmatpush2.bf16.msra.mxu0 0
    %5162 = vmatprep.subr.bf16.mxu0 0
    %5163 = vmatpush2.bf16.msra.mxu0 0
    %5164 = vmatprep.mubr.bf16.mxu0 0
    %5165 = vmatmul.mubr.bf16.gmra.mxu0 %v5079
    %v5166 = vpop.f32.mrf.mxu0
    %v5167 = vadd.f32 %v5083, %v5166
    %v5168 = vpop.f32.mrf.mxu0
    %v5169 = vpop.f32.mrf.mxu0
    %v5170 = vpop.f32.mrf.mxu0
    %5171 = vdwg.mxu0
    %v5172 = vmax.f32 %v5167, 0.0
    %5173 = vst [vmem:[%s13] sm:$0xff] %v5172
    // Predicated region
    $region86: #{bert_classifier_forward.1} parent=1 // pred_check
      _
    $region87: #{bert_classifier_forward.1} parent=1 // pred_check_branch
      %5175 = sbr.rel (0) target = $region89
    $region88: #{bert_classifier_forward.1} parent=1 // pred_region
      _
    $region89: #{bert_classifier_forward.1} parent=1 // pred_fallthru
      _
    // Predicated region
    $region90: #{bert_classifier_forward.1} parent=1 // pred_check
      _
    $region91: #{bert_classifier_forward.1} parent=1 // pred_check_branch
      %5177 = sbr.rel (0) target = $region93
    $region92: #{bert_classifier_forward.1} parent=1 // pred_region
      _
    $region93: #{bert_classifier_forward.1} parent=1 // pred_fallthru
      _
    %5178 = vsyncpa [#allocation3], 1
    %5179 = vsyncpa [#allocation5], 1
    %5180 = vsyncpa [#allocation8], 1
    %5181 = vsyncpa [#allocation11], 1
    %5182 = vsyncpa [#allocation14], 1

</llo_original>
